<compile_context>
chip_gen: v7x
topology: tpu7x:2x2x1
jax: 0.10.0
libtpu: 0.0.40
codegen_flags: <defaults>
</compile_context>

<pallas_src>
import functools

import jax
import jax.numpy as jnp
from jax.experimental import pallas as pl
from jax.experimental.pallas import tpu as pltpu


# Pixel-tile width of the matmul.  Worst-case per-step working set:
#   2 x (K<=873 x TM) bf16 patches + 2 x (Cout<=64 x TM) out + (Cout x K) bf16
#   weights  ~= 8 MiB at TM=2048,
# which fits the scoped-VMEM budget of v5e (16/128 MiB), v6e (32/128 MiB) and
# v7x (32/64 MiB).  Sweep per generation if needed.
_TM_MAX = 2048
_VMEM_LIMIT_BYTES = 32 * 1024 * 1024


# ---------------------------------------------------------------------------
# Pallas kernel: fused (W @ patches + b) -> activation
# ---------------------------------------------------------------------------
def _matmul_act_kernel(w_ref, b_ref, p_ref, o_ref, *, act):
    # (Cout, K) bf16 @ (K, TM) bf16 -> f32 accumulate on the MXU.
    acc = jnp.dot(w_ref[...], p_ref[...], preferred_element_type=jnp.float32)
    acc = acc + b_ref[...]  # (Cout, 1) broadcast over lanes
    if act == "elu":
        # Clamp so the discarded branch never evaluates exp(large) -> inf.
        neg = jnp.exp(jnp.minimum(acc, 0.0)) - 1.0   # exp runs on the EUP
        acc = jnp.where(acc > 0, acc, neg)
    elif act == "sigmoid255":
        acc = 255.0 * pl.reciprocal(1.0 + jnp.exp(-acc), approx=True)
    o_ref[...] = acc.astype(o_ref.dtype)


def matmul_bias_act(w2t, b, patches_t, act, out_dtype):
    """out (Cout, M) = act(w2t (Cout, K) @ patches_t (K, M) + b (Cout, 1))."""
    cout, K = w2t.shape
    M = patches_t.shape[1]
    tm = min(_TM_MAX, M)
    kernel = functools.partial(_matmul_act_kernel, act=act)
    return pl.pallas_call(
        kernel,
        out_shape=jax.ShapeDtypeStruct((cout, M), out_dtype),
        grid=(pl.cdiv(M, tm),),
        in_specs=[
            pl.BlockSpec((cout, K), lambda i: (0, 0)),   # weights: resident
            pl.BlockSpec((cout, 1), lambda i: (0, 0)),   # bias:    resident
            pl.BlockSpec((K, tm), lambda i: (0, i)),     # patches: streamed
        ],
        out_specs=pl.BlockSpec((cout, tm), lambda i: (0, i)),
        compiler_params=pltpu.CompilerParams(
            dimension_semantics=("parallel",),           # megacore on v7x
            vmem_limit_bytes=_VMEM_LIMIT_BYTES,
        ),
    )(w2t, b, patches_t)


# ---------------------------------------------------------------------------
# im2col (channels-first, fused channel concat) + conv layer wrapper
# ---------------------------------------------------------------------------
def im2col_t(xs, k):
    """xs: list of (C_i, B, H, W) channels-first sources (implicit channel
    concat in list order).  Returns bf16 patches of shape
    (k*k*sum(C_i), B*H*W), row order = (ky, kx, concatenated-channel)."""
    pad = (k - 1) // 2
    B, H, W = xs[0].shape[1:]
    xps = [jnp.pad(x.astype(jnp.bfloat16),
                   ((0, 0), (0, 0), (pad, pad), (pad, pad))) for x in xs]
    rows = []
    for ky in range(k):
        for kx in range(k):
            for xp in xps:
                rows.append(
                    xp[:, :, ky:ky + H, kx:kx + W].reshape(xp.shape[0], B * H * W))
    return jnp.concatenate(rows, axis=0)


def conv_layer(xs, w2t, b, k, act, out_dtype=jnp.bfloat16):
    """Stride-1 'same' conv over the implicit concat of `xs` (channels-first)."""
    B, H, W = xs[0].shape[1:]
    p = im2col_t(xs, k)
    o = matmul_bias_act(w2t, b, p, act, out_dtype)
    return o.reshape(o.shape[0], B, H, W)


# ---------------------------------------------------------------------------
# MaxPool2d(2, return_indices=True) / MaxUnpool2d(2) emulation (JAX glue)
# ---------------------------------------------------------------------------
def maxpool2x2_with_idx(x):
    # x: (C, B, H, W) -> pooled (C, B, H/2, W/2), idx int8 in {0..3}
    C, B, H, W = x.shape
    h, w = H // 2, W // 2
    win = (x.reshape(C, B, h, 2, w, 2)
           .transpose(0, 1, 2, 4, 3, 5)
           .reshape(C, B, h, w, 4))
    pooled = win.max(axis=-1)
    idx = jnp.argmax(win, axis=-1).astype(jnp.int8)
    return pooled, idx


def unpool2x2(pooled, idx):
    C, B, h, w = pooled.shape
    sel = (idx[..., None] == jnp.arange(4, dtype=jnp.int8)).astype(pooled.dtype)
    win = pooled[..., None] * sel                              # (C,B,h,w,4)
    up = (win.reshape(C, B, h, w, 2, 2)
          .transpose(0, 1, 2, 4, 3, 5)
          .reshape(C, B, 2 * h, 2 * w))
    return up


# ---------------------------------------------------------------------------
# Parameter initialization (deterministic, xavier-uniform style) + packing
# ---------------------------------------------------------------------------
def _xavier_uniform(key, shape, fan_in, fan_out):
    bound = (6.0 / (fan_in + fan_out)) ** 0.5
    return jax.random.uniform(key, shape, jnp.float32, -bound, bound)


def init_params(key):
    ks = jax.random.split(key, 12)

    def conv_w(k, cout, cin, kk):
        return _xavier_uniform(k, (cout, cin, kk, kk), cin * kk * kk, cout * kk * kk)

    def deconv_w(k, cin, cout, kk):
        return _xavier_uniform(k, (cin, cout, kk, kk), cin * kk * kk, cout * kk * kk)

    def bias(k, n, fan_in):
        bnd = 1.0 / (fan_in ** 0.5)
        return jax.random.uniform(k, (n,), jnp.float32, -bnd, bnd)

    return {
        "conv1_w": conv_w(ks[0], 16, 3, 5),      "conv1_b": bias(ks[1], 16, 3 * 25),
        "conv2_w": conv_w(ks[2], 32, 16, 3),     "conv2_b": bias(ks[3], 32, 16 * 9),
        "conv3_w": conv_w(ks[4], 64, 32, 3),     "conv3_b": bias(ks[5], 64, 32 * 9),
        "deconv1_w": deconv_w(ks[6], 97, 32, 3), "deconv1_b": bias(ks[7], 32, 97 * 9),
        "deconv2_w": deconv_w(ks[8], 49, 16, 3), "deconv2_b": bias(ks[9], 16, 49 * 9),
        "deconv3_w": deconv_w(ks[10], 19, 1, 5), "deconv3_b": bias(ks[11], 1, 19 * 25),
    }


def pack_params(params):
    """Pack PyTorch-layout weights into (Cout, kh*kw*Cin) bf16 matmul operands.
    Done once, outside the forward pass."""
    def conv_pack(w):                       # Conv2d: (Cout, Cin, kh, kw)
        cout, cin, kh, kw = w.shape
        return (jnp.transpose(w, (0, 2, 3, 1))
                .reshape(cout, kh * kw * cin).astype(jnp.bfloat16))

    def deconv_pack(w):                     # ConvTranspose2d: (Cin, Cout, kh, kw)
        cin, cout, kh, kw = w.shape
        wf = w[:, :, ::-1, ::-1]            # spatial flip, channel swap
        return (jnp.transpose(wf, (1, 2, 3, 0))
                .reshape(cout, kh * kw * cin).astype(jnp.bfloat16))

    def bias_pack(b):
        return b.reshape(-1, 1).astype(jnp.float32)

    return {
        "conv1_w": conv_pack(params["conv1_w"]),     "conv1_b": bias_pack(params["conv1_b"]),
        "conv2_w": conv_pack(params["conv2_w"]),     "conv2_b": bias_pack(params["conv2_b"]),
        "conv3_w": conv_pack(params["conv3_w"]),     "conv3_b": bias_pack(params["conv3_b"]),
        "deconv1_w": deconv_pack(params["deconv1_w"]), "deconv1_b": bias_pack(params["deconv1_b"]),
        "deconv2_w": deconv_pack(params["deconv2_w"]), "deconv2_b": bias_pack(params["deconv2_b"]),
        "deconv3_w": deconv_pack(params["deconv3_w"]), "deconv3_b": bias_pack(params["deconv3_b"]),
    }


# ---------------------------------------------------------------------------
# network3 forward pass
# ---------------------------------------------------------------------------
def network3_forward(packed, x_nchw, net1_nchw, net2_nchw):
    # NCHW -> channels-first-of-batch (C, B, H, W)
    x = jnp.transpose(x_nchw, (1, 0, 2, 3))
    n1 = jnp.transpose(net1_nchw, (1, 0, 2, 3)).astype(jnp.bfloat16)  # (1,B,H/4,W/4)
    n2 = jnp.transpose(net2_nchw, (1, 0, 2, 3)).astype(jnp.bfloat16)  # (1,B,H/2,W/2)

    out_3_1 = x.astype(jnp.bfloat16)                                           # (3,B,H,W)
    out = conv_layer([out_3_1], packed["conv1_w"], packed["conv1_b"], 5, "elu")  # (16,B,H,W)
    out, idx1 = maxpool2x2_with_idx(out)                                       # (16,B,H/2,W/2)
    out_3_2 = out
    out = conv_layer([out], packed["conv2_w"], packed["conv2_b"], 3, "elu")    # (32,B,H/2,W/2)
    out, idx2 = maxpool2x2_with_idx(out)                                       # (32,B,H/4,W/4)
    out_3_3 = out
    out = conv_layer([out], packed["conv3_w"], packed["conv3_b"], 3, "elu")    # (64,B,H/4,W/4)
    # concat (out, out_3_3, net1) = 97 channels, fused into deconv1 patches
    out = conv_layer([out, out_3_3, n1],
                     packed["deconv1_w"], packed["deconv1_b"], 3, "elu")       # (32,B,H/4,W/4)
    out = unpool2x2(out, idx2)                                                 # (32,B,H/2,W/2)
    # concat (out, net2, out_3_2) = 49 channels, fused into deconv2 patches
    out = conv_layer([out, n2, out_3_2],
                     packed["deconv2_w"], packed["deconv2_b"], 3, "elu")       # (16,B,H/2,W/2)
    out = unpool2x2(out, idx1)                                                 # (16,B,H,W)
    # concat (out, out_3_1) = 19 channels, fused into deconv3 patches
    out = conv_layer([out, out_3_1],
                     packed["deconv3_w"], packed["deconv3_b"], 5, "sigmoid255",
                     out_dtype=jnp.float32)                                    # (1,B,H,W)
    return jnp.transpose(out, (1, 0, 2, 3))                                    # (B,1,H,W)


if __name__ == "__main__":
    key = jax.random.PRNGKey(0)
    pk, xk, n1k, n2k = jax.random.split(key, 4)
    params = init_params(pk)
    packed = pack_params(params)   # packed once, outside the forward pass

    B, H, W = 2, 16, 16
    x = jax.random.normal(xk, (B, 3, H, W), jnp.float32)
    net1_out = jax.random.normal(n1k, (B, 1, H // 4, W // 4), jnp.float32)
    net2_out = jax.random.normal(n2k, (B, 1, H // 2, W // 2), jnp.float32)

    fwd = jax.jit(network3_forward)
    out = fwd(packed, x, net1_out, net2_out)
    jax.block_until_ready(out)
    assert out.shape == (B, 1, H, W), out.shape
    assert bool(jnp.all(jnp.isfinite(out)))
    assert bool(jnp.all(out >= 0.0)) and bool(jnp.all(out <= 255.0))
    print("KERNEL_OK")
</pallas_src>

<mosaic_0001>
module attributes {stable_mosaic.version = 11 : i64} {
  func.func @_matmul_act_kernel(%arg0: i32, %arg1: memref<16x75xbf16, #tpu.memory_space<vmem>>, %arg2: memref<16x1xf32, #tpu.memory_space<vmem>>, %arg3: memref<75x512xbf16, #tpu.memory_space<vmem>>, %arg4: memref<16x512xbf16, #tpu.memory_space<vmem>>) attributes {dimension_semantics = [#tpu.dimension_semantics<parallel>], iteration_bounds = array<i64: 1>, scalar_prefetch = 0 : i64, scratch_operands = 0 : i64, tpu.core_type = #tpu.core_type<tc>, window_params = [{pipeline_mode = #tpu.pipeline_mode<synchronous>, transform_indices = @transform_0, window_bounds = array<i64: 16, 75>}, {pipeline_mode = #tpu.pipeline_mode<synchronous>, transform_indices = @transform_1, window_bounds = array<i64: 16, 1>}, {transform_indices = @transform_2, window_bounds = array<i64: 75, 512>}, {transform_indices = @transform_3, window_bounds = array<i64: 16, 512>}]} {
    %c0 = arith.constant 0 : index
    %c0_0 = arith.constant 0 : index
    %0 = vector.load %arg1[%c0, %c0_0] : memref<16x75xbf16, #tpu.memory_space<vmem>>, vector<16x75xbf16>
    %c0_1 = arith.constant 0 : index
    %c0_2 = arith.constant 0 : index
    %1 = vector.load %arg3[%c0_1, %c0_2] : memref<75x512xbf16, #tpu.memory_space<vmem>>, vector<75x512xbf16>
    %cst = arith.constant dense<0.000000e+00> : vector<16x512xf32>
    %2 = tpu.matmul %0, %1, %cst {dimension_numbers = #tpu.dot_dimension_numbers<[1], [0], [0], [1], [0, 0, 1, 1], [], []>} : vector<16x75xbf16>, vector<75x512xbf16>, vector<16x512xf32> -> vector<16x512xf32>
    %c0_3 = arith.constant 0 : index
    %c0_4 = arith.constant 0 : index
    %3 = vector.load %arg2[%c0_3, %c0_4] : memref<16x1xf32, #tpu.memory_space<vmem>>, vector<16x1xf32>
    %4 = vector.broadcast %3 : vector<16x1xf32> to vector<16x512xf32>
    %5 = arith.addf %2, %4 : vector<16x512xf32>
    %cst_5 = arith.constant 0.000000e+00 : f32
    %6 = vector.broadcast %cst_5 : f32 to vector<16x512xf32>
    %7 = arith.minimumf %5, %6 : vector<16x512xf32>
    %8 = math.exp %7 : vector<16x512xf32>
    %cst_6 = arith.constant 1.000000e+00 : f32
    %9 = vector.broadcast %cst_6 : f32 to vector<16x512xf32>
    %10 = arith.subf %8, %9 : vector<16x512xf32>
    %cst_7 = arith.constant 0.000000e+00 : f32
    %11 = vector.broadcast %cst_7 : f32 to vector<16x512xf32>
    %12 = arith.cmpf ogt, %5, %11 : vector<16x512xf32>
    %13 = arith.select %12, %5, %10 : vector<16x512xi1>, vector<16x512xf32>
    %14 = arith.truncf %13 : vector<16x512xf32> to vector<16x512xbf16>
    %c0_8 = arith.constant 0 : index
    %c0_9 = arith.constant 0 : index
    %15 = vector.load %arg4[%c0_8, %c0_9] : memref<16x512xbf16, #tpu.memory_space<vmem>>, vector<16x512xbf16>
    tpu.vector_store %arg4[%c0_8, %c0_9], %14 {strides = array<i32>} : memref<16x512xbf16, #tpu.memory_space<vmem>>, vector<16x512xbf16>,
    return
  }
  func.func @transform_0(%arg0: i32) -> (i32, i32) {
    %c0_i32 = arith.constant 0 : i32
    %c0_i32_0 = arith.constant 0 : i32
    %c0_i32_1 = arith.constant 0 : i32
    return %c0_i32, %c0_i32_0 : i32, i32
  }
  func.func @transform_1(%arg0: i32) -> (i32, i32) {
    %c0_i32 = arith.constant 0 : i32
    %c0_i32_0 = arith.constant 0 : i32
    %c0_i32_1 = arith.constant 0 : i32
    return %c0_i32, %c0_i32_0 : i32, i32
  }
  func.func @transform_2(%arg0: i32) -> (i32, i32) {
    %c0_i32 = arith.constant 0 : i32
    %c0_i32_0 = arith.constant 0 : i32
    return %c0_i32, %arg0 : i32, i32
  }
  func.func @transform_3(%arg0: i32) -> (i32, i32) {
    %c0_i32 = arith.constant 0 : i32
    %c0_i32_0 = arith.constant 0 : i32
    return %c0_i32, %arg0 : i32, i32
  }
}

module attributes {stable_mosaic.version = 11 : i64} {
  func.func @_matmul_act_kernel(%arg0: i32, %arg1: memref<32x144xbf16, #tpu.memory_space<vmem>>, %arg2: memref<32x1xf32, #tpu.memory_space<vmem>>, %arg3: memref<144x128xbf16, #tpu.memory_space<vmem>>, %arg4: memref<32x128xbf16, #tpu.memory_space<vmem>>) attributes {dimension_semantics = [#tpu.dimension_semantics<parallel>], iteration_bounds = array<i64: 1>, scalar_prefetch = 0 : i64, scratch_operands = 0 : i64, tpu.core_type = #tpu.core_type<tc>, window_params = [{pipeline_mode = #tpu.pipeline_mode<synchronous>, transform_indices = @transform_0, window_bounds = array<i64: 32, 144>}, {pipeline_mode = #tpu.pipeline_mode<synchronous>, transform_indices = @transform_1, window_bounds = array<i64: 32, 1>}, {transform_indices = @transform_2, window_bounds = array<i64: 144, 128>}, {transform_indices = @transform_3, window_bounds = array<i64: 32, 128>}]} {
    %c0 = arith.constant 0 : index
    %c0_0 = arith.constant 0 : index
    %0 = vector.load %arg1[%c0, %c0_0] : memref<32x144xbf16, #tpu.memory_space<vmem>>, vector<32x144xbf16>
    %c0_1 = arith.constant 0 : index
    %c0_2 = arith.constant 0 : index
    %1 = vector.load %arg3[%c0_1, %c0_2] : memref<144x128xbf16, #tpu.memory_space<vmem>>, vector<144x128xbf16>
    %cst = arith.constant dense<0.000000e+00> : vector<32x128xf32>
    %2 = tpu.matmul %0, %1, %cst {dimension_numbers = #tpu.dot_dimension_numbers<[1], [0], [0], [1], [0, 0, 1, 1], [], []>} : vector<32x144xbf16>, vector<144x128xbf16>, vector<32x128xf32> -> vector<32x128xf32>
    %c0_3 = arith.constant 0 : index
    %c0_4 = arith.constant 0 : index
    %3 = vector.load %arg2[%c0_3, %c0_4] : memref<32x1xf32, #tpu.memory_space<vmem>>, vector<32x1xf32>
    %4 = vector.broadcast %3 : vector<32x1xf32> to vector<32x128xf32>
    %5 = arith.addf %2, %4 : vector<32x128xf32>
    %cst_5 = arith.constant 0.000000e+00 : f32
    %6 = vector.broadcast %cst_5 : f32 to vector<32x128xf32>
    %7 = arith.minimumf %5, %6 : vector<32x128xf32>
    %8 = math.exp %7 : vector<32x128xf32>
    %cst_6 = arith.constant 1.000000e+00 : f32
    %9 = vector.broadcast %cst_6 : f32 to vector<32x128xf32>
    %10 = arith.subf %8, %9 : vector<32x128xf32>
    %cst_7 = arith.constant 0.000000e+00 : f32
    %11 = vector.broadcast %cst_7 : f32 to vector<32x128xf32>
    %12 = arith.cmpf ogt, %5, %11 : vector<32x128xf32>
    %13 = arith.select %12, %5, %10 : vector<32x128xi1>, vector<32x128xf32>
    %14 = arith.truncf %13 : vector<32x128xf32> to vector<32x128xbf16>
    %c0_8 = arith.constant 0 : index
    %c0_9 = arith.constant 0 : index
    %15 = vector.load %arg4[%c0_8, %c0_9] : memref<32x128xbf16, #tpu.memory_space<vmem>>, vector<32x128xbf16>
    tpu.vector_store %arg4[%c0_8, %c0_9], %14 {strides = array<i32>} : memref<32x128xbf16, #tpu.memory_space<vmem>>, vector<32x128xbf16>,
    return
  }
  func.func @transform_0(%arg0: i32) -> (i32, i32) {
    %c0_i32 = arith.constant 0 : i32
    %c0_i32_0 = arith.constant 0 : i32
    %c0_i32_1 = arith.constant 0 : i32
    return %c0_i32, %c0_i32_0 : i32, i32
  }
  func.func @transform_1(%arg0: i32) -> (i32, i32) {
    %c0_i32 = arith.constant 0 : i32
    %c0_i32_0 = arith.constant 0 : i32
    %c0_i32_1 = arith.constant 0 : i32
    return %c0_i32, %c0_i32_0 : i32, i32
  }
  func.func @transform_2(%arg0: i32) -> (i32, i32) {
    %c0_i32 = arith.constant 0 : i32
    %c0_i32_0 = arith.constant 0 : i32
    return %c0_i32, %arg0 : i32, i32
  }
  func.func @transform_3(%arg0: i32) -> (i32, i32) {
    %c0_i32 = arith.constant 0 : i32
    %c0_i32_0 = arith.constant 0 : i32
    return %c0_i32, %arg0 : i32, i32
  }
}

module attributes {stable_mosaic.version = 11 : i64} {
  func.func @_matmul_act_kernel(%arg0: i32, %arg1: memref<64x288xbf16, #tpu.memory_space<vmem>>, %arg2: memref<64x1xf32, #tpu.memory_space<vmem>>, %arg3: memref<288x32xbf16, #tpu.memory_space<vmem>>, %arg4: memref<64x32xbf16, #tpu.memory_space<vmem>>) attributes {dimension_semantics = [#tpu.dimension_semantics<parallel>], iteration_bounds = array<i64: 1>, scalar_prefetch = 0 : i64, scratch_operands = 0 : i64, tpu.core_type = #tpu.core_type<tc>, window_params = [{pipeline_mode = #tpu.pipeline_mode<synchronous>, transform_indices = @transform_0, window_bounds = array<i64: 64, 288>}, {pipeline_mode = #tpu.pipeline_mode<synchronous>, transform_indices = @transform_1, window_bounds = array<i64: 64, 1>}, {transform_indices = @transform_2, window_bounds = array<i64: 288, 32>}, {transform_indices = @transform_3, window_bounds = array<i64: 64, 32>}]} {
    %c0 = arith.constant 0 : index
    %c0_0 = arith.constant 0 : index
    %0 = vector.load %arg1[%c0, %c0_0] : memref<64x288xbf16, #tpu.memory_space<vmem>>, vector<64x288xbf16>
    %c0_1 = arith.constant 0 : index
    %c0_2 = arith.constant 0 : index
    %1 = vector.load %arg3[%c0_1, %c0_2] : memref<288x32xbf16, #tpu.memory_space<vmem>>, vector<288x32xbf16>
    %cst = arith.constant dense<0.000000e+00> : vector<64x32xf32>
    %2 = tpu.matmul %0, %1, %cst {dimension_numbers = #tpu.dot_dimension_numbers<[1], [0], [0], [1], [0, 0, 1, 1], [], []>} : vector<64x288xbf16>, vector<288x32xbf16>, vector<64x32xf32> -> vector<64x32xf32>
    %c0_3 = arith.constant 0 : index
    %c0_4 = arith.constant 0 : index
    %3 = vector.load %arg2[%c0_3, %c0_4] : memref<64x1xf32, #tpu.memory_space<vmem>>, vector<64x1xf32>
    %4 = vector.broadcast %3 : vector<64x1xf32> to vector<64x32xf32>
    %5 = arith.addf %2, %4 : vector<64x32xf32>
    %cst_5 = arith.constant 0.000000e+00 : f32
    %6 = vector.broadcast %cst_5 : f32 to vector<64x32xf32>
    %7 = arith.minimumf %5, %6 : vector<64x32xf32>
    %8 = math.exp %7 : vector<64x32xf32>
    %cst_6 = arith.constant 1.000000e+00 : f32
    %9 = vector.broadcast %cst_6 : f32 to vector<64x32xf32>
    %10 = arith.subf %8, %9 : vector<64x32xf32>
    %cst_7 = arith.constant 0.000000e+00 : f32
    %11 = vector.broadcast %cst_7 : f32 to vector<64x32xf32>
    %12 = arith.cmpf ogt, %5, %11 : vector<64x32xf32>
    %13 = arith.select %12, %5, %10 : vector<64x32xi1>, vector<64x32xf32>
    %14 = arith.truncf %13 : vector<64x32xf32> to vector<64x32xbf16>
    %c0_8 = arith.constant 0 : index
    %c0_9 = arith.constant 0 : index
    %15 = vector.load %arg4[%c0_8, %c0_9] : memref<64x32xbf16, #tpu.memory_space<vmem>>, vector<64x32xbf16>
    tpu.vector_store %arg4[%c0_8, %c0_9], %14 {strides = array<i32>} : memref<64x32xbf16, #tpu.memory_space<vmem>>, vector<64x32xbf16>,
    return
  }
  func.func @transform_0(%arg0: i32) -> (i32, i32) {
    %c0_i32 = arith.constant 0 : i32
    %c0_i32_0 = arith.constant 0 : i32
    %c0_i32_1 = arith.constant 0 : i32
    return %c0_i32, %c0_i32_0 : i32, i32
  }
  func.func @transform_1(%arg0: i32) -> (i32, i32) {
    %c0_i32 = arith.constant 0 : i32
    %c0_i32_0 = arith.constant 0 : i32
    %c0_i32_1 = arith.constant 0 : i32
    return %c0_i32, %c0_i32_0 : i32, i32
  }
  func.func @transform_2(%arg0: i32) -> (i32, i32) {
    %c0_i32 = arith.constant 0 : i32
    %c0_i32_0 = arith.constant 0 : i32
    return %c0_i32, %arg0 : i32, i32
  }
  func.func @transform_3(%arg0: i32) -> (i32, i32) {
    %c0_i32 = arith.constant 0 : i32
    %c0_i32_0 = arith.constant 0 : i32
    return %c0_i32, %arg0 : i32, i32
  }
}

module attributes {stable_mosaic.version = 11 : i64} {
  func.func @_matmul_act_kernel(%arg0: i32, %arg1: memref<32x873xbf16, #tpu.memory_space<vmem>>, %arg2: memref<32x1xf32, #tpu.memory_space<vmem>>, %arg3: memref<873x32xbf16, #tpu.memory_space<vmem>>, %arg4: memref<32x32xbf16, #tpu.memory_space<vmem>>) attributes {dimension_semantics = [#tpu.dimension_semantics<parallel>], iteration_bounds = array<i64: 1>, scalar_prefetch = 0 : i64, scratch_operands = 0 : i64, tpu.core_type = #tpu.core_type<tc>, window_params = [{pipeline_mode = #tpu.pipeline_mode<synchronous>, transform_indices = @transform_0, window_bounds = array<i64: 32, 873>}, {pipeline_mode = #tpu.pipeline_mode<synchronous>, transform_indices = @transform_1, window_bounds = array<i64: 32, 1>}, {transform_indices = @transform_2, window_bounds = array<i64: 873, 32>}, {transform_indices = @transform_3, window_bounds = array<i64: 32, 32>}]} {
    %c0 = arith.constant 0 : index
    %c0_0 = arith.constant 0 : index
    %0 = vector.load %arg1[%c0, %c0_0] : memref<32x873xbf16, #tpu.memory_space<vmem>>, vector<32x873xbf16>
    %c0_1 = arith.constant 0 : index
    %c0_2 = arith.constant 0 : index
    %1 = vector.load %arg3[%c0_1, %c0_2] : memref<873x32xbf16, #tpu.memory_space<vmem>>, vector<873x32xbf16>
    %cst = arith.constant dense<0.000000e+00> : vector<32x32xf32>
    %2 = tpu.matmul %0, %1, %cst {dimension_numbers = #tpu.dot_dimension_numbers<[1], [0], [0], [1], [0, 0, 1, 1], [], []>} : vector<32x873xbf16>, vector<873x32xbf16>, vector<32x32xf32> -> vector<32x32xf32>
    %c0_3 = arith.constant 0 : index
    %c0_4 = arith.constant 0 : index
    %3 = vector.load %arg2[%c0_3, %c0_4] : memref<32x1xf32, #tpu.memory_space<vmem>>, vector<32x1xf32>
    %4 = vector.broadcast %3 : vector<32x1xf32> to vector<32x32xf32>
    %5 = arith.addf %2, %4 : vector<32x32xf32>
    %cst_5 = arith.constant 0.000000e+00 : f32
    %6 = vector.broadcast %cst_5 : f32 to vector<32x32xf32>
    %7 = arith.minimumf %5, %6 : vector<32x32xf32>
    %8 = math.exp %7 : vector<32x32xf32>
    %cst_6 = arith.constant 1.000000e+00 : f32
    %9 = vector.broadcast %cst_6 : f32 to vector<32x32xf32>
    %10 = arith.subf %8, %9 : vector<32x32xf32>
    %cst_7 = arith.constant 0.000000e+00 : f32
    %11 = vector.broadcast %cst_7 : f32 to vector<32x32xf32>
    %12 = arith.cmpf ogt, %5, %11 : vector<32x32xf32>
    %13 = arith.select %12, %5, %10 : vector<32x32xi1>, vector<32x32xf32>
    %14 = arith.truncf %13 : vector<32x32xf32> to vector<32x32xbf16>
    %c0_8 = arith.constant 0 : index
    %c0_9 = arith.constant 0 : index
    %15 = vector.load %arg4[%c0_8, %c0_9] : memref<32x32xbf16, #tpu.memory_space<vmem>>, vector<32x32xbf16>
    tpu.vector_store %arg4[%c0_8, %c0_9], %14 {strides = array<i32>} : memref<32x32xbf16, #tpu.memory_space<vmem>>, vector<32x32xbf16>,
    return
  }
  func.func @transform_0(%arg0: i32) -> (i32, i32) {
    %c0_i32 = arith.constant 0 : i32
    %c0_i32_0 = arith.constant 0 : i32
    %c0_i32_1 = arith.constant 0 : i32
    return %c0_i32, %c0_i32_0 : i32, i32
  }
  func.func @transform_1(%arg0: i32) -> (i32, i32) {
    %c0_i32 = arith.constant 0 : i32
    %c0_i32_0 = arith.constant 0 : i32
    %c0_i32_1 = arith.constant 0 : i32
    return %c0_i32, %c0_i32_0 : i32, i32
  }
  func.func @transform_2(%arg0: i32) -> (i32, i32) {
    %c0_i32 = arith.constant 0 : i32
    %c0_i32_0 = arith.constant 0 : i32
    return %c0_i32, %arg0 : i32, i32
  }
  func.func @transform_3(%arg0: i32) -> (i32, i32) {
    %c0_i32 = arith.constant 0 : i32
    %c0_i32_0 = arith.constant 0 : i32
    return %c0_i32, %arg0 : i32, i32
  }
}

module attributes {stable_mosaic.version = 11 : i64} {
  func.func @_matmul_act_kernel(%arg0: i32, %arg1: memref<16x441xbf16, #tpu.memory_space<vmem>>, %arg2: memref<16x1xf32, #tpu.memory_space<vmem>>, %arg3: memref<441x128xbf16, #tpu.memory_space<vmem>>, %arg4: memref<16x128xbf16, #tpu.memory_space<vmem>>) attributes {dimension_semantics = [#tpu.dimension_semantics<parallel>], iteration_bounds = array<i64: 1>, scalar_prefetch = 0 : i64, scratch_operands = 0 : i64, tpu.core_type = #tpu.core_type<tc>, window_params = [{pipeline_mode = #tpu.pipeline_mode<synchronous>, transform_indices = @transform_0, window_bounds = array<i64: 16, 441>}, {pipeline_mode = #tpu.pipeline_mode<synchronous>, transform_indices = @transform_1, window_bounds = array<i64: 16, 1>}, {transform_indices = @transform_2, window_bounds = array<i64: 441, 128>}, {transform_indices = @transform_3, window_bounds = array<i64: 16, 128>}]} {
    %c0 = arith.constant 0 : index
    %c0_0 = arith.constant 0 : index
    %0 = vector.load %arg1[%c0, %c0_0] : memref<16x441xbf16, #tpu.memory_space<vmem>>, vector<16x441xbf16>
    %c0_1 = arith.constant 0 : index
    %c0_2 = arith.constant 0 : index
    %1 = vector.load %arg3[%c0_1, %c0_2] : memref<441x128xbf16, #tpu.memory_space<vmem>>, vector<441x128xbf16>
    %cst = arith.constant dense<0.000000e+00> : vector<16x128xf32>
    %2 = tpu.matmul %0, %1, %cst {dimension_numbers = #tpu.dot_dimension_numbers<[1], [0], [0], [1], [0, 0, 1, 1], [], []>} : vector<16x441xbf16>, vector<441x128xbf16>, vector<16x128xf32> -> vector<16x128xf32>
    %c0_3 = arith.constant 0 : index
    %c0_4 = arith.constant 0 : index
    %3 = vector.load %arg2[%c0_3, %c0_4] : memref<16x1xf32, #tpu.memory_space<vmem>>, vector<16x1xf32>
    %4 = vector.broadcast %3 : vector<16x1xf32> to vector<16x128xf32>
    %5 = arith.addf %2, %4 : vector<16x128xf32>
    %cst_5 = arith.constant 0.000000e+00 : f32
    %6 = vector.broadcast %cst_5 : f32 to vector<16x128xf32>
    %7 = arith.minimumf %5, %6 : vector<16x128xf32>
    %8 = math.exp %7 : vector<16x128xf32>
    %cst_6 = arith.constant 1.000000e+00 : f32
    %9 = vector.broadcast %cst_6 : f32 to vector<16x128xf32>
    %10 = arith.subf %8, %9 : vector<16x128xf32>
    %cst_7 = arith.constant 0.000000e+00 : f32
    %11 = vector.broadcast %cst_7 : f32 to vector<16x128xf32>
    %12 = arith.cmpf ogt, %5, %11 : vector<16x128xf32>
    %13 = arith.select %12, %5, %10 : vector<16x128xi1>, vector<16x128xf32>
    %14 = arith.truncf %13 : vector<16x128xf32> to vector<16x128xbf16>
    %c0_8 = arith.constant 0 : index
    %c0_9 = arith.constant 0 : index
    %15 = vector.load %arg4[%c0_8, %c0_9] : memref<16x128xbf16, #tpu.memory_space<vmem>>, vector<16x128xbf16>
    tpu.vector_store %arg4[%c0_8, %c0_9], %14 {strides = array<i32>} : memref<16x128xbf16, #tpu.memory_space<vmem>>, vector<16x128xbf16>,
    return
  }
  func.func @transform_0(%arg0: i32) -> (i32, i32) {
    %c0_i32 = arith.constant 0 : i32
    %c0_i32_0 = arith.constant 0 : i32
    %c0_i32_1 = arith.constant 0 : i32
    return %c0_i32, %c0_i32_0 : i32, i32
  }
  func.func @transform_1(%arg0: i32) -> (i32, i32) {
    %c0_i32 = arith.constant 0 : i32
    %c0_i32_0 = arith.constant 0 : i32
    %c0_i32_1 = arith.constant 0 : i32
    return %c0_i32, %c0_i32_0 : i32, i32
  }
  func.func @transform_2(%arg0: i32) -> (i32, i32) {
    %c0_i32 = arith.constant 0 : i32
    %c0_i32_0 = arith.constant 0 : i32
    return %c0_i32, %arg0 : i32, i32
  }
  func.func @transform_3(%arg0: i32) -> (i32, i32) {
    %c0_i32 = arith.constant 0 : i32
    %c0_i32_0 = arith.constant 0 : i32
    return %c0_i32, %arg0 : i32, i32
  }
}

module attributes {stable_mosaic.version = 11 : i64} {
  func.func @_matmul_act_kernel(%arg0: i32, %arg1: memref<1x475xbf16, #tpu.memory_space<vmem>>, %arg2: memref<1x1xf32, #tpu.memory_space<vmem>>, %arg3: memref<475x512xbf16, #tpu.memory_space<vmem>>, %arg4: memref<1x512xf32, #tpu.memory_space<vmem>>) attributes {dimension_semantics = [#tpu.dimension_semantics<parallel>], iteration_bounds = array<i64: 1>, scalar_prefetch = 0 : i64, scratch_operands = 0 : i64, tpu.core_type = #tpu.core_type<tc>, window_params = [{pipeline_mode = #tpu.pipeline_mode<synchronous>, transform_indices = @transform_0, window_bounds = array<i64: 1, 475>}, {pipeline_mode = #tpu.pipeline_mode<synchronous>, transform_indices = @transform_1, window_bounds = array<i64: 1, 1>}, {transform_indices = @transform_2, window_bounds = array<i64: 475, 512>}, {transform_indices = @transform_3, window_bounds = array<i64: 1, 512>}]} {
    %c0 = arith.constant 0 : index
    %c0_0 = arith.constant 0 : index
    %0 = vector.load %arg1[%c0, %c0_0] : memref<1x475xbf16, #tpu.memory_space<vmem>>, vector<1x475xbf16>
    %c0_1 = arith.constant 0 : index
    %c0_2 = arith.constant 0 : index
    %1 = vector.load %arg3[%c0_1, %c0_2] : memref<475x512xbf16, #tpu.memory_space<vmem>>, vector<475x512xbf16>
    %cst = arith.constant dense<0.000000e+00> : vector<1x512xf32>
    %2 = tpu.matmul %0, %1, %cst {dimension_numbers = #tpu.dot_dimension_numbers<[1], [0], [0], [1], [0, 0, 1, 1], [], []>} : vector<1x475xbf16>, vector<475x512xbf16>, vector<1x512xf32> -> vector<1x512xf32>
    %c0_3 = arith.constant 0 : index
    %c0_4 = arith.constant 0 : index
    %3 = vector.load %arg2[%c0_3, %c0_4] : memref<1x1xf32, #tpu.memory_space<vmem>>, vector<1x1xf32>
    %4 = vector.broadcast %3 : vector<1x1xf32> to vector<1x512xf32>
    %5 = arith.addf %2, %4 : vector<1x512xf32>
    %cst_5 = arith.constant 0.000000e+00 : f32
    %6 = vector.broadcast %cst_5 : f32 to vector<1x512xf32>
    %7 = arith.subf %6, %5 : vector<1x512xf32>
    %8 = math.exp %7 : vector<1x512xf32>
    %cst_6 = arith.constant 1.000000e+00 : f32
    %9 = vector.broadcast %cst_6 : f32 to vector<1x512xf32>
    %10 = arith.addf %9, %8 : vector<1x512xf32>
    %11 = tpu.reciprocal %10 {approx = true} : vector<1x512xf32> -> vector<1x512xf32>
    %cst_7 = arith.constant 2.550000e+02 : f32
    %12 = vector.broadcast %cst_7 : f32 to vector<1x512xf32>
    %13 = arith.mulf %12, %11 : vector<1x512xf32>
    %c0_8 = arith.constant 0 : index
    %c0_9 = arith.constant 0 : index
    %14 = vector.load %arg4[%c0_8, %c0_9] : memref<1x512xf32, #tpu.memory_space<vmem>>, vector<1x512xf32>
    tpu.vector_store %arg4[%c0_8, %c0_9], %13 {strides = array<i32>} : memref<1x512xf32, #tpu.memory_space<vmem>>, vector<1x512xf32>,
    return
  }
  func.func @transform_0(%arg0: i32) -> (i32, i32) {
    %c0_i32 = arith.constant 0 : i32
    %c0_i32_0 = arith.constant 0 : i32
    %c0_i32_1 = arith.constant 0 : i32
    return %c0_i32, %c0_i32_0 : i32, i32
  }
  func.func @transform_1(%arg0: i32) -> (i32, i32) {
    %c0_i32 = arith.constant 0 : i32
    %c0_i32_0 = arith.constant 0 : i32
    %c0_i32_1 = arith.constant 0 : i32
    return %c0_i32, %c0_i32_0 : i32, i32
  }
  func.func @transform_2(%arg0: i32) -> (i32, i32) {
    %c0_i32 = arith.constant 0 : i32
    %c0_i32_0 = arith.constant 0 : i32
    return %c0_i32, %arg0 : i32, i32
  }
  func.func @transform_3(%arg0: i32) -> (i32, i32) {
    %c0_i32 = arith.constant 0 : i32
    %c0_i32_0 = arith.constant 0 : i32
    return %c0_i32, %arg0 : i32, i32
  }
}

</mosaic_0001>

<llo_original>
// kernel: network3_forward.6
$region0: #{network3_forward.6}
  #allocation0 [shape = 'u32[]', space=smem, size = 0x4, offset = 0x4, fixed_abs, tag = 'smem constant byte address 0x4 - core index']
  #allocation1 [shape = 'u32[144,128]{1,0:T(1,128)}', space=vmem, size = 0x12000, scoped, tag = 'internal scratch']
  %s0 = inlined_call_operand.vmem [shape: bf16[16,75], index: 0, kind: input, shape index: {}]
  %s1 = inlined_call_operand.vmem [shape: f32[16,1], index: 1, kind: input, shape index: {}]
  %s2 = inlined_call_operand.vmem [shape: bf16[75,512], index: 2, kind: input, shape index: {}]
  %s3 = inlined_call_operand.vmem [shape: bf16[16,512], index: 3, kind: output, shape index: {}]
  %s4 = sld [smem:[#allocation0]]
  $region22: #{network3_forward.6} parent=0
    _
  %s6 = ssub.s32 1, %s4
  %s7 = scalar_select 0, %s6, %s4
  // Predicated region
  $region2: #{network3_forward.6} parent=0 // pred_check
    _
  $region3: #{network3_forward.6} parent=0 // pred_check_branch
    %9 = sbr.rel (0) target = $region5
  $region4: #{network3_forward.6} parent=0 // pred_region
    _
  $region5: #{network3_forward.6} parent=0 // pred_fallthru
    _
  // Predicated region
  $region6: #{network3_forward.6} parent=0 // pred_check
    _
  $region7: #{network3_forward.6} parent=0 // pred_check_branch
    %11 = sbr.rel (0) target = $region9
  $region8: #{network3_forward.6} parent=0 // pred_region
    _
  $region9: #{network3_forward.6} parent=0 // pred_fallthru
    _
  // Predicated region
  $region10: #{network3_forward.6} parent=0 // pred_check
    _
  $region11: #{network3_forward.6} parent=0 // pred_check_branch
    %13 = sbr.rel (0) target = $region13
  $region12: #{network3_forward.6} parent=0 // pred_region
    _
  $region13: #{network3_forward.6} parent=0 // pred_fallthru
    _
  %v15 = vld [vmem:[%s0] sm:$0xf]
  %v16 = vld [vmem:[%s0 + $0x4] sm:$0xf]
  %v17 = vld [vmem:[%s2] sm:$0xff]
  %v18 = vld [vmem:[%s2 + $0x8] sm:$0xff]
  %v19 = vld [vmem:[%s2 + $0x10] sm:$0xff]
  %v20 = vld [vmem:[%s2 + $0x18] sm:$0xff]
  %v21 = vld [vmem:[%s2 + $0x20] sm:$0xff]
  %v22 = vld [vmem:[%s2 + $0x28] sm:$0xff]
  %v23 = vld [vmem:[%s2 + $0x30] sm:$0xff]
  %v24 = vld [vmem:[%s2 + $0x38] sm:$0xff]
  %v25 = vld [vmem:[%s2 + $0x40] sm:$0xff]
  %v26 = vld [vmem:[%s2 + $0x48] sm:$0xff]
  %v27 = vld [vmem:[%s2 + $0x50] sm:$0xff]
  %v28 = vld [vmem:[%s2 + $0x58] sm:$0xff]
  %v29 = vld [vmem:[%s2 + $0x60] sm:$0xff]
  %v30 = vld [vmem:[%s2 + $0x68] sm:$0xff]
  %v31 = vld [vmem:[%s2 + $0x70] sm:$0xff]
  %v32 = vld [vmem:[%s2 + $0x78] sm:$0xff]
  %v33 = vld [vmem:[%s2 + $0x80] sm:$0xff]
  %v34 = vld [vmem:[%s2 + $0x88] sm:$0xff]
  %v35 = vld [vmem:[%s2 + $0x90] sm:$0x33]
  %v36 = vld [vmem:[%s2 + $0x98] sm:$0x33]
  %v37 = vld [vmem:[%s1] sm:$0xff]
  %v38 = vld [vmem:[%s1 + $0x8] sm:$0xff]
  %40 = vset.pattern.permute.xlu0 0
  %41 = vperm.xlu0 %40, %v37
  %v42 = vpop.permute.xlu0 %41
  %45 = vset.pattern.permute.xlu0 0
  %46 = vperm.xlu0 %45, %v38
  %v47 = vpop.permute.xlu0 %46
  %v51 = vunpack.c.l.b16 %v15
  %v52 = vunpack.c.l.b16 %v16
  %v53 = vpack.c.b16 %v52, %v51
  %v74 = vunpack.c.l.b16 %v17
  %v75 = vunpack.c.h.b16 %v17
  %v76 = vunpack.c.l.b16 %v18
  %v77 = vunpack.c.h.b16 %v18
  %v78 = vunpack.c.l.b16 %v19
  %v79 = vunpack.c.h.b16 %v19
  %v80 = vunpack.c.l.b16 %v20
  %v81 = vunpack.c.h.b16 %v20
  %v82 = vunpack.c.l.b16 %v21
  %v83 = vunpack.c.h.b16 %v21
  %v84 = vunpack.c.l.b16 %v22
  %v85 = vunpack.c.h.b16 %v22
  %v86 = vunpack.c.l.b16 %v23
  %v87 = vunpack.c.h.b16 %v23
  %v88 = vunpack.c.l.b16 %v24
  %v89 = vunpack.c.h.b16 %v24
  %v90 = vunpack.c.l.b16 %v25
  %v91 = vunpack.c.h.b16 %v25
  %v92 = vunpack.c.l.b16 %v26
  %v93 = vunpack.c.h.b16 %v26
  %v94 = vunpack.c.l.b16 %v27
  %v95 = vunpack.c.h.b16 %v27
  %v96 = vunpack.c.l.b16 %v28
  %v97 = vunpack.c.h.b16 %v28
  %v98 = vunpack.c.l.b16 %v29
  %v99 = vunpack.c.h.b16 %v29
  %v100 = vunpack.c.l.b16 %v30
  %v101 = vunpack.c.h.b16 %v30
  %v102 = vunpack.c.l.b16 %v31
  %v103 = vunpack.c.h.b16 %v31
  %v104 = vunpack.c.l.b16 %v32
  %v105 = vunpack.c.h.b16 %v32
  %v106 = vunpack.c.l.b16 %v33
  %v107 = vunpack.c.h.b16 %v33
  %v108 = vunpack.c.l.b16 %v34
  %v109 = vunpack.c.h.b16 %v34
  %v110 = vunpack.c.l.b16 %v35
  %v111 = vunpack.c.h.b16 %v35
  %v112 = vunpack.c.l.b16 %v36
  %v113 = vunpack.c.h.b16 %v36
  %v114 = vpack.c.b16 %v78, %v74
  %v115 = vpack.c.b16 %v79, %v75
  %v116 = vpack.c.b16 %v80, %v76
  %v117 = vpack.c.b16 %v81, %v77
  %v118 = vpack.c.b16 %v86, %v82
  %v119 = vpack.c.b16 %v87, %v83
  %v120 = vpack.c.b16 %v88, %v84
  %v121 = vpack.c.b16 %v89, %v85
  %v122 = vpack.c.b16 %v94, %v90
  %v123 = vpack.c.b16 %v95, %v91
  %v124 = vpack.c.b16 %v96, %v92
  %v125 = vpack.c.b16 %v97, %v93
  %v126 = vpack.c.b16 %v102, %v98
  %v127 = vpack.c.b16 %v103, %v99
  %v128 = vpack.c.b16 %v104, %v100
  %v129 = vpack.c.b16 %v105, %v101
  %v130 = vpack.c.b16 %v110, %v106
  %v131 = vpack.c.b16 %v111, %v107
  %v132 = vpack.c.b16 %v112, %v108
  %v133 = vpack.c.b16 %v113, %v109
  %vm150 = vcmask 613376
  %v152 = vsel %vm150, %v53, 0
  %vm154 = vcmask 1044480
  %vm155 = vcmask 1045504
  %v156 = vsel %vm154, 4294967295, 65535
  %v157 = vsel %vm155, %v156, 0
  %v159 = vand.u32 %v130, %v157
  %v162 = vand.u32 %v131, %v157
  %v165 = vand.u32 %v132, %v157
  %v168 = vand.u32 %v133, %v157
  %170 = vmatprep.subr.bf16.mxu0 %v115
  %171 = vmatpush1.bf16.msra.mxu0 %v114
  %172 = vmatprep.subr.bf16.mxu0 %v119
  %173 = vmatpush1.bf16.msra.mxu0 %v118
  %174 = vmatprep.subr.bf16.mxu0 %v123
  %175 = vmatpush1.bf16.msra.mxu0 %v122
  %176 = vmatprep.subr.bf16.mxu0 %v127
  %177 = vmatpush1.bf16.msra.mxu0 %v126
  %178 = vmatprep.subr.bf16.mxu0 %v162
  %179 = vmatpush1.bf16.msra.mxu0 %v159
  %180 = vmatprep.subr.bf16.mxu0 0
  %181 = vmatpush1.bf16.msra.mxu0 0
  %182 = vmatprep.subr.bf16.mxu0 0
  %183 = vmatpush1.bf16.msra.mxu0 0
  %184 = vmatprep.subr.bf16.mxu0 0
  %185 = vmatpush1.bf16.msra.mxu0 0
  %186 = vmatprep.subr.bf16.mxu0 0
  %187 = vmatpush1.bf16.msra.mxu0 0
  %188 = vmatprep.subr.bf16.mxu0 0
  %189 = vmatpush1.bf16.msra.mxu0 0
  %190 = vmatprep.subr.bf16.mxu0 0
  %191 = vmatpush1.bf16.msra.mxu0 0
  %192 = vmatprep.subr.bf16.mxu0 0
  %193 = vmatpush1.bf16.msra.mxu0 0
  %194 = vmatprep.subr.bf16.mxu0 0
  %195 = vmatpush1.bf16.msra.mxu0 0
  %196 = vmatprep.subr.bf16.mxu0 0
  %197 = vmatpush1.bf16.msra.mxu0 0
  %198 = vmatprep.subr.bf16.mxu0 0
  %199 = vmatpush1.bf16.msra.mxu0 0
  %200 = vmatprep.subr.bf16.mxu0 0
  %201 = vmatpush1.bf16.msra.mxu0 0
  %202 = vmatprep.mubr.bf16.mxu0 0
  %203 = vmatmul.mubr.bf16.gmra.mrb[0].mxu0 %v152
  %v204 = vpop.f32.mrb[0].mxu0
  %v205 = vadd.f32 %v42, %v204
  %v206 = vpop.f32.mrb[0].mxu0
  %v207 = vadd.f32 %v42, %v206
  %v208 = vpop.f32.mrb[0].mxu0
  %v209 = vadd.f32 %v47, %v208
  %v210 = vpop.f32.mrb[0].mxu0
  %v211 = vadd.f32 %v47, %v210
  %212 = vdwg.mxu0
  %213 = vmatprep.subr.bf16.mxu0 %v117
  %214 = vmatpush1.bf16.msra.mxu0 %v116
  %215 = vmatprep.subr.bf16.mxu0 %v121
  %216 = vmatpush1.bf16.msra.mxu0 %v120
  %217 = vmatprep.subr.bf16.mxu0 %v125
  %218 = vmatpush1.bf16.msra.mxu0 %v124
  %219 = vmatprep.subr.bf16.mxu0 %v129
  %220 = vmatpush1.bf16.msra.mxu0 %v128
  %221 = vmatprep.subr.bf16.mxu0 %v168
  %222 = vmatpush1.bf16.msra.mxu0 %v165
  %223 = vmatprep.subr.bf16.mxu0 0
  %224 = vmatpush1.bf16.msra.mxu0 0
  %225 = vmatprep.subr.bf16.mxu0 0
  %226 = vmatpush1.bf16.msra.mxu0 0
  %227 = vmatprep.subr.bf16.mxu0 0
  %228 = vmatpush1.bf16.msra.mxu0 0
  %229 = vmatprep.subr.bf16.mxu0 0
  %230 = vmatpush1.bf16.msra.mxu0 0
  %231 = vmatprep.subr.bf16.mxu0 0
  %232 = vmatpush1.bf16.msra.mxu0 0
  %233 = vmatprep.subr.bf16.mxu0 0
  %234 = vmatpush1.bf16.msra.mxu0 0
  %235 = vmatprep.subr.bf16.mxu0 0
  %236 = vmatpush1.bf16.msra.mxu0 0
  %237 = vmatprep.subr.bf16.mxu0 0
  %238 = vmatpush1.bf16.msra.mxu0 0
  %239 = vmatprep.subr.bf16.mxu0 0
  %240 = vmatpush1.bf16.msra.mxu0 0
  %241 = vmatprep.subr.bf16.mxu0 0
  %242 = vmatpush1.bf16.msra.mxu0 0
  %243 = vmatprep.subr.bf16.mxu0 0
  %244 = vmatpush1.bf16.msra.mxu0 0
  %245 = vmatprep.mubr.bf16.mxu0 0
  %246 = vmatmul.mubr.bf16.gmra.mrb[0].mxu0 %v152
  %v247 = vpop.f32.mrb[0].mxu0
  %v248 = vadd.f32 %v42, %v247
  %v249 = vpop.f32.mrb[0].mxu0
  %v250 = vadd.f32 %v42, %v249
  %v251 = vpop.f32.mrb[0].mxu0
  %v252 = vadd.f32 %v47, %v251
  %v253 = vpop.f32.mrb[0].mxu0
  %v254 = vadd.f32 %v47, %v253
  %255 = vdwg.mxu0
  %v256 = vmin.f32 %v205, 0.0
  %v257 = vmin.f32 %v207, 0.0
  %v258 = vmin.f32 %v248, 0.0
  %v259 = vmin.f32 %v250, 0.0
  %v260 = vmin.f32 %v209, 0.0
  %v261 = vmin.f32 %v211, 0.0
  %v262 = vmin.f32 %v252, 0.0
  %v263 = vmin.f32 %v254, 0.0
  %v264 = vmul.f32 %v256, 1.442695
  %v265 = vpow.pop %v264
  %v266 = vmul.f32 %v257, 1.442695
  %v267 = vpow.pop %v266
  %v268 = vmul.f32 %v258, 1.442695
  %v269 = vpow.pop %v268
  %v270 = vmul.f32 %v259, 1.442695
  %v271 = vpow.pop %v270
  %v272 = vmul.f32 %v260, 1.442695
  %v273 = vpow.pop %v272
  %v274 = vmul.f32 %v261, 1.442695
  %v275 = vpow.pop %v274
  %v276 = vmul.f32 %v262, 1.442695
  %v277 = vpow.pop %v276
  %v278 = vmul.f32 %v263, 1.442695
  %v279 = vpow.pop %v278
  %v280 = vsub.f32 %v265, 1.0
  %v281 = vsub.f32 %v267, 1.0
  %v282 = vsub.f32 %v269, 1.0
  %v283 = vsub.f32 %v271, 1.0
  %v284 = vsub.f32 %v273, 1.0
  %v285 = vsub.f32 %v275, 1.0
  %v286 = vsub.f32 %v277, 1.0
  %v287 = vsub.f32 %v279, 1.0
  %vm288 = vcmp.gt.f32.partialorder %v205, 0.0
  %vm289 = vcmp.gt.f32.partialorder %v207, 0.0
  %vm290 = vcmp.gt.f32.partialorder %v248, 0.0
  %vm291 = vcmp.gt.f32.partialorder %v250, 0.0
  %vm292 = vcmp.gt.f32.partialorder %v209, 0.0
  %vm293 = vcmp.gt.f32.partialorder %v211, 0.0
  %vm294 = vcmp.gt.f32.partialorder %v252, 0.0
  %vm295 = vcmp.gt.f32.partialorder %v254, 0.0
  %v296 = vsel %vm288, %v205, %v280
  %v297 = vsel %vm289, %v207, %v281
  %v298 = vsel %vm290, %v248, %v282
  %v299 = vsel %vm291, %v250, %v283
  %v300 = vsel %vm292, %v209, %v284
  %v301 = vsel %vm293, %v211, %v285
  %v302 = vsel %vm294, %v252, %v286
  %v303 = vsel %vm295, %v254, %v287
  %v304 = vpack.c.bf16 %v300, %v296
  %v305 = vpack.c.bf16 %v301, %v297
  %v306 = vpack.c.bf16 %v302, %v298
  %v307 = vpack.c.bf16 %v303, %v299
  %v312 = vunpack.c.l.b16 %v304
  %v313 = vunpack.c.l.b16 %v305
  %v314 = vunpack.c.l.b16 %v306
  %v315 = vunpack.c.l.b16 %v307
  %v316 = vunpack.c.h.b16 %v304
  %v317 = vunpack.c.h.b16 %v305
  %v318 = vunpack.c.h.b16 %v306
  %v319 = vunpack.c.h.b16 %v307
  %v320 = vpack.c.b16 %v313, %v312
  %v321 = vpack.c.b16 %v315, %v314
  %v322 = vpack.c.b16 %v317, %v316
  %v323 = vpack.c.b16 %v319, %v318
  %328 = vst [vmem:[%s3] sm:$0xff] %v320
  %329 = vst [vmem:[%s3 + $0x8] sm:$0xff] %v321
  %330 = vst [vmem:[%s3 + $0x10] sm:$0xff] %v322
  %331 = vst [vmem:[%s3 + $0x18] sm:$0xff] %v323
  // Predicated region
  $region14: #{network3_forward.6} parent=0 // pred_check
    _
  $region15: #{network3_forward.6} parent=0 // pred_check_branch
    %333 = sbr.rel (0) target = $region17
  $region16: #{network3_forward.6} parent=0 // pred_region
    _
  $region17: #{network3_forward.6} parent=0 // pred_fallthru
    _
  // Predicated region
  $region18: #{network3_forward.6} parent=0 // pred_check
    _
  $region19: #{network3_forward.6} parent=0 // pred_check_branch
    %335 = sbr.rel (0) target = $region21
  $region20: #{network3_forward.6} parent=0 // pred_region
    _
  $region21: #{network3_forward.6} parent=0 // pred_fallthru
    _

// kernel: network3_forward.7
$region0: #{network3_forward.7}
  #allocation0 [shape = 'u32[]', space=smem, size = 0x4, offset = 0x4, fixed_abs, tag = 'smem constant byte address 0x4 - core index']
  #allocation1 [shape = 'u32[144,128]{1,0:T(1,128)}', space=vmem, size = 0x12000, scoped, tag = 'internal scratch']
  %s0 = inlined_call_operand.vmem [shape: bf16[32,144], index: 0, kind: input, shape index: {}]
  %s1 = inlined_call_operand.vmem [shape: f32[32,1], index: 1, kind: input, shape index: {}]
  %s2 = inlined_call_operand.vmem [shape: bf16[144,128], index: 2, kind: input, shape index: {}]
  %s3 = inlined_call_operand.vmem [shape: bf16[32,128], index: 3, kind: output, shape index: {}]
  %s4 = sld [smem:[#allocation0]]
  $region22: #{network3_forward.7} parent=0
    _
  %s6 = ssub.s32 1, %s4
  %s7 = scalar_select 0, %s6, %s4
  // Predicated region
  $region2: #{network3_forward.7} parent=0 // pred_check
    _
  $region3: #{network3_forward.7} parent=0 // pred_check_branch
    %9 = sbr.rel (0) target = $region5
  $region4: #{network3_forward.7} parent=0 // pred_region
    _
  $region5: #{network3_forward.7} parent=0 // pred_fallthru
    _
  // Predicated region
  $region6: #{network3_forward.7} parent=0 // pred_check
    _
  $region7: #{network3_forward.7} parent=0 // pred_check_branch
    %11 = sbr.rel (0) target = $region9
  $region8: #{network3_forward.7} parent=0 // pred_region
    _
  $region9: #{network3_forward.7} parent=0 // pred_fallthru
    _
  // Predicated region
  $region10: #{network3_forward.7} parent=0 // pred_check
    _
  $region11: #{network3_forward.7} parent=0 // pred_check_branch
    %13 = sbr.rel (0) target = $region13
  $region12: #{network3_forward.7} parent=0 // pred_region
    _
  $region13: #{network3_forward.7} parent=0 // pred_fallthru
    _
  %v15 = vld [vmem:[%s0] sm:$0xff]
  %v16 = vld [vmem:[%s0 + $0x8] sm:$0xff]
  %v17 = vld [vmem:[%s0 + $0x10] sm:$0xff]
  %v18 = vld [vmem:[%s0 + $0x18] sm:$0xff]
  %v19 = vld [vmem:[%s2] sm:$0xf]
  %v20 = vld [vmem:[%s2 + $0x4] sm:$0xf]
  %v21 = vld [vmem:[%s2 + $0x8] sm:$0xf]
  %v22 = vld [vmem:[%s2 + $0xc] sm:$0xf]
  %v23 = vld [vmem:[%s2 + $0x10] sm:$0xf]
  %v24 = vld [vmem:[%s2 + $0x14] sm:$0xf]
  %v25 = vld [vmem:[%s2 + $0x18] sm:$0xf]
  %v26 = vld [vmem:[%s2 + $0x1c] sm:$0xf]
  %v27 = vld [vmem:[%s2 + $0x20] sm:$0xf]
  %v28 = vld [vmem:[%s2 + $0x24] sm:$0xf]
  %v29 = vld [vmem:[%s2 + $0x28] sm:$0xf]
  %v30 = vld [vmem:[%s2 + $0x2c] sm:$0xf]
  %v31 = vld [vmem:[%s2 + $0x30] sm:$0xf]
  %v32 = vld [vmem:[%s2 + $0x34] sm:$0xf]
  %v33 = vld [vmem:[%s2 + $0x38] sm:$0xf]
  %v34 = vld [vmem:[%s2 + $0x3c] sm:$0xf]
  %v35 = vld [vmem:[%s2 + $0x40] sm:$0xf]
  %v36 = vld [vmem:[%s2 + $0x44] sm:$0xf]
  %v37 = vld [vmem:[%s1] sm:$0xff]
  %v38 = vld [vmem:[%s1 + $0x8] sm:$0xff]
  %v39 = vld [vmem:[%s1 + $0x10] sm:$0xff]
  %v40 = vld [vmem:[%s1 + $0x18] sm:$0xff]
  %42 = vset.pattern.permute.xlu0 0
  %43 = vperm.xlu0 %42, %v37
  %v44 = vpop.permute.xlu0 %43
  %47 = vset.pattern.permute.xlu0 0
  %48 = vperm.xlu0 %47, %v38
  %v49 = vpop.permute.xlu0 %48
  %52 = vset.pattern.permute.xlu0 0
  %53 = vperm.xlu0 %52, %v39
  %v54 = vpop.permute.xlu0 %53
  %57 = vset.pattern.permute.xlu0 0
  %58 = vperm.xlu0 %57, %v40
  %v59 = vpop.permute.xlu0 %58
  %v65 = vunpack.c.l.b16 %v15
  %v66 = vunpack.c.h.b16 %v15
  %v67 = vunpack.c.l.b16 %v16
  %v68 = vunpack.c.h.b16 %v16
  %v69 = vunpack.c.l.b16 %v17
  %v70 = vunpack.c.h.b16 %v17
  %v71 = vunpack.c.l.b16 %v18
  %v72 = vunpack.c.h.b16 %v18
  %v73 = vpack.c.b16 %v67, %v65
  %v74 = vpack.c.b16 %v68, %v66
  %v75 = vpack.c.b16 %v71, %v69
  %v76 = vpack.c.b16 %v72, %v70
  %v97 = vunpack.c.l.b16 %v19
  %v98 = vunpack.c.l.b16 %v20
  %v99 = vunpack.c.l.b16 %v21
  %v100 = vunpack.c.l.b16 %v22
  %v101 = vunpack.c.l.b16 %v23
  %v102 = vunpack.c.l.b16 %v24
  %v103 = vunpack.c.l.b16 %v25
  %v104 = vunpack.c.l.b16 %v26
  %v105 = vunpack.c.l.b16 %v27
  %v106 = vunpack.c.l.b16 %v28
  %v107 = vunpack.c.l.b16 %v29
  %v108 = vunpack.c.l.b16 %v30
  %v109 = vunpack.c.l.b16 %v31
  %v110 = vunpack.c.l.b16 %v32
  %v111 = vunpack.c.l.b16 %v33
  %v112 = vunpack.c.l.b16 %v34
  %v113 = vunpack.c.l.b16 %v35
  %v114 = vunpack.c.l.b16 %v36
  %v115 = vpack.c.b16 %v98, %v97
  %v116 = vpack.c.b16 %v100, %v99
  %v117 = vpack.c.b16 %v102, %v101
  %v118 = vpack.c.b16 %v104, %v103
  %v119 = vpack.c.b16 %v106, %v105
  %v120 = vpack.c.b16 %v108, %v107
  %v121 = vpack.c.b16 %v110, %v109
  %v122 = vpack.c.b16 %v112, %v111
  %v123 = vpack.c.b16 %v114, %v113
  %vm133 = vcmask 130048
  %v135 = vsel %vm133, %v74, 0
  %v138 = vsel %vm133, %v76, 0
  %140 = vmatprep.subr.bf16.mxu0 0
  %141 = vmatpush1.bf16.msra.mxu0 %v115
  %142 = vmatprep.subr.bf16.mxu0 0
  %143 = vmatpush1.bf16.msra.mxu0 %v116
  %144 = vmatprep.subr.bf16.mxu0 0
  %145 = vmatpush1.bf16.msra.mxu0 %v117
  %146 = vmatprep.subr.bf16.mxu0 0
  %147 = vmatpush1.bf16.msra.mxu0 %v118
  %148 = vmatprep.subr.bf16.mxu0 0
  %149 = vmatpush1.bf16.msra.mxu0 %v119
  %150 = vmatprep.subr.bf16.mxu0 0
  %151 = vmatpush1.bf16.msra.mxu0 %v120
  %152 = vmatprep.subr.bf16.mxu0 0
  %153 = vmatpush1.bf16.msra.mxu0 %v121
  %154 = vmatprep.subr.bf16.mxu0 0
  %155 = vmatpush1.bf16.msra.mxu0 %v122
  %156 = vmatprep.subr.bf16.mxu0 0
  %157 = vmatpush1.bf16.msra.mxu0 %v123
  %158 = vmatprep.subr.bf16.mxu0 0
  %159 = vmatpush1.bf16.msra.mxu0 0
  %160 = vmatprep.subr.bf16.mxu0 0
  %161 = vmatpush1.bf16.msra.mxu0 0
  %162 = vmatprep.subr.bf16.mxu0 0
  %163 = vmatpush1.bf16.msra.mxu0 0
  %164 = vmatprep.subr.bf16.mxu0 0
  %165 = vmatpush1.bf16.msra.mxu0 0
  %166 = vmatprep.subr.bf16.mxu0 0
  %167 = vmatpush1.bf16.msra.mxu0 0
  %168 = vmatprep.subr.bf16.mxu0 0
  %169 = vmatpush1.bf16.msra.mxu0 0
  %170 = vmatprep.subr.bf16.mxu0 0
  %171 = vmatpush1.bf16.msra.mxu0 0
  %172 = vmatprep.mubr.bf16.mxu0 %v135
  %173 = vmatmul.mubr.bf16.gmra.mrb[0].mxu0 %v73
  %v174 = vpop.f32.mrb[0].mxu0
  %v175 = vadd.f32 %v44, %v174
  %v176 = vpop.f32.mrb[0].mxu0
  %v177 = vpop.f32.mrb[0].mxu0
  %v178 = vadd.f32 %v49, %v177
  %v179 = vpop.f32.mrb[0].mxu0
  %180 = vmatprep.mubr.bf16.mxu0 %v138
  %181 = vmatmul.mubr.bf16.gmra.mrb[0].mxu0 %v75
  %v182 = vpop.f32.mrb[0].mxu0
  %v183 = vadd.f32 %v54, %v182
  %v184 = vpop.f32.mrb[0].mxu0
  %v185 = vpop.f32.mrb[0].mxu0
  %v186 = vadd.f32 %v59, %v185
  %v187 = vpop.f32.mrb[0].mxu0
  %188 = vdwg.mxu0
  %v189 = vmin.f32 %v175, 0.0
  %v190 = vmin.f32 %v178, 0.0
  %v191 = vmin.f32 %v183, 0.0
  %v192 = vmin.f32 %v186, 0.0
  %v193 = vmul.f32 %v189, 1.442695
  %v194 = vpow.pop %v193
  %v195 = vmul.f32 %v190, 1.442695
  %v196 = vpow.pop %v195
  %v197 = vmul.f32 %v191, 1.442695
  %v198 = vpow.pop %v197
  %v199 = vmul.f32 %v192, 1.442695
  %v200 = vpow.pop %v199
  %v201 = vsub.f32 %v194, 1.0
  %v202 = vsub.f32 %v196, 1.0
  %v203 = vsub.f32 %v198, 1.0
  %v204 = vsub.f32 %v200, 1.0
  %vm205 = vcmp.gt.f32.partialorder %v175, 0.0
  %vm206 = vcmp.gt.f32.partialorder %v178, 0.0
  %vm207 = vcmp.gt.f32.partialorder %v183, 0.0
  %vm208 = vcmp.gt.f32.partialorder %v186, 0.0
  %v209 = vsel %vm205, %v175, %v201
  %v210 = vsel %vm206, %v178, %v202
  %v211 = vsel %vm207, %v183, %v203
  %v212 = vsel %vm208, %v186, %v204
  %v213 = vpack.c.bf16 %v210, %v209
  %v214 = vpack.c.bf16 %v212, %v211
  %v217 = vunpack.c.l.b16 %v213
  %v218 = vunpack.c.h.b16 %v213
  %v219 = vunpack.c.l.b16 %v214
  %v220 = vunpack.c.h.b16 %v214
  %v221 = vpack.c.b16 %v217, %v217
  %v222 = vpack.c.b16 %v218, %v218
  %v223 = vpack.c.b16 %v219, %v219
  %v224 = vpack.c.b16 %v220, %v220
  %229 = vst [vmem:[%s3] sm:$0xf] %v221
  %230 = vst [vmem:[%s3 + $0x4] sm:$0xf] %v222
  %231 = vst [vmem:[%s3 + $0x8] sm:$0xf] %v223
  %232 = vst [vmem:[%s3 + $0xc] sm:$0xf] %v224
  // Predicated region
  $region14: #{network3_forward.7} parent=0 // pred_check
    _
  $region15: #{network3_forward.7} parent=0 // pred_check_branch
    %234 = sbr.rel (0) target = $region17
  $region16: #{network3_forward.7} parent=0 // pred_region
    _
  $region17: #{network3_forward.7} parent=0 // pred_fallthru
    _
  // Predicated region
  $region18: #{network3_forward.7} parent=0 // pred_check
    _
  $region19: #{network3_forward.7} parent=0 // pred_check_branch
    %236 = sbr.rel (0) target = $region21
  $region20: #{network3_forward.7} parent=0 // pred_region
    _
  $region21: #{network3_forward.7} parent=0 // pred_fallthru
    _

// kernel: network3_forward.8
$region0: #{network3_forward.8}
  #allocation0 [shape = 'u32[]', space=smem, size = 0x4, offset = 0x4, fixed_abs, tag = 'smem constant byte address 0x4 - core index']
  #allocation1 [shape = 'u32[144,128]{1,0:T(1,128)}', space=vmem, size = 0x12000, scoped, tag = 'internal scratch']
  %s0 = inlined_call_operand.vmem [shape: bf16[64,288], index: 0, kind: input, shape index: {}]
  %s1 = inlined_call_operand.vmem [shape: f32[64,1], index: 1, kind: input, shape index: {}]
  %s2 = inlined_call_operand.vmem [shape: bf16[288,32], index: 2, kind: input, shape index: {}]
  %s3 = inlined_call_operand.vmem [shape: bf16[64,32], index: 3, kind: output, shape index: {}]
  %s4 = sld [smem:[#allocation0]]
  $region22: #{network3_forward.8} parent=0
    _
  %s6 = ssub.s32 1, %s4
  %s7 = scalar_select 0, %s6, %s4
  // Predicated region
  $region2: #{network3_forward.8} parent=0 // pred_check
    _
  $region3: #{network3_forward.8} parent=0 // pred_check_branch
    %9 = sbr.rel (0) target = $region5
  $region4: #{network3_forward.8} parent=0 // pred_region
    _
  $region5: #{network3_forward.8} parent=0 // pred_fallthru
    _
  // Predicated region
  $region6: #{network3_forward.8} parent=0 // pred_check
    _
  $region7: #{network3_forward.8} parent=0 // pred_check_branch
    %11 = sbr.rel (0) target = $region9
  $region8: #{network3_forward.8} parent=0 // pred_region
    _
  $region9: #{network3_forward.8} parent=0 // pred_fallthru
    _
  // Predicated region
  $region10: #{network3_forward.8} parent=0 // pred_check
    _
  $region11: #{network3_forward.8} parent=0 // pred_check_branch
    %13 = sbr.rel (0) target = $region13
  $region12: #{network3_forward.8} parent=0 // pred_region
    _
  $region13: #{network3_forward.8} parent=0 // pred_fallthru
    _
  %v15 = vld [vmem:[%s0] sm:$0xff]
  %v16 = vld [vmem:[%s0 + $0x8] sm:$0xf]
  %v17 = vld [vmem:[%s0 + $0xc] sm:$0xff]
  %v18 = vld [vmem:[%s0 + $0x14] sm:$0xf]
  %v19 = vld [vmem:[%s0 + $0x18] sm:$0xff]
  %v20 = vld [vmem:[%s0 + $0x20] sm:$0xf]
  %v21 = vld [vmem:[%s0 + $0x24] sm:$0xff]
  %v22 = vld [vmem:[%s0 + $0x2c] sm:$0xf]
  %v23 = vld [vmem:[%s0 + $0x30] sm:$0xff]
  %v24 = vld [vmem:[%s0 + $0x38] sm:$0xf]
  %v25 = vld [vmem:[%s0 + $0x3c] sm:$0xff]
  %v26 = vld [vmem:[%s0 + $0x44] sm:$0xf]
  %v27 = vld [vmem:[%s0 + $0x48] sm:$0xff]
  %v28 = vld [vmem:[%s0 + $0x50] sm:$0xf]
  %v29 = vld [vmem:[%s0 + $0x54] sm:$0xff]
  %v30 = vld [vmem:[%s0 + $0x5c] sm:$0xf]
  %v31 = vld [vmem:[%s2] sm:$0xf]
  %v32 = vld [vmem:[%s2 + $0x4] sm:$0xf]
  %v33 = vld [vmem:[%s2 + $0x8] sm:$0xf]
  %v34 = vld [vmem:[%s2 + $0xc] sm:$0xf]
  %v35 = vld [vmem:[%s2 + $0x10] sm:$0xf]
  %v36 = vld [vmem:[%s2 + $0x14] sm:$0xf]
  %v37 = vld [vmem:[%s2 + $0x18] sm:$0xf]
  %v38 = vld [vmem:[%s2 + $0x1c] sm:$0xf]
  %v39 = vld [vmem:[%s2 + $0x20] sm:$0xf]
  %v40 = vld [vmem:[%s2 + $0x24] sm:$0xf]
  %v41 = vld [vmem:[%s2 + $0x28] sm:$0xf]
  %v42 = vld [vmem:[%s2 + $0x2c] sm:$0xf]
  %v43 = vld [vmem:[%s2 + $0x30] sm:$0xf]
  %v44 = vld [vmem:[%s2 + $0x34] sm:$0xf]
  %v45 = vld [vmem:[%s2 + $0x38] sm:$0xf]
  %v46 = vld [vmem:[%s2 + $0x3c] sm:$0xf]
  %v47 = vld [vmem:[%s2 + $0x40] sm:$0xf]
  %v48 = vld [vmem:[%s2 + $0x44] sm:$0xf]
  %v49 = vld [vmem:[%s2 + $0x48] sm:$0xf]
  %v50 = vld [vmem:[%s2 + $0x4c] sm:$0xf]
  %v51 = vld [vmem:[%s2 + $0x50] sm:$0xf]
  %v52 = vld [vmem:[%s2 + $0x54] sm:$0xf]
  %v53 = vld [vmem:[%s2 + $0x58] sm:$0xf]
  %v54 = vld [vmem:[%s2 + $0x5c] sm:$0xf]
  %v55 = vld [vmem:[%s2 + $0x60] sm:$0xf]
  %v56 = vld [vmem:[%s2 + $0x64] sm:$0xf]
  %v57 = vld [vmem:[%s2 + $0x68] sm:$0xf]
  %v58 = vld [vmem:[%s2 + $0x6c] sm:$0xf]
  %v59 = vld [vmem:[%s2 + $0x70] sm:$0xf]
  %v60 = vld [vmem:[%s2 + $0x74] sm:$0xf]
  %v61 = vld [vmem:[%s2 + $0x78] sm:$0xf]
  %v62 = vld [vmem:[%s2 + $0x7c] sm:$0xf]
  %v63 = vld [vmem:[%s2 + $0x80] sm:$0xf]
  %v64 = vld [vmem:[%s2 + $0x84] sm:$0xf]
  %v65 = vld [vmem:[%s2 + $0x88] sm:$0xf]
  %v66 = vld [vmem:[%s2 + $0x8c] sm:$0xf]
  %v67 = vld [vmem:[%s1] sm:$0xff]
  %v68 = vld [vmem:[%s1 + $0x8] sm:$0xff]
  %v69 = vld [vmem:[%s1 + $0x10] sm:$0xff]
  %v70 = vld [vmem:[%s1 + $0x18] sm:$0xff]
  %v71 = vld [vmem:[%s1 + $0x20] sm:$0xff]
  %v72 = vld [vmem:[%s1 + $0x28] sm:$0xff]
  %v73 = vld [vmem:[%s1 + $0x30] sm:$0xff]
  %v74 = vld [vmem:[%s1 + $0x38] sm:$0xff]
  %76 = vset.pattern.permute.xlu0 0
  %77 = vperm.xlu0 %76, %v67
  %v78 = vpop.permute.xlu0 %77
  %81 = vset.pattern.permute.xlu0 0
  %82 = vperm.xlu0 %81, %v68
  %v83 = vpop.permute.xlu0 %82
  %86 = vset.pattern.permute.xlu0 0
  %87 = vperm.xlu0 %86, %v69
  %v88 = vpop.permute.xlu0 %87
  %91 = vset.pattern.permute.xlu0 0
  %92 = vperm.xlu0 %91, %v70
  %v93 = vpop.permute.xlu0 %92
  %96 = vset.pattern.permute.xlu0 0
  %97 = vperm.xlu0 %96, %v71
  %v98 = vpop.permute.xlu0 %97
  %101 = vset.pattern.permute.xlu0 0
  %102 = vperm.xlu0 %101, %v72
  %v103 = vpop.permute.xlu0 %102
  %106 = vset.pattern.permute.xlu0 0
  %107 = vperm.xlu0 %106, %v73
  %v108 = vpop.permute.xlu0 %107
  %111 = vset.pattern.permute.xlu0 0
  %112 = vperm.xlu0 %111, %v74
  %v113 = vpop.permute.xlu0 %112
  %v131 = vunpack.c.l.b16 %v15
  %v132 = vunpack.c.h.b16 %v15
  %v133 = vunpack.c.l.b16 %v16
  %v134 = vunpack.c.l.b16 %v17
  %v135 = vunpack.c.h.b16 %v17
  %v136 = vunpack.c.l.b16 %v18
  %v137 = vunpack.c.l.b16 %v19
  %v138 = vunpack.c.h.b16 %v19
  %v139 = vunpack.c.l.b16 %v20
  %v140 = vunpack.c.l.b16 %v21
  %v141 = vunpack.c.h.b16 %v21
  %v142 = vunpack.c.l.b16 %v22
  %v143 = vunpack.c.l.b16 %v23
  %v144 = vunpack.c.h.b16 %v23
  %v145 = vunpack.c.l.b16 %v24
  %v146 = vunpack.c.l.b16 %v25
  %v147 = vunpack.c.h.b16 %v25
  %v148 = vunpack.c.l.b16 %v26
  %v149 = vunpack.c.l.b16 %v27
  %v150 = vunpack.c.h.b16 %v27
  %v151 = vunpack.c.l.b16 %v28
  %v152 = vunpack.c.l.b16 %v29
  %v153 = vunpack.c.h.b16 %v29
  %v154 = vunpack.c.l.b16 %v30
  %v155 = vpack.c.b16 %v134, %v131
  %v156 = vpack.c.b16 %v135, %v132
  %v157 = vpack.c.b16 %v136, %v133
  %v158 = vpack.c.b16 %v140, %v137
  %v159 = vpack.c.b16 %v141, %v138
  %v160 = vpack.c.b16 %v142, %v139
  %v161 = vpack.c.b16 %v146, %v143
  %v162 = vpack.c.b16 %v147, %v144
  %v163 = vpack.c.b16 %v148, %v145
  %v164 = vpack.c.b16 %v152, %v149
  %v165 = vpack.c.b16 %v153, %v150
  %v166 = vpack.c.b16 %v154, %v151
  %v211 = vunpack.c.l.b16 %v31
  %v212 = vunpack.c.l.b16 %v32
  %v213 = vunpack.c.l.b16 %v33
  %v214 = vunpack.c.l.b16 %v34
  %v215 = vunpack.c.l.b16 %v35
  %v216 = vunpack.c.l.b16 %v36
  %v217 = vunpack.c.l.b16 %v37
  %v218 = vunpack.c.l.b16 %v38
  %v219 = vunpack.c.l.b16 %v39
  %v220 = vunpack.c.l.b16 %v40
  %v221 = vunpack.c.l.b16 %v41
  %v222 = vunpack.c.l.b16 %v42
  %v223 = vunpack.c.l.b16 %v43
  %v224 = vunpack.c.l.b16 %v44
  %v225 = vunpack.c.l.b16 %v45
  %v226 = vunpack.c.l.b16 %v46
  %v227 = vunpack.c.l.b16 %v47
  %v228 = vunpack.c.l.b16 %v48
  %v229 = vunpack.c.l.b16 %v49
  %v230 = vunpack.c.l.b16 %v50
  %v231 = vunpack.c.l.b16 %v51
  %v232 = vunpack.c.l.b16 %v52
  %v233 = vunpack.c.l.b16 %v53
  %v234 = vunpack.c.l.b16 %v54
  %v235 = vunpack.c.l.b16 %v55
  %v236 = vunpack.c.l.b16 %v56
  %v237 = vunpack.c.l.b16 %v57
  %v238 = vunpack.c.l.b16 %v58
  %v239 = vunpack.c.l.b16 %v59
  %v240 = vunpack.c.l.b16 %v60
  %v241 = vunpack.c.l.b16 %v61
  %v242 = vunpack.c.l.b16 %v62
  %v243 = vunpack.c.l.b16 %v63
  %v244 = vunpack.c.l.b16 %v64
  %v245 = vunpack.c.l.b16 %v65
  %v246 = vunpack.c.l.b16 %v66
  %v247 = vpack.c.b16 %v212, %v211
  %v248 = vpack.c.b16 %v214, %v213
  %v249 = vpack.c.b16 %v216, %v215
  %v250 = vpack.c.b16 %v218, %v217
  %v251 = vpack.c.b16 %v220, %v219
  %v252 = vpack.c.b16 %v222, %v221
  %v253 = vpack.c.b16 %v224, %v223
  %v254 = vpack.c.b16 %v226, %v225
  %v255 = vpack.c.b16 %v228, %v227
  %v256 = vpack.c.b16 %v230, %v229
  %v257 = vpack.c.b16 %v232, %v231
  %v258 = vpack.c.b16 %v234, %v233
  %v259 = vpack.c.b16 %v236, %v235
  %v260 = vpack.c.b16 %v238, %v237
  %v261 = vpack.c.b16 %v240, %v239
  %v262 = vpack.c.b16 %v242, %v241
  %v263 = vpack.c.b16 %v244, %v243
  %v264 = vpack.c.b16 %v246, %v245
  %vm283 = vcmask 261120
  %v285 = vsel %vm283, %v157, 0
  %v288 = vsel %vm283, %v160, 0
  %v291 = vsel %vm283, %v163, 0
  %v294 = vsel %vm283, %v166, 0
  %296 = vmatprep.subr.bf16.mxu0 0
  %297 = vmatpush1.bf16.msra.mxu0 %v247
  %298 = vmatprep.subr.bf16.mxu0 0
  %299 = vmatpush1.bf16.msra.mxu0 %v248
  %300 = vmatprep.subr.bf16.mxu0 0
  %301 = vmatpush1.bf16.msra.mxu0 %v249
  %302 = vmatprep.subr.bf16.mxu0 0
  %303 = vmatpush1.bf16.msra.mxu0 %v250
  %304 = vmatprep.subr.bf16.mxu0 0
  %305 = vmatpush1.bf16.msra.mxu0 %v251
  %306 = vmatprep.subr.bf16.mxu0 0
  %307 = vmatpush1.bf16.msra.mxu0 %v252
  %308 = vmatprep.subr.bf16.mxu0 0
  %309 = vmatpush1.bf16.msra.mxu0 %v253
  %310 = vmatprep.subr.bf16.mxu0 0
  %311 = vmatpush1.bf16.msra.mxu0 %v254
  %312 = vmatprep.subr.bf16.mxu0 0
  %313 = vmatpush1.bf16.msra.mxu0 %v255
  %314 = vmatprep.subr.bf16.mxu0 0
  %315 = vmatpush1.bf16.msra.mxu0 %v256
  %316 = vmatprep.subr.bf16.mxu0 0
  %317 = vmatpush1.bf16.msra.mxu0 %v257
  %318 = vmatprep.subr.bf16.mxu0 0
  %319 = vmatpush1.bf16.msra.mxu0 %v258
  %320 = vmatprep.subr.bf16.mxu0 0
  %321 = vmatpush1.bf16.msra.mxu0 %v259
  %322 = vmatprep.subr.bf16.mxu0 0
  %323 = vmatpush1.bf16.msra.mxu0 %v260
  %324 = vmatprep.subr.bf16.mxu0 0
  %325 = vmatpush1.bf16.msra.mxu0 %v261
  %326 = vmatprep.subr.bf16.mxu0 0
  %327 = vmatpush1.bf16.msra.mxu0 %v262
  %328 = vmatprep.mubr.bf16.mxu0 %v156
  %329 = vmatmul.mubr.bf16.gmra.mrb[0].mxu0 %v155
  %v330 = vpop.f32.mrb[0].mxu0
  %v331 = vadd.f32 %v78, %v330
  %v332 = vpop.f32.mrb[0].mxu0
  %v333 = vpop.f32.mrb[0].mxu0
  %v334 = vadd.f32 %v83, %v333
  %v335 = vpop.f32.mrb[0].mxu0
  %336 = vmatprep.mubr.bf16.mxu0 %v159
  %337 = vmatmul.mubr.bf16.gmra.mrb[0].mxu0 %v158
  %v338 = vpop.f32.mrb[0].mxu0
  %v339 = vadd.f32 %v88, %v338
  %v340 = vpop.f32.mrb[0].mxu0
  %v341 = vpop.f32.mrb[0].mxu0
  %v342 = vadd.f32 %v93, %v341
  %v343 = vpop.f32.mrb[0].mxu0
  %344 = vmatprep.mubr.bf16.mxu0 %v162
  %345 = vmatmul.mubr.bf16.gmra.mrb[0].mxu0 %v161
  %v346 = vpop.f32.mrb[0].mxu0
  %v347 = vadd.f32 %v98, %v346
  %v348 = vpop.f32.mrb[0].mxu0
  %v349 = vpop.f32.mrb[0].mxu0
  %v350 = vadd.f32 %v103, %v349
  %v351 = vpop.f32.mrb[0].mxu0
  %352 = vmatprep.mubr.bf16.mxu0 %v165
  %353 = vmatmul.mubr.bf16.gmra.mrb[0].mxu0 %v164
  %v354 = vpop.f32.mrb[0].mxu0
  %v355 = vadd.f32 %v108, %v354
  %v356 = vpop.f32.mrb[0].mxu0
  %v357 = vpop.f32.mrb[0].mxu0
  %v358 = vadd.f32 %v113, %v357
  %v359 = vpop.f32.mrb[0].mxu0
  %360 = vdwg.mxu0
  %361 = vmatprep.subr.bf16.mxu0 0
  %362 = vmatpush1.bf16.msra.mxu0 %v263
  %363 = vmatprep.subr.bf16.mxu0 0
  %364 = vmatpush1.bf16.msra.mxu0 %v264
  %365 = vmatprep.subr.bf16.mxu0 0
  %366 = vmatpush1.bf16.msra.mxu0 0
  %367 = vmatprep.subr.bf16.mxu0 0
  %368 = vmatpush1.bf16.msra.mxu0 0
  %369 = vmatprep.subr.bf16.mxu0 0
  %370 = vmatpush1.bf16.msra.mxu0 0
  %371 = vmatprep.subr.bf16.mxu0 0
  %372 = vmatpush1.bf16.msra.mxu0 0
  %373 = vmatprep.subr.bf16.mxu0 0
  %374 = vmatpush1.bf16.msra.mxu0 0
  %375 = vmatprep.subr.bf16.mxu0 0
  %376 = vmatpush1.bf16.msra.mxu0 0
  %377 = vmatprep.subr.bf16.mxu0 0
  %378 = vmatpush1.bf16.msra.mxu0 0
  %379 = vmatprep.subr.bf16.mxu0 0
  %380 = vmatpush1.bf16.msra.mxu0 0
  %381 = vmatprep.subr.bf16.mxu0 0
  %382 = vmatpush1.bf16.msra.mxu0 0
  %383 = vmatprep.subr.bf16.mxu0 0
  %384 = vmatpush1.bf16.msra.mxu0 0
  %385 = vmatprep.subr.bf16.mxu0 0
  %386 = vmatpush1.bf16.msra.mxu0 0
  %387 = vmatprep.subr.bf16.mxu0 0
  %388 = vmatpush1.bf16.msra.mxu0 0
  %389 = vmatprep.subr.bf16.mxu0 0
  %390 = vmatpush1.bf16.msra.mxu0 0
  %391 = vmatprep.subr.bf16.mxu0 0
  %392 = vmatpush1.bf16.msra.mxu0 0
  %393 = vmatprep.mubr.bf16.mxu0 0
  %394 = vmatmul.mubr.bf16.gmra.mrb[0].mxu0 %v285
  %v395 = vpop.f32.mrb[0].mxu0
  %v396 = vadd.f32 %v331, %v395
  %v397 = vpop.f32.mrb[0].mxu0
  %v398 = vpop.f32.mrb[0].mxu0
  %v399 = vadd.f32 %v334, %v398
  %v400 = vpop.f32.mrb[0].mxu0
  %401 = vmatprep.mubr.bf16.mxu0 0
  %402 = vmatmul.mubr.bf16.gmra.mrb[0].mxu0 %v288
  %v403 = vpop.f32.mrb[0].mxu0
  %v404 = vadd.f32 %v339, %v403
  %v405 = vpop.f32.mrb[0].mxu0
  %v406 = vpop.f32.mrb[0].mxu0
  %v407 = vadd.f32 %v342, %v406
  %v408 = vpop.f32.mrb[0].mxu0
  %409 = vmatprep.mubr.bf16.mxu0 0
  %410 = vmatmul.mubr.bf16.gmra.mrb[0].mxu0 %v291
  %v411 = vpop.f32.mrb[0].mxu0
  %v412 = vadd.f32 %v347, %v411
  %v413 = vpop.f32.mrb[0].mxu0
  %v414 = vpop.f32.mrb[0].mxu0
  %v415 = vadd.f32 %v350, %v414
  %v416 = vpop.f32.mrb[0].mxu0
  %417 = vmatprep.mubr.bf16.mxu0 0
  %418 = vmatmul.mubr.bf16.gmra.mrb[0].mxu0 %v294
  %v419 = vpop.f32.mrb[0].mxu0
  %v420 = vadd.f32 %v355, %v419
  %v421 = vpop.f32.mrb[0].mxu0
  %v422 = vpop.f32.mrb[0].mxu0
  %v423 = vadd.f32 %v358, %v422
  %v424 = vpop.f32.mrb[0].mxu0
  %425 = vdwg.mxu0
  %v426 = vmin.f32 %v396, 0.0
  %v427 = vmin.f32 %v399, 0.0
  %v428 = vmin.f32 %v404, 0.0
  %v429 = vmin.f32 %v407, 0.0
  %v430 = vmin.f32 %v412, 0.0
  %v431 = vmin.f32 %v415, 0.0
  %v432 = vmin.f32 %v420, 0.0
  %v433 = vmin.f32 %v423, 0.0
  %v434 = vmul.f32 %v426, 1.442695
  %v435 = vpow.pop %v434
  %v436 = vmul.f32 %v427, 1.442695
  %v437 = vpow.pop %v436
  %v438 = vmul.f32 %v428, 1.442695
  %v439 = vpow.pop %v438
  %v440 = vmul.f32 %v429, 1.442695
  %v441 = vpow.pop %v440
  %v442 = vmul.f32 %v430, 1.442695
  %v443 = vpow.pop %v442
  %v444 = vmul.f32 %v431, 1.442695
  %v445 = vpow.pop %v444
  %v446 = vmul.f32 %v432, 1.442695
  %v447 = vpow.pop %v446
  %v448 = vmul.f32 %v433, 1.442695
  %v449 = vpow.pop %v448
  %v450 = vsub.f32 %v435, 1.0
  %v451 = vsub.f32 %v437, 1.0
  %v452 = vsub.f32 %v439, 1.0
  %v453 = vsub.f32 %v441, 1.0
  %v454 = vsub.f32 %v443, 1.0
  %v455 = vsub.f32 %v445, 1.0
  %v456 = vsub.f32 %v447, 1.0
  %v457 = vsub.f32 %v449, 1.0
  %vm458 = vcmp.gt.f32.partialorder %v396, 0.0
  %vm459 = vcmp.gt.f32.partialorder %v399, 0.0
  %vm460 = vcmp.gt.f32.partialorder %v404, 0.0
  %vm461 = vcmp.gt.f32.partialorder %v407, 0.0
  %vm462 = vcmp.gt.f32.partialorder %v412, 0.0
  %vm463 = vcmp.gt.f32.partialorder %v415, 0.0
  %vm464 = vcmp.gt.f32.partialorder %v420, 0.0
  %vm465 = vcmp.gt.f32.partialorder %v423, 0.0
  %v466 = vsel %vm458, %v396, %v450
  %v467 = vsel %vm459, %v399, %v451
  %v468 = vsel %vm460, %v404, %v452
  %v469 = vsel %vm461, %v407, %v453
  %v470 = vsel %vm462, %v412, %v454
  %v471 = vsel %vm463, %v415, %v455
  %v472 = vsel %vm464, %v420, %v456
  %v473 = vsel %vm465, %v423, %v457
  %v474 = vpack.c.bf16 %v467, %v466
  %v475 = vpack.c.bf16 %v469, %v468
  %v476 = vpack.c.bf16 %v471, %v470
  %v477 = vpack.c.bf16 %v473, %v472
  %v482 = vunpack.c.l.b16 %v474
  %v483 = vunpack.c.h.b16 %v474
  %v484 = vunpack.c.l.b16 %v475
  %v485 = vunpack.c.h.b16 %v475
  %v486 = vunpack.c.l.b16 %v476
  %v487 = vunpack.c.h.b16 %v476
  %v488 = vunpack.c.l.b16 %v477
  %v489 = vunpack.c.h.b16 %v477
  %v490 = vpack.c.b16 %v482, %v482
  %v491 = vpack.c.b16 %v483, %v483
  %v492 = vpack.c.b16 %v484, %v484
  %v493 = vpack.c.b16 %v485, %v485
  %v494 = vpack.c.b16 %v486, %v486
  %v495 = vpack.c.b16 %v487, %v487
  %v496 = vpack.c.b16 %v488, %v488
  %v497 = vpack.c.b16 %v489, %v489
  %vm506 = vcmask 257024
  %507 = vst.msk [vmem:[%s3] sm:$0xf] %vm506, %v490
  %508 = vst.msk [vmem:[%s3 + $0x4] sm:$0xf] %vm506, %v491
  %509 = vst.msk [vmem:[%s3 + $0x8] sm:$0xf] %vm506, %v492
  %510 = vst.msk [vmem:[%s3 + $0xc] sm:$0xf] %vm506, %v493
  %511 = vst.msk [vmem:[%s3 + $0x10] sm:$0xf] %vm506, %v494
  %512 = vst.msk [vmem:[%s3 + $0x14] sm:$0xf] %vm506, %v495
  %513 = vst.msk [vmem:[%s3 + $0x18] sm:$0xf] %vm506, %v496
  %514 = vst.msk [vmem:[%s3 + $0x1c] sm:$0xf] %vm506, %v497
  // Predicated region
  $region14: #{network3_forward.8} parent=0 // pred_check
    _
  $region15: #{network3_forward.8} parent=0 // pred_check_branch
    %516 = sbr.rel (0) target = $region17
  $region16: #{network3_forward.8} parent=0 // pred_region
    _
  $region17: #{network3_forward.8} parent=0 // pred_fallthru
    _
  // Predicated region
  $region18: #{network3_forward.8} parent=0 // pred_check
    _
  $region19: #{network3_forward.8} parent=0 // pred_check_branch
    %518 = sbr.rel (0) target = $region21
  $region20: #{network3_forward.8} parent=0 // pred_region
    _
  $region21: #{network3_forward.8} parent=0 // pred_fallthru
    _

// kernel: network3_forward.9
$region0: #{network3_forward.9}
  #allocation0 [shape = 'u32[]', space=smem, size = 0x4, offset = 0x4, fixed_abs, tag = 'smem constant byte address 0x4 - core index']
  #allocation1 [shape = 'u32[144,128]{1,0:T(1,128)}', space=vmem, size = 0x12000, scoped, tag = 'internal scratch']
  %s0 = inlined_call_operand.vmem [shape: bf16[32,873], index: 0, kind: input, shape index: {}]
  %s1 = inlined_call_operand.vmem [shape: f32[32,1], index: 1, kind: input, shape index: {}]
  %s2 = inlined_call_operand.vmem [shape: bf16[873,32], index: 2, kind: input, shape index: {}]
  %s3 = inlined_call_operand.vmem [shape: bf16[32,32], index: 3, kind: output, shape index: {}]
  %s4 = sld [smem:[#allocation0]]
  $region22: #{network3_forward.9} parent=0
    _
  %s6 = ssub.s32 1, %s4
  %s7 = scalar_select 0, %s6, %s4
  // Predicated region
  $region2: #{network3_forward.9} parent=0 // pred_check
    _
  $region3: #{network3_forward.9} parent=0 // pred_check_branch
    %9 = sbr.rel (0) target = $region5
  $region4: #{network3_forward.9} parent=0 // pred_region
    _
  $region5: #{network3_forward.9} parent=0 // pred_fallthru
    _
  // Predicated region
  $region6: #{network3_forward.9} parent=0 // pred_check
    _
  $region7: #{network3_forward.9} parent=0 // pred_check_branch
    %11 = sbr.rel (0) target = $region9
  $region8: #{network3_forward.9} parent=0 // pred_region
    _
  $region9: #{network3_forward.9} parent=0 // pred_fallthru
    _
  // Predicated region
  $region10: #{network3_forward.9} parent=0 // pred_check
    _
  $region11: #{network3_forward.9} parent=0 // pred_check_branch
    %13 = sbr.rel (0) target = $region13
  $region12: #{network3_forward.9} parent=0 // pred_region
    _
  $region13: #{network3_forward.9} parent=0 // pred_fallthru
    _
  %v15 = vld [vmem:[%s0] sm:$0xff]
  %v16 = vld [vmem:[%s0 + $0x8] sm:$0xff]
  %v17 = vld [vmem:[%s0 + $0x10] sm:$0xff]
  %v18 = vld [vmem:[%s0 + $0x18] sm:$0xf]
  %v19 = vld [vmem:[%s0 + $0x1c] sm:$0xff]
  %v20 = vld [vmem:[%s0 + $0x24] sm:$0xff]
  %v21 = vld [vmem:[%s0 + $0x2c] sm:$0xff]
  %v22 = vld [vmem:[%s0 + $0x34] sm:$0xf]
  %v23 = vld [vmem:[%s0 + $0x38] sm:$0xff]
  %v24 = vld [vmem:[%s0 + $0x40] sm:$0xff]
  %v25 = vld [vmem:[%s0 + $0x48] sm:$0xff]
  %v26 = vld [vmem:[%s0 + $0x50] sm:$0xf]
  %v27 = vld [vmem:[%s0 + $0x54] sm:$0xff]
  %v28 = vld [vmem:[%s0 + $0x5c] sm:$0xff]
  %v29 = vld [vmem:[%s0 + $0x64] sm:$0xff]
  %v30 = vld [vmem:[%s0 + $0x6c] sm:$0xf]
  %v31 = vld [vmem:[%s2] sm:$0xf]
  %v32 = vld [vmem:[%s2 + $0x4] sm:$0xf]
  %v33 = vld [vmem:[%s2 + $0x8] sm:$0xf]
  %v34 = vld [vmem:[%s2 + $0xc] sm:$0xf]
  %v35 = vld [vmem:[%s2 + $0x10] sm:$0xf]
  %v36 = vld [vmem:[%s2 + $0x14] sm:$0xf]
  %v37 = vld [vmem:[%s2 + $0x18] sm:$0xf]
  %v38 = vld [vmem:[%s2 + $0x1c] sm:$0xf]
  %v39 = vld [vmem:[%s2 + $0x20] sm:$0xf]
  %v40 = vld [vmem:[%s2 + $0x24] sm:$0xf]
  %v41 = vld [vmem:[%s2 + $0x28] sm:$0xf]
  %v42 = vld [vmem:[%s2 + $0x2c] sm:$0xf]
  %v43 = vld [vmem:[%s2 + $0x30] sm:$0xf]
  %v44 = vld [vmem:[%s2 + $0x34] sm:$0xf]
  %v45 = vld [vmem:[%s2 + $0x38] sm:$0xf]
  %v46 = vld [vmem:[%s2 + $0x3c] sm:$0xf]
  %v47 = vld [vmem:[%s2 + $0x40] sm:$0xf]
  %v48 = vld [vmem:[%s2 + $0x44] sm:$0xf]
  %v49 = vld [vmem:[%s2 + $0x48] sm:$0xf]
  %v50 = vld [vmem:[%s2 + $0x4c] sm:$0xf]
  %v51 = vld [vmem:[%s2 + $0x50] sm:$0xf]
  %v52 = vld [vmem:[%s2 + $0x54] sm:$0xf]
  %v53 = vld [vmem:[%s2 + $0x58] sm:$0xf]
  %v54 = vld [vmem:[%s2 + $0x5c] sm:$0xf]
  %v55 = vld [vmem:[%s2 + $0x60] sm:$0xf]
  %v56 = vld [vmem:[%s2 + $0x64] sm:$0xf]
  %v57 = vld [vmem:[%s2 + $0x68] sm:$0xf]
  %v58 = vld [vmem:[%s2 + $0x6c] sm:$0xf]
  %v59 = vld [vmem:[%s2 + $0x70] sm:$0xf]
  %v60 = vld [vmem:[%s2 + $0x74] sm:$0xf]
  %v61 = vld [vmem:[%s2 + $0x78] sm:$0xf]
  %v62 = vld [vmem:[%s2 + $0x7c] sm:$0xf]
  %v63 = vld [vmem:[%s2 + $0x80] sm:$0xf]
  %v64 = vld [vmem:[%s2 + $0x84] sm:$0xf]
  %v65 = vld [vmem:[%s2 + $0x88] sm:$0xf]
  %v66 = vld [vmem:[%s2 + $0x8c] sm:$0xf]
  %v67 = vld [vmem:[%s2 + $0x90] sm:$0xf]
  %v68 = vld [vmem:[%s2 + $0x94] sm:$0xf]
  %v69 = vld [vmem:[%s2 + $0x98] sm:$0xf]
  %v70 = vld [vmem:[%s2 + $0x9c] sm:$0xf]
  %v71 = vld [vmem:[%s2 + $0xa0] sm:$0xf]
  %v72 = vld [vmem:[%s2 + $0xa4] sm:$0xf]
  %v73 = vld [vmem:[%s2 + $0xa8] sm:$0xf]
  %v74 = vld [vmem:[%s2 + $0xac] sm:$0xf]
  %v75 = vld [vmem:[%s2 + $0xb0] sm:$0xf]
  %v76 = vld [vmem:[%s2 + $0xb4] sm:$0xf]
  %v77 = vld [vmem:[%s2 + $0xb8] sm:$0xf]
  %v78 = vld [vmem:[%s2 + $0xbc] sm:$0xf]
  %v79 = vld [vmem:[%s2 + $0xc0] sm:$0xf]
  %v80 = vld [vmem:[%s2 + $0xc4] sm:$0xf]
  %v81 = vld [vmem:[%s2 + $0xc8] sm:$0xf]
  %v82 = vld [vmem:[%s2 + $0xcc] sm:$0xf]
  %v83 = vld [vmem:[%s2 + $0xd0] sm:$0xf]
  %v84 = vld [vmem:[%s2 + $0xd4] sm:$0xf]
  %v85 = vld [vmem:[%s2 + $0xd8] sm:$0xf]
  %v86 = vld [vmem:[%s2 + $0xdc] sm:$0xf]
  %v87 = vld [vmem:[%s2 + $0xe0] sm:$0xf]
  %v88 = vld [vmem:[%s2 + $0xe4] sm:$0xf]
  %v89 = vld [vmem:[%s2 + $0xe8] sm:$0xf]
  %v90 = vld [vmem:[%s2 + $0xec] sm:$0xf]
  %v91 = vld [vmem:[%s2 + $0xf0] sm:$0xf]
  %v92 = vld [vmem:[%s2 + $0xf4] sm:$0xf]
  %v93 = vld [vmem:[%s2 + $0xf8] sm:$0xf]
  %v94 = vld [vmem:[%s2 + $0xfc] sm:$0xf]
  %v95 = vld [vmem:[%s2 + $0x100] sm:$0xf]
  %v96 = vld [vmem:[%s2 + $0x104] sm:$0xf]
  %v97 = vld [vmem:[%s2 + $0x108] sm:$0xf]
  %v98 = vld [vmem:[%s2 + $0x10c] sm:$0xf]
  %v99 = vld [vmem:[%s2 + $0x110] sm:$0xf]
  %v100 = vld [vmem:[%s2 + $0x114] sm:$0xf]
  %v101 = vld [vmem:[%s2 + $0x118] sm:$0xf]
  %v102 = vld [vmem:[%s2 + $0x11c] sm:$0xf]
  %v103 = vld [vmem:[%s2 + $0x120] sm:$0xf]
  %v104 = vld [vmem:[%s2 + $0x124] sm:$0xf]
  %v105 = vld [vmem:[%s2 + $0x128] sm:$0xf]
  %v106 = vld [vmem:[%s2 + $0x12c] sm:$0xf]
  %v107 = vld [vmem:[%s2 + $0x130] sm:$0xf]
  %v108 = vld [vmem:[%s2 + $0x134] sm:$0xf]
  %v109 = vld [vmem:[%s2 + $0x138] sm:$0xf]
  %v110 = vld [vmem:[%s2 + $0x13c] sm:$0xf]
  %v111 = vld [vmem:[%s2 + $0x140] sm:$0xf]
  %v112 = vld [vmem:[%s2 + $0x144] sm:$0xf]
  %v113 = vld [vmem:[%s2 + $0x148] sm:$0xf]
  %v114 = vld [vmem:[%s2 + $0x14c] sm:$0xf]
  %v115 = vld [vmem:[%s2 + $0x150] sm:$0xf]
  %v116 = vld [vmem:[%s2 + $0x154] sm:$0xf]
  %v117 = vld [vmem:[%s2 + $0x158] sm:$0xf]
  %v118 = vld [vmem:[%s2 + $0x15c] sm:$0xf]
  %v119 = vld [vmem:[%s2 + $0x160] sm:$0xf]
  %v120 = vld [vmem:[%s2 + $0x164] sm:$0xf]
  %v121 = vld [vmem:[%s2 + $0x168] sm:$0xf]
  %v122 = vld [vmem:[%s2 + $0x16c] sm:$0xf]
  %v123 = vld [vmem:[%s2 + $0x170] sm:$0xf]
  %v124 = vld [vmem:[%s2 + $0x174] sm:$0xf]
  %v125 = vld [vmem:[%s2 + $0x178] sm:$0xf]
  %v126 = vld [vmem:[%s2 + $0x17c] sm:$0xf]
  %v127 = vld [vmem:[%s2 + $0x180] sm:$0xf]
  %v128 = vld [vmem:[%s2 + $0x184] sm:$0xf]
  %v129 = vld [vmem:[%s2 + $0x188] sm:$0xf]
  %v130 = vld [vmem:[%s2 + $0x18c] sm:$0xf]
  %v131 = vld [vmem:[%s2 + $0x190] sm:$0xf]
  %v132 = vld [vmem:[%s2 + $0x194] sm:$0xf]
  %v133 = vld [vmem:[%s2 + $0x198] sm:$0xf]
  %v134 = vld [vmem:[%s2 + $0x19c] sm:$0xf]
  %v135 = vld [vmem:[%s2 + $0x1a0] sm:$0xf]
  %v136 = vld [vmem:[%s2 + $0x1a4] sm:$0xf]
  %v137 = vld [vmem:[%s2 + $0x1a8] sm:$0xf]
  %v138 = vld [vmem:[%s2 + $0x1ac] sm:$0xf]
  %v139 = vld [vmem:[%s2 + $0x1b0] sm:$0xf]
  %v140 = vld [vmem:[%s2 + $0x1b4] sm:$0x1]
  %v141 = vld [vmem:[%s1] sm:$0xff]
  %v142 = vld [vmem:[%s1 + $0x8] sm:$0xff]
  %v143 = vld [vmem:[%s1 + $0x10] sm:$0xff]
  %v144 = vld [vmem:[%s1 + $0x18] sm:$0xff]
  %146 = vset.pattern.permute.xlu0 0
  %147 = vperm.xlu0 %146, %v141
  %v148 = vpop.permute.xlu0 %147
  %151 = vset.pattern.permute.xlu0 0
  %152 = vperm.xlu0 %151, %v142
  %v153 = vpop.permute.xlu0 %152
  %156 = vset.pattern.permute.xlu0 0
  %157 = vperm.xlu0 %156, %v143
  %v158 = vpop.permute.xlu0 %157
  %161 = vset.pattern.permute.xlu0 0
  %162 = vperm.xlu0 %161, %v144
  %v163 = vpop.permute.xlu0 %162
  %v181 = vunpack.c.l.b16 %v15
  %v182 = vunpack.c.h.b16 %v15
  %v183 = vunpack.c.l.b16 %v16
  %v184 = vunpack.c.h.b16 %v16
  %v185 = vunpack.c.l.b16 %v17
  %v186 = vunpack.c.h.b16 %v17
  %v187 = vunpack.c.l.b16 %v18
  %v188 = vunpack.c.l.b16 %v19
  %v189 = vunpack.c.h.b16 %v19
  %v190 = vunpack.c.l.b16 %v20
  %v191 = vunpack.c.h.b16 %v20
  %v192 = vunpack.c.l.b16 %v21
  %v193 = vunpack.c.h.b16 %v21
  %v194 = vunpack.c.l.b16 %v22
  %v195 = vunpack.c.l.b16 %v23
  %v196 = vunpack.c.h.b16 %v23
  %v197 = vunpack.c.l.b16 %v24
  %v198 = vunpack.c.h.b16 %v24
  %v199 = vunpack.c.l.b16 %v25
  %v200 = vunpack.c.h.b16 %v25
  %v201 = vunpack.c.l.b16 %v26
  %v202 = vunpack.c.l.b16 %v27
  %v203 = vunpack.c.h.b16 %v27
  %v204 = vunpack.c.l.b16 %v28
  %v205 = vunpack.c.h.b16 %v28
  %v206 = vunpack.c.l.b16 %v29
  %v207 = vunpack.c.h.b16 %v29
  %v208 = vunpack.c.l.b16 %v30
  %v209 = vpack.c.b16 %v188, %v181
  %v210 = vpack.c.b16 %v189, %v182
  %v211 = vpack.c.b16 %v190, %v183
  %v212 = vpack.c.b16 %v191, %v184
  %v213 = vpack.c.b16 %v192, %v185
  %v214 = vpack.c.b16 %v193, %v186
  %v215 = vpack.c.b16 %v194, %v187
  %v216 = vpack.c.b16 %v202, %v195
  %v217 = vpack.c.b16 %v203, %v196
  %v218 = vpack.c.b16 %v204, %v197
  %v219 = vpack.c.b16 %v205, %v198
  %v220 = vpack.c.b16 %v206, %v199
  %v221 = vpack.c.b16 %v207, %v200
  %v222 = vpack.c.b16 %v208, %v201
  %v345 = vunpack.c.l.b16 %v31
  %v346 = vunpack.c.l.b16 %v32
  %v347 = vunpack.c.l.b16 %v33
  %v348 = vunpack.c.l.b16 %v34
  %v349 = vunpack.c.l.b16 %v35
  %v350 = vunpack.c.l.b16 %v36
  %v351 = vunpack.c.l.b16 %v37
  %v352 = vunpack.c.l.b16 %v38
  %v353 = vunpack.c.l.b16 %v39
  %v354 = vunpack.c.l.b16 %v40
  %v355 = vunpack.c.l.b16 %v41
  %v356 = vunpack.c.l.b16 %v42
  %v357 = vunpack.c.l.b16 %v43
  %v358 = vunpack.c.l.b16 %v44
  %v359 = vunpack.c.l.b16 %v45
  %v360 = vunpack.c.l.b16 %v46
  %v361 = vunpack.c.l.b16 %v47
  %v362 = vunpack.c.l.b16 %v48
  %v363 = vunpack.c.l.b16 %v49
  %v364 = vunpack.c.l.b16 %v50
  %v365 = vunpack.c.l.b16 %v51
  %v366 = vunpack.c.l.b16 %v52
  %v367 = vunpack.c.l.b16 %v53
  %v368 = vunpack.c.l.b16 %v54
  %v369 = vunpack.c.l.b16 %v55
  %v370 = vunpack.c.l.b16 %v56
  %v371 = vunpack.c.l.b16 %v57
  %v372 = vunpack.c.l.b16 %v58
  %v373 = vunpack.c.l.b16 %v59
  %v374 = vunpack.c.l.b16 %v60
  %v375 = vunpack.c.l.b16 %v61
  %v376 = vunpack.c.l.b16 %v62
  %v377 = vunpack.c.l.b16 %v63
  %v378 = vunpack.c.l.b16 %v64
  %v379 = vunpack.c.l.b16 %v65
  %v380 = vunpack.c.l.b16 %v66
  %v381 = vunpack.c.l.b16 %v67
  %v382 = vunpack.c.l.b16 %v68
  %v383 = vunpack.c.l.b16 %v69
  %v384 = vunpack.c.l.b16 %v70
  %v385 = vunpack.c.l.b16 %v71
  %v386 = vunpack.c.l.b16 %v72
  %v387 = vunpack.c.l.b16 %v73
  %v388 = vunpack.c.l.b16 %v74
  %v389 = vunpack.c.l.b16 %v75
  %v390 = vunpack.c.l.b16 %v76
  %v391 = vunpack.c.l.b16 %v77
  %v392 = vunpack.c.l.b16 %v78
  %v393 = vunpack.c.l.b16 %v79
  %v394 = vunpack.c.l.b16 %v80
  %v395 = vunpack.c.l.b16 %v81
  %v396 = vunpack.c.l.b16 %v82
  %v397 = vunpack.c.l.b16 %v83
  %v398 = vunpack.c.l.b16 %v84
  %v399 = vunpack.c.l.b16 %v85
  %v400 = vunpack.c.l.b16 %v86
  %v401 = vunpack.c.l.b16 %v87
  %v402 = vunpack.c.l.b16 %v88
  %v403 = vunpack.c.l.b16 %v89
  %v404 = vunpack.c.l.b16 %v90
  %v405 = vunpack.c.l.b16 %v91
  %v406 = vunpack.c.l.b16 %v92
  %v407 = vunpack.c.l.b16 %v93
  %v408 = vunpack.c.l.b16 %v94
  %v409 = vunpack.c.l.b16 %v95
  %v410 = vunpack.c.l.b16 %v96
  %v411 = vunpack.c.l.b16 %v97
  %v412 = vunpack.c.l.b16 %v98
  %v413 = vunpack.c.l.b16 %v99
  %v414 = vunpack.c.l.b16 %v100
  %v415 = vunpack.c.l.b16 %v101
  %v416 = vunpack.c.l.b16 %v102
  %v417 = vunpack.c.l.b16 %v103
  %v418 = vunpack.c.l.b16 %v104
  %v419 = vunpack.c.l.b16 %v105
  %v420 = vunpack.c.l.b16 %v106
  %v421 = vunpack.c.l.b16 %v107
  %v422 = vunpack.c.l.b16 %v108
  %v423 = vunpack.c.l.b16 %v109
  %v424 = vunpack.c.l.b16 %v110
  %v425 = vunpack.c.l.b16 %v111
  %v426 = vunpack.c.l.b16 %v112
  %v427 = vunpack.c.l.b16 %v113
  %v428 = vunpack.c.l.b16 %v114
  %v429 = vunpack.c.l.b16 %v115
  %v430 = vunpack.c.l.b16 %v116
  %v431 = vunpack.c.l.b16 %v117
  %v432 = vunpack.c.l.b16 %v118
  %v433 = vunpack.c.l.b16 %v119
  %v434 = vunpack.c.l.b16 %v120
  %v435 = vunpack.c.l.b16 %v121
  %v436 = vunpack.c.l.b16 %v122
  %v437 = vunpack.c.l.b16 %v123
  %v438 = vunpack.c.l.b16 %v124
  %v439 = vunpack.c.l.b16 %v125
  %v440 = vunpack.c.l.b16 %v126
  %v441 = vunpack.c.l.b16 %v127
  %v442 = vunpack.c.l.b16 %v128
  %v443 = vunpack.c.l.b16 %v129
  %v444 = vunpack.c.l.b16 %v130
  %v445 = vunpack.c.l.b16 %v131
  %v446 = vunpack.c.l.b16 %v132
  %v447 = vunpack.c.l.b16 %v133
  %v448 = vunpack.c.l.b16 %v134
  %v449 = vunpack.c.l.b16 %v135
  %v450 = vunpack.c.l.b16 %v136
  %v451 = vunpack.c.l.b16 %v137
  %v452 = vunpack.c.l.b16 %v138
  %v453 = vunpack.c.l.b16 %v139
  %v454 = vunpack.c.l.b16 %v140
  %v455 = vpack.c.b16 %v346, %v345
  %v456 = vpack.c.b16 %v348, %v347
  %v457 = vpack.c.b16 %v350, %v349
  %v458 = vpack.c.b16 %v352, %v351
  %v459 = vpack.c.b16 %v354, %v353
  %v460 = vpack.c.b16 %v356, %v355
  %v461 = vpack.c.b16 %v358, %v357
  %v462 = vpack.c.b16 %v360, %v359
  %v463 = vpack.c.b16 %v362, %v361
  %v464 = vpack.c.b16 %v364, %v363
  %v465 = vpack.c.b16 %v366, %v365
  %v466 = vpack.c.b16 %v368, %v367
  %v467 = vpack.c.b16 %v370, %v369
  %v468 = vpack.c.b16 %v372, %v371
  %v469 = vpack.c.b16 %v374, %v373
  %v470 = vpack.c.b16 %v376, %v375
  %v471 = vpack.c.b16 %v378, %v377
  %v472 = vpack.c.b16 %v380, %v379
  %v473 = vpack.c.b16 %v382, %v381
  %v474 = vpack.c.b16 %v384, %v383
  %v475 = vpack.c.b16 %v386, %v385
  %v476 = vpack.c.b16 %v388, %v387
  %v477 = vpack.c.b16 %v390, %v389
  %v478 = vpack.c.b16 %v392, %v391
  %v479 = vpack.c.b16 %v394, %v393
  %v480 = vpack.c.b16 %v396, %v395
  %v481 = vpack.c.b16 %v398, %v397
  %v482 = vpack.c.b16 %v400, %v399
  %v483 = vpack.c.b16 %v402, %v401
  %v484 = vpack.c.b16 %v404, %v403
  %v485 = vpack.c.b16 %v406, %v405
  %v486 = vpack.c.b16 %v408, %v407
  %v487 = vpack.c.b16 %v410, %v409
  %v488 = vpack.c.b16 %v412, %v411
  %v489 = vpack.c.b16 %v414, %v413
  %v490 = vpack.c.b16 %v416, %v415
  %v491 = vpack.c.b16 %v418, %v417
  %v492 = vpack.c.b16 %v420, %v419
  %v493 = vpack.c.b16 %v422, %v421
  %v494 = vpack.c.b16 %v424, %v423
  %v495 = vpack.c.b16 %v426, %v425
  %v496 = vpack.c.b16 %v428, %v427
  %v497 = vpack.c.b16 %v430, %v429
  %v498 = vpack.c.b16 %v432, %v431
  %v499 = vpack.c.b16 %v434, %v433
  %v500 = vpack.c.b16 %v436, %v435
  %v501 = vpack.c.b16 %v438, %v437
  %v502 = vpack.c.b16 %v440, %v439
  %v503 = vpack.c.b16 %v442, %v441
  %v504 = vpack.c.b16 %v444, %v443
  %v505 = vpack.c.b16 %v446, %v445
  %v506 = vpack.c.b16 %v448, %v447
  %v507 = vpack.c.b16 %v450, %v449
  %v508 = vpack.c.b16 %v452, %v451
  %v509 = vpack.c.b16 %v454, %v453
  %vm564 = vcmask 859136
  %v566 = vsel %vm564, %v215, 0
  %v569 = vsel %vm564, %v222, 0
  %vm571 = vcmask 1043456
  %vm572 = vcmask 1044480
  %v573 = vsel %vm571, 4294967295, 65535
  %v574 = vsel %vm572, %v573, 0
  %v576 = vand.u32 %v509, %v574
  %578 = vmatprep.subr.bf16.mxu0 0
  %579 = vmatpush1.bf16.msra.mxu0 %v455
  %580 = vmatprep.subr.bf16.mxu0 0
  %581 = vmatpush1.bf16.msra.mxu0 %v456
  %582 = vmatprep.subr.bf16.mxu0 0
  %583 = vmatpush1.bf16.msra.mxu0 %v457
  %584 = vmatprep.subr.bf16.mxu0 0
  %585 = vmatpush1.bf16.msra.mxu0 %v458
  %586 = vmatprep.subr.bf16.mxu0 0
  %587 = vmatpush1.bf16.msra.mxu0 %v459
  %588 = vmatprep.subr.bf16.mxu0 0
  %589 = vmatpush1.bf16.msra.mxu0 %v460
  %590 = vmatprep.subr.bf16.mxu0 0
  %591 = vmatpush1.bf16.msra.mxu0 %v461
  %592 = vmatprep.subr.bf16.mxu0 0
  %593 = vmatpush1.bf16.msra.mxu0 %v462
  %594 = vmatprep.subr.bf16.mxu0 0
  %595 = vmatpush1.bf16.msra.mxu0 %v463
  %596 = vmatprep.subr.bf16.mxu0 0
  %597 = vmatpush1.bf16.msra.mxu0 %v464
  %598 = vmatprep.subr.bf16.mxu0 0
  %599 = vmatpush1.bf16.msra.mxu0 %v465
  %600 = vmatprep.subr.bf16.mxu0 0
  %601 = vmatpush1.bf16.msra.mxu0 %v466
  %602 = vmatprep.subr.bf16.mxu0 0
  %603 = vmatpush1.bf16.msra.mxu0 %v467
  %604 = vmatprep.subr.bf16.mxu0 0
  %605 = vmatpush1.bf16.msra.mxu0 %v468
  %606 = vmatprep.subr.bf16.mxu0 0
  %607 = vmatpush1.bf16.msra.mxu0 %v469
  %608 = vmatprep.subr.bf16.mxu0 0
  %609 = vmatpush1.bf16.msra.mxu0 %v470
  %610 = vmatprep.mubr.bf16.mxu0 %v210
  %611 = vmatmul.mubr.bf16.gmra.mrb[0].mxu0 %v209
  %v612 = vpop.f32.mrb[0].mxu0
  %v613 = vadd.f32 %v148, %v612
  %v614 = vpop.f32.mrb[0].mxu0
  %v615 = vpop.f32.mrb[0].mxu0
  %v616 = vadd.f32 %v153, %v615
  %v617 = vpop.f32.mrb[0].mxu0
  %618 = vmatprep.mubr.bf16.mxu0 %v217
  %619 = vmatmul.mubr.bf16.gmra.mrb[0].mxu0 %v216
  %v620 = vpop.f32.mrb[0].mxu0
  %v621 = vadd.f32 %v158, %v620
  %v622 = vpop.f32.mrb[0].mxu0
  %v623 = vpop.f32.mrb[0].mxu0
  %v624 = vadd.f32 %v163, %v623
  %v625 = vpop.f32.mrb[0].mxu0
  %626 = vdwg.mxu0
  %627 = vmatprep.subr.bf16.mxu0 0
  %628 = vmatpush1.bf16.msra.mxu0 %v471
  %629 = vmatprep.subr.bf16.mxu0 0
  %630 = vmatpush1.bf16.msra.mxu0 %v472
  %631 = vmatprep.subr.bf16.mxu0 0
  %632 = vmatpush1.bf16.msra.mxu0 %v473
  %633 = vmatprep.subr.bf16.mxu0 0
  %634 = vmatpush1.bf16.msra.mxu0 %v474
  %635 = vmatprep.subr.bf16.mxu0 0
  %636 = vmatpush1.bf16.msra.mxu0 %v475
  %637 = vmatprep.subr.bf16.mxu0 0
  %638 = vmatpush1.bf16.msra.mxu0 %v476
  %639 = vmatprep.subr.bf16.mxu0 0
  %640 = vmatpush1.bf16.msra.mxu0 %v477
  %641 = vmatprep.subr.bf16.mxu0 0
  %642 = vmatpush1.bf16.msra.mxu0 %v478
  %643 = vmatprep.subr.bf16.mxu0 0
  %644 = vmatpush1.bf16.msra.mxu0 %v479
  %645 = vmatprep.subr.bf16.mxu0 0
  %646 = vmatpush1.bf16.msra.mxu0 %v480
  %647 = vmatprep.subr.bf16.mxu0 0
  %648 = vmatpush1.bf16.msra.mxu0 %v481
  %649 = vmatprep.subr.bf16.mxu0 0
  %650 = vmatpush1.bf16.msra.mxu0 %v482
  %651 = vmatprep.subr.bf16.mxu0 0
  %652 = vmatpush1.bf16.msra.mxu0 %v483
  %653 = vmatprep.subr.bf16.mxu0 0
  %654 = vmatpush1.bf16.msra.mxu0 %v484
  %655 = vmatprep.subr.bf16.mxu0 0
  %656 = vmatpush1.bf16.msra.mxu0 %v485
  %657 = vmatprep.subr.bf16.mxu0 0
  %658 = vmatpush1.bf16.msra.mxu0 %v486
  %659 = vmatprep.mubr.bf16.mxu0 %v212
  %660 = vmatmul.mubr.bf16.gmra.mrb[0].mxu0 %v211
  %v661 = vpop.f32.mrb[0].mxu0
  %v662 = vadd.f32 %v613, %v661
  %v663 = vpop.f32.mrb[0].mxu0
  %v664 = vpop.f32.mrb[0].mxu0
  %v665 = vadd.f32 %v616, %v664
  %v666 = vpop.f32.mrb[0].mxu0
  %667 = vmatprep.mubr.bf16.mxu0 %v219
  %668 = vmatmul.mubr.bf16.gmra.mrb[0].mxu0 %v218
  %v669 = vpop.f32.mrb[0].mxu0
  %v670 = vadd.f32 %v621, %v669
  %v671 = vpop.f32.mrb[0].mxu0
  %v672 = vpop.f32.mrb[0].mxu0
  %v673 = vadd.f32 %v624, %v672
  %v674 = vpop.f32.mrb[0].mxu0
  %675 = vdwg.mxu0
  %676 = vmatprep.subr.bf16.mxu0 0
  %677 = vmatpush1.bf16.msra.mxu0 %v487
  %678 = vmatprep.subr.bf16.mxu0 0
  %679 = vmatpush1.bf16.msra.mxu0 %v488
  %680 = vmatprep.subr.bf16.mxu0 0
  %681 = vmatpush1.bf16.msra.mxu0 %v489
  %682 = vmatprep.subr.bf16.mxu0 0
  %683 = vmatpush1.bf16.msra.mxu0 %v490
  %684 = vmatprep.subr.bf16.mxu0 0
  %685 = vmatpush1.bf16.msra.mxu0 %v491
  %686 = vmatprep.subr.bf16.mxu0 0
  %687 = vmatpush1.bf16.msra.mxu0 %v492
  %688 = vmatprep.subr.bf16.mxu0 0
  %689 = vmatpush1.bf16.msra.mxu0 %v493
  %690 = vmatprep.subr.bf16.mxu0 0
  %691 = vmatpush1.bf16.msra.mxu0 %v494
  %692 = vmatprep.subr.bf16.mxu0 0
  %693 = vmatpush1.bf16.msra.mxu0 %v495
  %694 = vmatprep.subr.bf16.mxu0 0
  %695 = vmatpush1.bf16.msra.mxu0 %v496
  %696 = vmatprep.subr.bf16.mxu0 0
  %697 = vmatpush1.bf16.msra.mxu0 %v497
  %698 = vmatprep.subr.bf16.mxu0 0
  %699 = vmatpush1.bf16.msra.mxu0 %v498
  %700 = vmatprep.subr.bf16.mxu0 0
  %701 = vmatpush1.bf16.msra.mxu0 %v499
  %702 = vmatprep.subr.bf16.mxu0 0
  %703 = vmatpush1.bf16.msra.mxu0 %v500
  %704 = vmatprep.subr.bf16.mxu0 0
  %705 = vmatpush1.bf16.msra.mxu0 %v501
  %706 = vmatprep.subr.bf16.mxu0 0
  %707 = vmatpush1.bf16.msra.mxu0 %v502
  %708 = vmatprep.mubr.bf16.mxu0 %v214
  %709 = vmatmul.mubr.bf16.gmra.mrb[0].mxu0 %v213
  %v710 = vpop.f32.mrb[0].mxu0
  %v711 = vadd.f32 %v662, %v710
  %v712 = vpop.f32.mrb[0].mxu0
  %v713 = vpop.f32.mrb[0].mxu0
  %v714 = vadd.f32 %v665, %v713
  %v715 = vpop.f32.mrb[0].mxu0
  %716 = vmatprep.mubr.bf16.mxu0 %v221
  %717 = vmatmul.mubr.bf16.gmra.mrb[0].mxu0 %v220
  %v718 = vpop.f32.mrb[0].mxu0
  %v719 = vadd.f32 %v670, %v718
  %v720 = vpop.f32.mrb[0].mxu0
  %v721 = vpop.f32.mrb[0].mxu0
  %v722 = vadd.f32 %v673, %v721
  %v723 = vpop.f32.mrb[0].mxu0
  %724 = vdwg.mxu0
  %725 = vmatprep.subr.bf16.mxu0 0
  %726 = vmatpush1.bf16.msra.mxu0 %v503
  %727 = vmatprep.subr.bf16.mxu0 0
  %728 = vmatpush1.bf16.msra.mxu0 %v504
  %729 = vmatprep.subr.bf16.mxu0 0
  %730 = vmatpush1.bf16.msra.mxu0 %v505
  %731 = vmatprep.subr.bf16.mxu0 0
  %732 = vmatpush1.bf16.msra.mxu0 %v506
  %733 = vmatprep.subr.bf16.mxu0 0
  %734 = vmatpush1.bf16.msra.mxu0 %v507
  %735 = vmatprep.subr.bf16.mxu0 0
  %736 = vmatpush1.bf16.msra.mxu0 %v508
  %737 = vmatprep.subr.bf16.mxu0 0
  %738 = vmatpush1.bf16.msra.mxu0 %v576
  %739 = vmatprep.subr.bf16.mxu0 0
  %740 = vmatpush1.bf16.msra.mxu0 0
  %741 = vmatprep.subr.bf16.mxu0 0
  %742 = vmatpush1.bf16.msra.mxu0 0
  %743 = vmatprep.subr.bf16.mxu0 0
  %744 = vmatpush1.bf16.msra.mxu0 0
  %745 = vmatprep.subr.bf16.mxu0 0
  %746 = vmatpush1.bf16.msra.mxu0 0
  %747 = vmatprep.subr.bf16.mxu0 0
  %748 = vmatpush1.bf16.msra.mxu0 0
  %749 = vmatprep.subr.bf16.mxu0 0
  %750 = vmatpush1.bf16.msra.mxu0 0
  %751 = vmatprep.subr.bf16.mxu0 0
  %752 = vmatpush1.bf16.msra.mxu0 0
  %753 = vmatprep.subr.bf16.mxu0 0
  %754 = vmatpush1.bf16.msra.mxu0 0
  %755 = vmatprep.subr.bf16.mxu0 0
  %756 = vmatpush1.bf16.msra.mxu0 0
  %757 = vmatprep.mubr.bf16.mxu0 0
  %758 = vmatmul.mubr.bf16.gmra.mrb[0].mxu0 %v566
  %v759 = vpop.f32.mrb[0].mxu0
  %v760 = vadd.f32 %v711, %v759
  %v761 = vpop.f32.mrb[0].mxu0
  %v762 = vpop.f32.mrb[0].mxu0
  %v763 = vadd.f32 %v714, %v762
  %v764 = vpop.f32.mrb[0].mxu0
  %765 = vmatprep.mubr.bf16.mxu0 0
  %766 = vmatmul.mubr.bf16.gmra.mrb[0].mxu0 %v569
  %v767 = vpop.f32.mrb[0].mxu0
  %v768 = vadd.f32 %v719, %v767
  %v769 = vpop.f32.mrb[0].mxu0
  %v770 = vpop.f32.mrb[0].mxu0
  %v771 = vadd.f32 %v722, %v770
  %v772 = vpop.f32.mrb[0].mxu0
  %773 = vdwg.mxu0
  %v774 = vmin.f32 %v760, 0.0
  %v775 = vmin.f32 %v763, 0.0
  %v776 = vmin.f32 %v768, 0.0
  %v777 = vmin.f32 %v771, 0.0
  %v778 = vmul.f32 %v774, 1.442695
  %v779 = vpow.pop %v778
  %v780 = vmul.f32 %v775, 1.442695
  %v781 = vpow.pop %v780
  %v782 = vmul.f32 %v776, 1.442695
  %v783 = vpow.pop %v782
  %v784 = vmul.f32 %v777, 1.442695
  %v785 = vpow.pop %v784
  %v786 = vsub.f32 %v779, 1.0
  %v787 = vsub.f32 %v781, 1.0
  %v788 = vsub.f32 %v783, 1.0
  %v789 = vsub.f32 %v785, 1.0
  %vm790 = vcmp.gt.f32.partialorder %v760, 0.0
  %vm791 = vcmp.gt.f32.partialorder %v763, 0.0
  %vm792 = vcmp.gt.f32.partialorder %v768, 0.0
  %vm793 = vcmp.gt.f32.partialorder %v771, 0.0
  %v794 = vsel %vm790, %v760, %v786
  %v795 = vsel %vm791, %v763, %v787
  %v796 = vsel %vm792, %v768, %v788
  %v797 = vsel %vm793, %v771, %v789
  %v798 = vpack.c.bf16 %v795, %v794
  %v799 = vpack.c.bf16 %v797, %v796
  %v802 = vunpack.c.l.b16 %v798
  %v803 = vunpack.c.h.b16 %v798
  %v804 = vunpack.c.l.b16 %v799
  %v805 = vunpack.c.h.b16 %v799
  %v806 = vpack.c.b16 %v802, %v802
  %v807 = vpack.c.b16 %v803, %v803
  %v808 = vpack.c.b16 %v804, %v804
  %v809 = vpack.c.b16 %v805, %v805
  %vm814 = vcmask 257024
  %815 = vst.msk [vmem:[%s3] sm:$0xf] %vm814, %v806
  %816 = vst.msk [vmem:[%s3 + $0x4] sm:$0xf] %vm814, %v807
  %817 = vst.msk [vmem:[%s3 + $0x8] sm:$0xf] %vm814, %v808
  %818 = vst.msk [vmem:[%s3 + $0xc] sm:$0xf] %vm814, %v809
  // Predicated region
  $region14: #{network3_forward.9} parent=0 // pred_check
    _
  $region15: #{network3_forward.9} parent=0 // pred_check_branch
    %820 = sbr.rel (0) target = $region17
  $region16: #{network3_forward.9} parent=0 // pred_region
    _
  $region17: #{network3_forward.9} parent=0 // pred_fallthru
    _
  // Predicated region
  $region18: #{network3_forward.9} parent=0 // pred_check
    _
  $region19: #{network3_forward.9} parent=0 // pred_check_branch
    %822 = sbr.rel (0) target = $region21
  $region20: #{network3_forward.9} parent=0 // pred_region
    _
  $region21: #{network3_forward.9} parent=0 // pred_fallthru
    _

// kernel: network3_forward.10
$region0: #{network3_forward.10}
  #allocation0 [shape = 'u32[]', space=smem, size = 0x4, offset = 0x4, fixed_abs, tag = 'smem constant byte address 0x4 - core index']
  #allocation1 [shape = 'u32[144,128]{1,0:T(1,128)}', space=vmem, size = 0x12000, scoped, tag = 'internal scratch']
  %s0 = inlined_call_operand.vmem [shape: bf16[16,441], index: 0, kind: input, shape index: {}]
  %s1 = inlined_call_operand.vmem [shape: f32[16,1], index: 1, kind: input, shape index: {}]
  %s2 = inlined_call_operand.vmem [shape: bf16[441,128], index: 2, kind: input, shape index: {}]
  %s3 = inlined_call_operand.vmem [shape: bf16[16,128], index: 3, kind: output, shape index: {}]
  %s4 = sld [smem:[#allocation0]]
  $region22: #{network3_forward.10} parent=0
    _
  %s6 = ssub.s32 1, %s4
  %s7 = scalar_select 0, %s6, %s4
  // Predicated region
  $region2: #{network3_forward.10} parent=0 // pred_check
    _
  $region3: #{network3_forward.10} parent=0 // pred_check_branch
    %9 = sbr.rel (0) target = $region5
  $region4: #{network3_forward.10} parent=0 // pred_region
    _
  $region5: #{network3_forward.10} parent=0 // pred_fallthru
    _
  // Predicated region
  $region6: #{network3_forward.10} parent=0 // pred_check
    _
  $region7: #{network3_forward.10} parent=0 // pred_check_branch
    %11 = sbr.rel (0) target = $region9
  $region8: #{network3_forward.10} parent=0 // pred_region
    _
  $region9: #{network3_forward.10} parent=0 // pred_fallthru
    _
  // Predicated region
  $region10: #{network3_forward.10} parent=0 // pred_check
    _
  $region11: #{network3_forward.10} parent=0 // pred_check_branch
    %13 = sbr.rel (0) target = $region13
  $region12: #{network3_forward.10} parent=0 // pred_region
    _
  $region13: #{network3_forward.10} parent=0 // pred_fallthru
    _
  %v15 = vld [vmem:[%s0] sm:$0xff]
  %v16 = vld [vmem:[%s0 + $0x8] sm:$0xff]
  %v17 = vld [vmem:[%s0 + $0x10] sm:$0xff]
  %v18 = vld [vmem:[%s0 + $0x18] sm:$0xff]
  %v19 = vld [vmem:[%s2] sm:$0xf]
  %v20 = vld [vmem:[%s2 + $0x4] sm:$0xf]
  %v21 = vld [vmem:[%s2 + $0x8] sm:$0xf]
  %v22 = vld [vmem:[%s2 + $0xc] sm:$0xf]
  %v23 = vld [vmem:[%s2 + $0x10] sm:$0xf]
  %v24 = vld [vmem:[%s2 + $0x14] sm:$0xf]
  %v25 = vld [vmem:[%s2 + $0x18] sm:$0xf]
  %v26 = vld [vmem:[%s2 + $0x1c] sm:$0xf]
  %v27 = vld [vmem:[%s2 + $0x20] sm:$0xf]
  %v28 = vld [vmem:[%s2 + $0x24] sm:$0xf]
  %v29 = vld [vmem:[%s2 + $0x28] sm:$0xf]
  %v30 = vld [vmem:[%s2 + $0x2c] sm:$0xf]
  %v31 = vld [vmem:[%s2 + $0x30] sm:$0xf]
  %v32 = vld [vmem:[%s2 + $0x34] sm:$0xf]
  %v33 = vld [vmem:[%s2 + $0x38] sm:$0xf]
  %v34 = vld [vmem:[%s2 + $0x3c] sm:$0xf]
  %v35 = vld [vmem:[%s2 + $0x40] sm:$0xf]
  %v36 = vld [vmem:[%s2 + $0x44] sm:$0xf]
  %v37 = vld [vmem:[%s2 + $0x48] sm:$0xf]
  %v38 = vld [vmem:[%s2 + $0x4c] sm:$0xf]
  %v39 = vld [vmem:[%s2 + $0x50] sm:$0xf]
  %v40 = vld [vmem:[%s2 + $0x54] sm:$0xf]
  %v41 = vld [vmem:[%s2 + $0x58] sm:$0xf]
  %v42 = vld [vmem:[%s2 + $0x5c] sm:$0xf]
  %v43 = vld [vmem:[%s2 + $0x60] sm:$0xf]
  %v44 = vld [vmem:[%s2 + $0x64] sm:$0xf]
  %v45 = vld [vmem:[%s2 + $0x68] sm:$0xf]
  %v46 = vld [vmem:[%s2 + $0x6c] sm:$0xf]
  %v47 = vld [vmem:[%s2 + $0x70] sm:$0xf]
  %v48 = vld [vmem:[%s2 + $0x74] sm:$0xf]
  %v49 = vld [vmem:[%s2 + $0x78] sm:$0xf]
  %v50 = vld [vmem:[%s2 + $0x7c] sm:$0xf]
  %v51 = vld [vmem:[%s2 + $0x80] sm:$0xf]
  %v52 = vld [vmem:[%s2 + $0x84] sm:$0xf]
  %v53 = vld [vmem:[%s2 + $0x88] sm:$0xf]
  %v54 = vld [vmem:[%s2 + $0x8c] sm:$0xf]
  %v55 = vld [vmem:[%s2 + $0x90] sm:$0xf]
  %v56 = vld [vmem:[%s2 + $0x94] sm:$0xf]
  %v57 = vld [vmem:[%s2 + $0x98] sm:$0xf]
  %v58 = vld [vmem:[%s2 + $0x9c] sm:$0xf]
  %v59 = vld [vmem:[%s2 + $0xa0] sm:$0xf]
  %v60 = vld [vmem:[%s2 + $0xa4] sm:$0xf]
  %v61 = vld [vmem:[%s2 + $0xa8] sm:$0xf]
  %v62 = vld [vmem:[%s2 + $0xac] sm:$0xf]
  %v63 = vld [vmem:[%s2 + $0xb0] sm:$0xf]
  %v64 = vld [vmem:[%s2 + $0xb4] sm:$0xf]
  %v65 = vld [vmem:[%s2 + $0xb8] sm:$0xf]
  %v66 = vld [vmem:[%s2 + $0xbc] sm:$0xf]
  %v67 = vld [vmem:[%s2 + $0xc0] sm:$0xf]
  %v68 = vld [vmem:[%s2 + $0xc4] sm:$0xf]
  %v69 = vld [vmem:[%s2 + $0xc8] sm:$0xf]
  %v70 = vld [vmem:[%s2 + $0xcc] sm:$0xf]
  %v71 = vld [vmem:[%s2 + $0xd0] sm:$0xf]
  %v72 = vld [vmem:[%s2 + $0xd4] sm:$0xf]
  %v73 = vld [vmem:[%s2 + $0xd8] sm:$0xf]
  %v74 = vld [vmem:[%s2 + $0xdc] sm:$0x1]
  %v75 = vld [vmem:[%s1] sm:$0xff]
  %v76 = vld [vmem:[%s1 + $0x8] sm:$0xff]
  %78 = vset.pattern.permute.xlu0 0
  %79 = vperm.xlu0 %78, %v75
  %v80 = vpop.permute.xlu0 %79
  %83 = vset.pattern.permute.xlu0 0
  %84 = vperm.xlu0 %83, %v76
  %v85 = vpop.permute.xlu0 %84
  %v91 = vunpack.c.l.b16 %v15
  %v92 = vunpack.c.h.b16 %v15
  %v93 = vunpack.c.l.b16 %v16
  %v94 = vunpack.c.h.b16 %v16
  %v95 = vunpack.c.l.b16 %v17
  %v96 = vunpack.c.h.b16 %v17
  %v97 = vunpack.c.l.b16 %v18
  %v98 = vunpack.c.h.b16 %v18
  %v99 = vpack.c.b16 %v95, %v91
  %v100 = vpack.c.b16 %v96, %v92
  %v101 = vpack.c.b16 %v97, %v93
  %v102 = vpack.c.b16 %v98, %v94
  %v162 = vunpack.c.l.b16 %v19
  %v163 = vunpack.c.l.b16 %v20
  %v164 = vunpack.c.l.b16 %v21
  %v165 = vunpack.c.l.b16 %v22
  %v166 = vunpack.c.l.b16 %v23
  %v167 = vunpack.c.l.b16 %v24
  %v168 = vunpack.c.l.b16 %v25
  %v169 = vunpack.c.l.b16 %v26
  %v170 = vunpack.c.l.b16 %v27
  %v171 = vunpack.c.l.b16 %v28
  %v172 = vunpack.c.l.b16 %v29
  %v173 = vunpack.c.l.b16 %v30
  %v174 = vunpack.c.l.b16 %v31
  %v175 = vunpack.c.l.b16 %v32
  %v176 = vunpack.c.l.b16 %v33
  %v177 = vunpack.c.l.b16 %v34
  %v178 = vunpack.c.l.b16 %v35
  %v179 = vunpack.c.l.b16 %v36
  %v180 = vunpack.c.l.b16 %v37
  %v181 = vunpack.c.l.b16 %v38
  %v182 = vunpack.c.l.b16 %v39
  %v183 = vunpack.c.l.b16 %v40
  %v184 = vunpack.c.l.b16 %v41
  %v185 = vunpack.c.l.b16 %v42
  %v186 = vunpack.c.l.b16 %v43
  %v187 = vunpack.c.l.b16 %v44
  %v188 = vunpack.c.l.b16 %v45
  %v189 = vunpack.c.l.b16 %v46
  %v190 = vunpack.c.l.b16 %v47
  %v191 = vunpack.c.l.b16 %v48
  %v192 = vunpack.c.l.b16 %v49
  %v193 = vunpack.c.l.b16 %v50
  %v194 = vunpack.c.l.b16 %v51
  %v195 = vunpack.c.l.b16 %v52
  %v196 = vunpack.c.l.b16 %v53
  %v197 = vunpack.c.l.b16 %v54
  %v198 = vunpack.c.l.b16 %v55
  %v199 = vunpack.c.l.b16 %v56
  %v200 = vunpack.c.l.b16 %v57
  %v201 = vunpack.c.l.b16 %v58
  %v202 = vunpack.c.l.b16 %v59
  %v203 = vunpack.c.l.b16 %v60
  %v204 = vunpack.c.l.b16 %v61
  %v205 = vunpack.c.l.b16 %v62
  %v206 = vunpack.c.l.b16 %v63
  %v207 = vunpack.c.l.b16 %v64
  %v208 = vunpack.c.l.b16 %v65
  %v209 = vunpack.c.l.b16 %v66
  %v210 = vunpack.c.l.b16 %v67
  %v211 = vunpack.c.l.b16 %v68
  %v212 = vunpack.c.l.b16 %v69
  %v213 = vunpack.c.l.b16 %v70
  %v214 = vunpack.c.l.b16 %v71
  %v215 = vunpack.c.l.b16 %v72
  %v216 = vunpack.c.l.b16 %v73
  %v217 = vunpack.c.l.b16 %v74
  %v218 = vpack.c.b16 %v163, %v162
  %v219 = vpack.c.b16 %v165, %v164
  %v220 = vpack.c.b16 %v167, %v166
  %v221 = vpack.c.b16 %v169, %v168
  %v222 = vpack.c.b16 %v171, %v170
  %v223 = vpack.c.b16 %v173, %v172
  %v224 = vpack.c.b16 %v175, %v174
  %v225 = vpack.c.b16 %v177, %v176
  %v226 = vpack.c.b16 %v179, %v178
  %v227 = vpack.c.b16 %v181, %v180
  %v228 = vpack.c.b16 %v183, %v182
  %v229 = vpack.c.b16 %v185, %v184
  %v230 = vpack.c.b16 %v187, %v186
  %v231 = vpack.c.b16 %v189, %v188
  %v232 = vpack.c.b16 %v191, %v190
  %v233 = vpack.c.b16 %v193, %v192
  %v234 = vpack.c.b16 %v195, %v194
  %v235 = vpack.c.b16 %v197, %v196
  %v236 = vpack.c.b16 %v199, %v198
  %v237 = vpack.c.b16 %v201, %v200
  %v238 = vpack.c.b16 %v203, %v202
  %v239 = vpack.c.b16 %v205, %v204
  %v240 = vpack.c.b16 %v207, %v206
  %v241 = vpack.c.b16 %v209, %v208
  %v242 = vpack.c.b16 %v211, %v210
  %v243 = vpack.c.b16 %v213, %v212
  %v244 = vpack.c.b16 %v215, %v214
  %v245 = vpack.c.b16 %v217, %v216
  %vm273 = vcmask 465920
  %v275 = vsel %vm273, %v102, 0
  %vm277 = vcmask 1043456
  %vm278 = vcmask 1044480
  %v279 = vsel %vm277, 4294967295, 65535
  %v280 = vsel %vm278, %v279, 0
  %v282 = vand.u32 %v245, %v280
  %284 = vmatprep.subr.bf16.mxu0 0
  %285 = vmatpush1.bf16.msra.mxu0 %v218
  %286 = vmatprep.subr.bf16.mxu0 0
  %287 = vmatpush1.bf16.msra.mxu0 %v219
  %288 = vmatprep.subr.bf16.mxu0 0
  %289 = vmatpush1.bf16.msra.mxu0 %v220
  %290 = vmatprep.subr.bf16.mxu0 0
  %291 = vmatpush1.bf16.msra.mxu0 %v221
  %292 = vmatprep.subr.bf16.mxu0 0
  %293 = vmatpush1.bf16.msra.mxu0 %v222
  %294 = vmatprep.subr.bf16.mxu0 0
  %295 = vmatpush1.bf16.msra.mxu0 %v223
  %296 = vmatprep.subr.bf16.mxu0 0
  %297 = vmatpush1.bf16.msra.mxu0 %v224
  %298 = vmatprep.subr.bf16.mxu0 0
  %299 = vmatpush1.bf16.msra.mxu0 %v225
  %300 = vmatprep.subr.bf16.mxu0 0
  %301 = vmatpush1.bf16.msra.mxu0 %v226
  %302 = vmatprep.subr.bf16.mxu0 0
  %303 = vmatpush1.bf16.msra.mxu0 %v227
  %304 = vmatprep.subr.bf16.mxu0 0
  %305 = vmatpush1.bf16.msra.mxu0 %v228
  %306 = vmatprep.subr.bf16.mxu0 0
  %307 = vmatpush1.bf16.msra.mxu0 %v229
  %308 = vmatprep.subr.bf16.mxu0 0
  %309 = vmatpush1.bf16.msra.mxu0 %v230
  %310 = vmatprep.subr.bf16.mxu0 0
  %311 = vmatpush1.bf16.msra.mxu0 %v231
  %312 = vmatprep.subr.bf16.mxu0 0
  %313 = vmatpush1.bf16.msra.mxu0 %v232
  %314 = vmatprep.subr.bf16.mxu0 0
  %315 = vmatpush1.bf16.msra.mxu0 %v233
  %316 = vmatprep.mubr.bf16.mxu0 %v100
  %317 = vmatmul.mubr.bf16.gmra.mrb[0].mxu0 %v99
  %v318 = vpop.f32.mrb[0].mxu0
  %v319 = vadd.f32 %v80, %v318
  %v320 = vpop.f32.mrb[0].mxu0
  %v321 = vpop.f32.mrb[0].mxu0
  %v322 = vadd.f32 %v85, %v321
  %v323 = vpop.f32.mrb[0].mxu0
  %324 = vdwg.mxu0
  %325 = vmatprep.subr.bf16.mxu0 0
  %326 = vmatpush1.bf16.msra.mxu0 %v234
  %327 = vmatprep.subr.bf16.mxu0 0
  %328 = vmatpush1.bf16.msra.mxu0 %v235
  %329 = vmatprep.subr.bf16.mxu0 0
  %330 = vmatpush1.bf16.msra.mxu0 %v236
  %331 = vmatprep.subr.bf16.mxu0 0
  %332 = vmatpush1.bf16.msra.mxu0 %v237
  %333 = vmatprep.subr.bf16.mxu0 0
  %334 = vmatpush1.bf16.msra.mxu0 %v238
  %335 = vmatprep.subr.bf16.mxu0 0
  %336 = vmatpush1.bf16.msra.mxu0 %v239
  %337 = vmatprep.subr.bf16.mxu0 0
  %338 = vmatpush1.bf16.msra.mxu0 %v240
  %339 = vmatprep.subr.bf16.mxu0 0
  %340 = vmatpush1.bf16.msra.mxu0 %v241
  %341 = vmatprep.subr.bf16.mxu0 0
  %342 = vmatpush1.bf16.msra.mxu0 %v242
  %343 = vmatprep.subr.bf16.mxu0 0
  %344 = vmatpush1.bf16.msra.mxu0 %v243
  %345 = vmatprep.subr.bf16.mxu0 0
  %346 = vmatpush1.bf16.msra.mxu0 %v244
  %347 = vmatprep.subr.bf16.mxu0 0
  %348 = vmatpush1.bf16.msra.mxu0 %v282
  %349 = vmatprep.subr.bf16.mxu0 0
  %350 = vmatpush1.bf16.msra.mxu0 0
  %351 = vmatprep.subr.bf16.mxu0 0
  %352 = vmatpush1.bf16.msra.mxu0 0
  %353 = vmatprep.subr.bf16.mxu0 0
  %354 = vmatpush1.bf16.msra.mxu0 0
  %355 = vmatprep.subr.bf16.mxu0 0
  %356 = vmatpush1.bf16.msra.mxu0 0
  %357 = vmatprep.mubr.bf16.mxu0 %v275
  %358 = vmatmul.mubr.bf16.gmra.mrb[0].mxu0 %v101
  %v359 = vpop.f32.mrb[0].mxu0
  %v360 = vadd.f32 %v319, %v359
  %v361 = vpop.f32.mrb[0].mxu0
  %v362 = vpop.f32.mrb[0].mxu0
  %v363 = vadd.f32 %v322, %v362
  %v364 = vpop.f32.mrb[0].mxu0
  %365 = vdwg.mxu0
  %v366 = vmin.f32 %v360, 0.0
  %v367 = vmin.f32 %v363, 0.0
  %v368 = vmul.f32 %v366, 1.442695
  %v369 = vpow.pop %v368
  %v370 = vmul.f32 %v367, 1.442695
  %v371 = vpow.pop %v370
  %v372 = vsub.f32 %v369, 1.0
  %v373 = vsub.f32 %v371, 1.0
  %vm374 = vcmp.gt.f32.partialorder %v360, 0.0
  %vm375 = vcmp.gt.f32.partialorder %v363, 0.0
  %v376 = vsel %vm374, %v360, %v372
  %v377 = vsel %vm375, %v363, %v373
  %v378 = vpack.c.bf16 %v377, %v376
  %v380 = vunpack.c.l.b16 %v378
  %v381 = vunpack.c.h.b16 %v378
  %v382 = vpack.c.b16 %v380, %v380
  %v383 = vpack.c.b16 %v381, %v381
  %386 = vst [vmem:[%s3] sm:$0xf] %v382
  %387 = vst [vmem:[%s3 + $0x4] sm:$0xf] %v383
  // Predicated region
  $region14: #{network3_forward.10} parent=0 // pred_check
    _
  $region15: #{network3_forward.10} parent=0 // pred_check_branch
    %389 = sbr.rel (0) target = $region17
  $region16: #{network3_forward.10} parent=0 // pred_region
    _
  $region17: #{network3_forward.10} parent=0 // pred_fallthru
    _
  // Predicated region
  $region18: #{network3_forward.10} parent=0 // pred_check
    _
  $region19: #{network3_forward.10} parent=0 // pred_check_branch
    %391 = sbr.rel (0) target = $region21
  $region20: #{network3_forward.10} parent=0 // pred_region
    _
  $region21: #{network3_forward.10} parent=0 // pred_fallthru
    _

// kernel: network3_forward.11
$region0: #{network3_forward.11}
  #allocation0 [shape = 'u32[]', space=smem, size = 0x4, offset = 0x4, fixed_abs, tag = 'smem constant byte address 0x4 - core index']
  #allocation1 [shape = 'u32[144,128]{1,0:T(1,128)}', space=vmem, size = 0x12000, scoped, tag = 'internal scratch']
  #allocation2 [shape = 'f32[1,1]{1,0:T(1,128)S(1)}', space=vmem, size = 0x200, scoped, tag = 'scoped memory for network3_forward.11']
  %s0 = inlined_call_operand.vmem [shape: bf16[1,475], index: 0, kind: input, shape index: {}]
  %s1 = inlined_call_operand.<no memory space> [shape: f32[1,1], index: 1, kind: input, shape index: {}]
  %s2 = inlined_call_operand.vmem [shape: bf16[475,512], index: 2, kind: input, shape index: {}]
  %s3 = inlined_call_operand.vmem [shape: f32[1,512], index: 3, kind: output, shape index: {}]
  %s4 = sld [smem:[#allocation0]]
  $region22: #{network3_forward.11} parent=0
    _
  %s6 = ssub.s32 1, %s4
  %s7 = scalar_select 0, %s6, %s4
  %v8 = vstv %s1
  %9 = vst [vmem:[#allocation2] sm:$0x1] %v8
  // Predicated region
  $region2: #{network3_forward.11} parent=0 // pred_check
    _
  $region3: #{network3_forward.11} parent=0 // pred_check_branch
    %11 = sbr.rel (0) target = $region5
  $region4: #{network3_forward.11} parent=0 // pred_region
    _
  $region5: #{network3_forward.11} parent=0 // pred_fallthru
    _
  // Predicated region
  $region6: #{network3_forward.11} parent=0 // pred_check
    _
  $region7: #{network3_forward.11} parent=0 // pred_check_branch
    %13 = sbr.rel (0) target = $region9
  $region8: #{network3_forward.11} parent=0 // pred_region
    _
  $region9: #{network3_forward.11} parent=0 // pred_fallthru
    _
  // Predicated region
  $region10: #{network3_forward.11} parent=0 // pred_check
    _
  $region11: #{network3_forward.11} parent=0 // pred_check_branch
    %15 = sbr.rel (0) target = $region13
  $region12: #{network3_forward.11} parent=0 // pred_region
    _
  $region13: #{network3_forward.11} parent=0 // pred_fallthru
    _
  %v17 = vld [vmem:[%s0] sm:$0xf]
  %v18 = vld [vmem:[%s2] sm:$0xff]
  %v19 = vld [vmem:[%s2 + $0x8] sm:$0xff]
  %v20 = vld [vmem:[%s2 + $0x10] sm:$0xff]
  %v21 = vld [vmem:[%s2 + $0x18] sm:$0xff]
  %v22 = vld [vmem:[%s2 + $0x20] sm:$0xff]
  %v23 = vld [vmem:[%s2 + $0x28] sm:$0xff]
  %v24 = vld [vmem:[%s2 + $0x30] sm:$0xff]
  %v25 = vld [vmem:[%s2 + $0x38] sm:$0xff]
  %v26 = vld [vmem:[%s2 + $0x40] sm:$0xff]
  %v27 = vld [vmem:[%s2 + $0x48] sm:$0xff]
  %v28 = vld [vmem:[%s2 + $0x50] sm:$0xff]
  %v29 = vld [vmem:[%s2 + $0x58] sm:$0xff]
  %v30 = vld [vmem:[%s2 + $0x60] sm:$0xff]
  %v31 = vld [vmem:[%s2 + $0x68] sm:$0xff]
  %v32 = vld [vmem:[%s2 + $0x70] sm:$0xff]
  %v33 = vld [vmem:[%s2 + $0x78] sm:$0xff]
  %v34 = vld [vmem:[%s2 + $0x80] sm:$0xff]
  %v35 = vld [vmem:[%s2 + $0x88] sm:$0xff]
  %v36 = vld [vmem:[%s2 + $0x90] sm:$0xff]
  %v37 = vld [vmem:[%s2 + $0x98] sm:$0xff]
  %v38 = vld [vmem:[%s2 + $0xa0] sm:$0xff]
  %v39 = vld [vmem:[%s2 + $0xa8] sm:$0xff]
  %v40 = vld [vmem:[%s2 + $0xb0] sm:$0xff]
  %v41 = vld [vmem:[%s2 + $0xb8] sm:$0xff]
  %v42 = vld [vmem:[%s2 + $0xc0] sm:$0xff]
  %v43 = vld [vmem:[%s2 + $0xc8] sm:$0xff]
  %v44 = vld [vmem:[%s2 + $0xd0] sm:$0xff]
  %v45 = vld [vmem:[%s2 + $0xd8] sm:$0xff]
  %v46 = vld [vmem:[%s2 + $0xe0] sm:$0xff]
  %v47 = vld [vmem:[%s2 + $0xe8] sm:$0xff]
  %v48 = vld [vmem:[%s2 + $0xf0] sm:$0xff]
  %v49 = vld [vmem:[%s2 + $0xf8] sm:$0xff]
  %v50 = vld [vmem:[%s2 + $0x100] sm:$0xff]
  %v51 = vld [vmem:[%s2 + $0x108] sm:$0xff]
  %v52 = vld [vmem:[%s2 + $0x110] sm:$0xff]
  %v53 = vld [vmem:[%s2 + $0x118] sm:$0xff]
  %v54 = vld [vmem:[%s2 + $0x120] sm:$0xff]
  %v55 = vld [vmem:[%s2 + $0x128] sm:$0xff]
  %v56 = vld [vmem:[%s2 + $0x130] sm:$0xff]
  %v57 = vld [vmem:[%s2 + $0x138] sm:$0xff]
  %v58 = vld [vmem:[%s2 + $0x140] sm:$0xff]
  %v59 = vld [vmem:[%s2 + $0x148] sm:$0xff]
  %v60 = vld [vmem:[%s2 + $0x150] sm:$0xff]
  %v61 = vld [vmem:[%s2 + $0x158] sm:$0xff]
  %v62 = vld [vmem:[%s2 + $0x160] sm:$0xff]
  %v63 = vld [vmem:[%s2 + $0x168] sm:$0xff]
  %v64 = vld [vmem:[%s2 + $0x170] sm:$0xff]
  %v65 = vld [vmem:[%s2 + $0x178] sm:$0xff]
  %v66 = vld [vmem:[%s2 + $0x180] sm:$0xff]
  %v67 = vld [vmem:[%s2 + $0x188] sm:$0xff]
  %v68 = vld [vmem:[%s2 + $0x190] sm:$0xff]
  %v69 = vld [vmem:[%s2 + $0x198] sm:$0xff]
  %v70 = vld [vmem:[%s2 + $0x1a0] sm:$0xff]
  %v71 = vld [vmem:[%s2 + $0x1a8] sm:$0xff]
  %v72 = vld [vmem:[%s2 + $0x1b0] sm:$0xff]
  %v73 = vld [vmem:[%s2 + $0x1b8] sm:$0xff]
  %v74 = vld [vmem:[%s2 + $0x1c0] sm:$0xff]
  %v75 = vld [vmem:[%s2 + $0x1c8] sm:$0xff]
  %v76 = vld [vmem:[%s2 + $0x1d0] sm:$0xff]
  %v77 = vld [vmem:[%s2 + $0x1d8] sm:$0xff]
  %v78 = vld [vmem:[%s2 + $0x1e0] sm:$0xff]
  %v79 = vld [vmem:[%s2 + $0x1e8] sm:$0xff]
  %v80 = vld [vmem:[%s2 + $0x1f0] sm:$0xff]
  %v81 = vld [vmem:[%s2 + $0x1f8] sm:$0xff]
  %v82 = vld [vmem:[%s2 + $0x200] sm:$0xff]
  %v83 = vld [vmem:[%s2 + $0x208] sm:$0xff]
  %v84 = vld [vmem:[%s2 + $0x210] sm:$0xff]
  %v85 = vld [vmem:[%s2 + $0x218] sm:$0xff]
  %v86 = vld [vmem:[%s2 + $0x220] sm:$0xff]
  %v87 = vld [vmem:[%s2 + $0x228] sm:$0xff]
  %v88 = vld [vmem:[%s2 + $0x230] sm:$0xff]
  %v89 = vld [vmem:[%s2 + $0x238] sm:$0xff]
  %v90 = vld [vmem:[%s2 + $0x240] sm:$0xff]
  %v91 = vld [vmem:[%s2 + $0x248] sm:$0xff]
  %v92 = vld [vmem:[%s2 + $0x250] sm:$0xff]
  %v93 = vld [vmem:[%s2 + $0x258] sm:$0xff]
  %v94 = vld [vmem:[%s2 + $0x260] sm:$0xff]
  %v95 = vld [vmem:[%s2 + $0x268] sm:$0xff]
  %v96 = vld [vmem:[%s2 + $0x270] sm:$0xff]
  %v97 = vld [vmem:[%s2 + $0x278] sm:$0xff]
  %v98 = vld [vmem:[%s2 + $0x280] sm:$0xff]
  %v99 = vld [vmem:[%s2 + $0x288] sm:$0xff]
  %v100 = vld [vmem:[%s2 + $0x290] sm:$0xff]
  %v101 = vld [vmem:[%s2 + $0x298] sm:$0xff]
  %v102 = vld [vmem:[%s2 + $0x2a0] sm:$0xff]
  %v103 = vld [vmem:[%s2 + $0x2a8] sm:$0xff]
  %v104 = vld [vmem:[%s2 + $0x2b0] sm:$0xff]
  %v105 = vld [vmem:[%s2 + $0x2b8] sm:$0xff]
  %v106 = vld [vmem:[%s2 + $0x2c0] sm:$0xff]
  %v107 = vld [vmem:[%s2 + $0x2c8] sm:$0xff]
  %v108 = vld [vmem:[%s2 + $0x2d0] sm:$0xff]
  %v109 = vld [vmem:[%s2 + $0x2d8] sm:$0xff]
  %v110 = vld [vmem:[%s2 + $0x2e0] sm:$0xff]
  %v111 = vld [vmem:[%s2 + $0x2e8] sm:$0xff]
  %v112 = vld [vmem:[%s2 + $0x2f0] sm:$0xff]
  %v113 = vld [vmem:[%s2 + $0x2f8] sm:$0xff]
  %v114 = vld [vmem:[%s2 + $0x300] sm:$0xff]
  %v115 = vld [vmem:[%s2 + $0x308] sm:$0xff]
  %v116 = vld [vmem:[%s2 + $0x310] sm:$0xff]
  %v117 = vld [vmem:[%s2 + $0x318] sm:$0xff]
  %v118 = vld [vmem:[%s2 + $0x320] sm:$0xff]
  %v119 = vld [vmem:[%s2 + $0x328] sm:$0xff]
  %v120 = vld [vmem:[%s2 + $0x330] sm:$0xff]
  %v121 = vld [vmem:[%s2 + $0x338] sm:$0xff]
  %v122 = vld [vmem:[%s2 + $0x340] sm:$0xff]
  %v123 = vld [vmem:[%s2 + $0x348] sm:$0xff]
  %v124 = vld [vmem:[%s2 + $0x350] sm:$0xff]
  %v125 = vld [vmem:[%s2 + $0x358] sm:$0xff]
  %v126 = vld [vmem:[%s2 + $0x360] sm:$0xff]
  %v127 = vld [vmem:[%s2 + $0x368] sm:$0xff]
  %v128 = vld [vmem:[%s2 + $0x370] sm:$0xff]
  %v129 = vld [vmem:[%s2 + $0x378] sm:$0xff]
  %v130 = vld [vmem:[%s2 + $0x380] sm:$0xff]
  %v131 = vld [vmem:[%s2 + $0x388] sm:$0xff]
  %v132 = vld [vmem:[%s2 + $0x390] sm:$0xff]
  %v133 = vld [vmem:[%s2 + $0x398] sm:$0xff]
  %v134 = vld [vmem:[%s2 + $0x3a0] sm:$0xff]
  %v135 = vld [vmem:[%s2 + $0x3a8] sm:$0xff]
  %v136 = vld [vmem:[%s2 + $0x3b0] sm:$0x33]
  %v137 = vld [vmem:[%s2 + $0x3b8] sm:$0x33]
  %v138 = vld [vmem:[#allocation2] sm:$0x1]
  %140 = vset.pattern.permute.xlu0 0
  %141 = vperm.xlu0 %140, %v138
  %v142 = vpop.permute.xlu0 %141
  %v144 = vlaneseq
  %v145 = vshrl.u32 %v144, 7
  %v146 = vsub.s32 0, %v145
  %v147 = vrot.slane %v142, %v146
  %v150 = vunpack.c.l.s4 1966171168
  %v151 = vunpack.c.0.s8 %v150
  %v152 = vlaneseq
  %v153 = vshrl.u32 %v152, 7
  %v154 = vsub.s32 %v151, %v153
  %v155 = vrot.slane %v17, %v154
  %v156 = vcombine.high %v155, %v155
  %v158 = vunpack.c.l.s4 1966171168
  %v159 = vunpack.c.0.s8 %v158
  %v160 = vlaneseq
  %v161 = vshrl.u32 %v160, 7
  %v162 = vsub.s32 %v159, %v161
  %v163 = vrot.slane %v155, %v162
  %v165 = vunpack.c.l.s4 1966171168
  %v166 = vunpack.c.0.s8 %v165
  %v167 = vlaneseq
  %v168 = vshrl.u32 %v167, 7
  %v169 = vsub.s32 %v166, %v168
  %v170 = vrot.slane %v156, %v169
  %v171 = vcombine.high %v163, %v163
  %v172 = vcombine.high %v170, %v170
  %v296 = vunpack.c.l.b16 %v18
  %v297 = vunpack.c.h.b16 %v18
  %v298 = vunpack.c.l.b16 %v19
  %v299 = vunpack.c.h.b16 %v19
  %v300 = vunpack.c.l.b16 %v20
  %v301 = vunpack.c.h.b16 %v20
  %v302 = vunpack.c.l.b16 %v21
  %v303 = vunpack.c.h.b16 %v21
  %v304 = vunpack.c.l.b16 %v22
  %v305 = vunpack.c.h.b16 %v22
  %v306 = vunpack.c.l.b16 %v23
  %v307 = vunpack.c.h.b16 %v23
  %v308 = vunpack.c.l.b16 %v24
  %v309 = vunpack.c.h.b16 %v24
  %v310 = vunpack.c.l.b16 %v25
  %v311 = vunpack.c.h.b16 %v25
  %v312 = vunpack.c.l.b16 %v26
  %v313 = vunpack.c.h.b16 %v26
  %v314 = vunpack.c.l.b16 %v27
  %v315 = vunpack.c.h.b16 %v27
  %v316 = vunpack.c.l.b16 %v28
  %v317 = vunpack.c.h.b16 %v28
  %v318 = vunpack.c.l.b16 %v29
  %v319 = vunpack.c.h.b16 %v29
  %v320 = vunpack.c.l.b16 %v30
  %v321 = vunpack.c.h.b16 %v30
  %v322 = vunpack.c.l.b16 %v31
  %v323 = vunpack.c.h.b16 %v31
  %v324 = vunpack.c.l.b16 %v32
  %v325 = vunpack.c.h.b16 %v32
  %v326 = vunpack.c.l.b16 %v33
  %v327 = vunpack.c.h.b16 %v33
  %v328 = vunpack.c.l.b16 %v34
  %v329 = vunpack.c.h.b16 %v34
  %v330 = vunpack.c.l.b16 %v35
  %v331 = vunpack.c.h.b16 %v35
  %v332 = vunpack.c.l.b16 %v36
  %v333 = vunpack.c.h.b16 %v36
  %v334 = vunpack.c.l.b16 %v37
  %v335 = vunpack.c.h.b16 %v37
  %v336 = vunpack.c.l.b16 %v38
  %v337 = vunpack.c.h.b16 %v38
  %v338 = vunpack.c.l.b16 %v39
  %v339 = vunpack.c.h.b16 %v39
  %v340 = vunpack.c.l.b16 %v40
  %v341 = vunpack.c.h.b16 %v40
  %v342 = vunpack.c.l.b16 %v41
  %v343 = vunpack.c.h.b16 %v41
  %v344 = vunpack.c.l.b16 %v42
  %v345 = vunpack.c.h.b16 %v42
  %v346 = vunpack.c.l.b16 %v43
  %v347 = vunpack.c.h.b16 %v43
  %v348 = vunpack.c.l.b16 %v44
  %v349 = vunpack.c.h.b16 %v44
  %v350 = vunpack.c.l.b16 %v45
  %v351 = vunpack.c.h.b16 %v45
  %v352 = vunpack.c.l.b16 %v46
  %v353 = vunpack.c.h.b16 %v46
  %v354 = vunpack.c.l.b16 %v47
  %v355 = vunpack.c.h.b16 %v47
  %v356 = vunpack.c.l.b16 %v48
  %v357 = vunpack.c.h.b16 %v48
  %v358 = vunpack.c.l.b16 %v49
  %v359 = vunpack.c.h.b16 %v49
  %v360 = vunpack.c.l.b16 %v50
  %v361 = vunpack.c.h.b16 %v50
  %v362 = vunpack.c.l.b16 %v51
  %v363 = vunpack.c.h.b16 %v51
  %v364 = vunpack.c.l.b16 %v52
  %v365 = vunpack.c.h.b16 %v52
  %v366 = vunpack.c.l.b16 %v53
  %v367 = vunpack.c.h.b16 %v53
  %v368 = vunpack.c.l.b16 %v54
  %v369 = vunpack.c.h.b16 %v54
  %v370 = vunpack.c.l.b16 %v55
  %v371 = vunpack.c.h.b16 %v55
  %v372 = vunpack.c.l.b16 %v56
  %v373 = vunpack.c.h.b16 %v56
  %v374 = vunpack.c.l.b16 %v57
  %v375 = vunpack.c.h.b16 %v57
  %v376 = vunpack.c.l.b16 %v58
  %v377 = vunpack.c.h.b16 %v58
  %v378 = vunpack.c.l.b16 %v59
  %v379 = vunpack.c.h.b16 %v59
  %v380 = vunpack.c.l.b16 %v60
  %v381 = vunpack.c.h.b16 %v60
  %v382 = vunpack.c.l.b16 %v61
  %v383 = vunpack.c.h.b16 %v61
  %v384 = vunpack.c.l.b16 %v62
  %v385 = vunpack.c.h.b16 %v62
  %v386 = vunpack.c.l.b16 %v63
  %v387 = vunpack.c.h.b16 %v63
  %v388 = vunpack.c.l.b16 %v64
  %v389 = vunpack.c.h.b16 %v64
  %v390 = vunpack.c.l.b16 %v65
  %v391 = vunpack.c.h.b16 %v65
  %v392 = vunpack.c.l.b16 %v66
  %v393 = vunpack.c.h.b16 %v66
  %v394 = vunpack.c.l.b16 %v67
  %v395 = vunpack.c.h.b16 %v67
  %v396 = vunpack.c.l.b16 %v68
  %v397 = vunpack.c.h.b16 %v68
  %v398 = vunpack.c.l.b16 %v69
  %v399 = vunpack.c.h.b16 %v69
  %v400 = vunpack.c.l.b16 %v70
  %v401 = vunpack.c.h.b16 %v70
  %v402 = vunpack.c.l.b16 %v71
  %v403 = vunpack.c.h.b16 %v71
  %v404 = vunpack.c.l.b16 %v72
  %v405 = vunpack.c.h.b16 %v72
  %v406 = vunpack.c.l.b16 %v73
  %v407 = vunpack.c.h.b16 %v73
  %v408 = vunpack.c.l.b16 %v74
  %v409 = vunpack.c.h.b16 %v74
  %v410 = vunpack.c.l.b16 %v75
  %v411 = vunpack.c.h.b16 %v75
  %v412 = vunpack.c.l.b16 %v76
  %v413 = vunpack.c.h.b16 %v76
  %v414 = vunpack.c.l.b16 %v77
  %v415 = vunpack.c.h.b16 %v77
  %v416 = vunpack.c.l.b16 %v78
  %v417 = vunpack.c.h.b16 %v78
  %v418 = vunpack.c.l.b16 %v79
  %v419 = vunpack.c.h.b16 %v79
  %v420 = vunpack.c.l.b16 %v80
  %v421 = vunpack.c.h.b16 %v80
  %v422 = vunpack.c.l.b16 %v81
  %v423 = vunpack.c.h.b16 %v81
  %v424 = vunpack.c.l.b16 %v82
  %v425 = vunpack.c.h.b16 %v82
  %v426 = vunpack.c.l.b16 %v83
  %v427 = vunpack.c.h.b16 %v83
  %v428 = vunpack.c.l.b16 %v84
  %v429 = vunpack.c.h.b16 %v84
  %v430 = vunpack.c.l.b16 %v85
  %v431 = vunpack.c.h.b16 %v85
  %v432 = vunpack.c.l.b16 %v86
  %v433 = vunpack.c.h.b16 %v86
  %v434 = vunpack.c.l.b16 %v87
  %v435 = vunpack.c.h.b16 %v87
  %v436 = vunpack.c.l.b16 %v88
  %v437 = vunpack.c.h.b16 %v88
  %v438 = vunpack.c.l.b16 %v89
  %v439 = vunpack.c.h.b16 %v89
  %v440 = vunpack.c.l.b16 %v90
  %v441 = vunpack.c.h.b16 %v90
  %v442 = vunpack.c.l.b16 %v91
  %v443 = vunpack.c.h.b16 %v91
  %v444 = vunpack.c.l.b16 %v92
  %v445 = vunpack.c.h.b16 %v92
  %v446 = vunpack.c.l.b16 %v93
  %v447 = vunpack.c.h.b16 %v93
  %v448 = vunpack.c.l.b16 %v94
  %v449 = vunpack.c.h.b16 %v94
  %v450 = vunpack.c.l.b16 %v95
  %v451 = vunpack.c.h.b16 %v95
  %v452 = vunpack.c.l.b16 %v96
  %v453 = vunpack.c.h.b16 %v96
  %v454 = vunpack.c.l.b16 %v97
  %v455 = vunpack.c.h.b16 %v97
  %v456 = vunpack.c.l.b16 %v98
  %v457 = vunpack.c.h.b16 %v98
  %v458 = vunpack.c.l.b16 %v99
  %v459 = vunpack.c.h.b16 %v99
  %v460 = vunpack.c.l.b16 %v100
  %v461 = vunpack.c.h.b16 %v100
  %v462 = vunpack.c.l.b16 %v101
  %v463 = vunpack.c.h.b16 %v101
  %v464 = vunpack.c.l.b16 %v102
  %v465 = vunpack.c.h.b16 %v102
  %v466 = vunpack.c.l.b16 %v103
  %v467 = vunpack.c.h.b16 %v103
  %v468 = vunpack.c.l.b16 %v104
  %v469 = vunpack.c.h.b16 %v104
  %v470 = vunpack.c.l.b16 %v105
  %v471 = vunpack.c.h.b16 %v105
  %v472 = vunpack.c.l.b16 %v106
  %v473 = vunpack.c.h.b16 %v106
  %v474 = vunpack.c.l.b16 %v107
  %v475 = vunpack.c.h.b16 %v107
  %v476 = vunpack.c.l.b16 %v108
  %v477 = vunpack.c.h.b16 %v108
  %v478 = vunpack.c.l.b16 %v109
  %v479 = vunpack.c.h.b16 %v109
  %v480 = vunpack.c.l.b16 %v110
  %v481 = vunpack.c.h.b16 %v110
  %v482 = vunpack.c.l.b16 %v111
  %v483 = vunpack.c.h.b16 %v111
  %v484 = vunpack.c.l.b16 %v112
  %v485 = vunpack.c.h.b16 %v112
  %v486 = vunpack.c.l.b16 %v113
  %v487 = vunpack.c.h.b16 %v113
  %v488 = vunpack.c.l.b16 %v114
  %v489 = vunpack.c.h.b16 %v114
  %v490 = vunpack.c.l.b16 %v115
  %v491 = vunpack.c.h.b16 %v115
  %v492 = vunpack.c.l.b16 %v116
  %v493 = vunpack.c.h.b16 %v116
  %v494 = vunpack.c.l.b16 %v117
  %v495 = vunpack.c.h.b16 %v117
  %v496 = vunpack.c.l.b16 %v118
  %v497 = vunpack.c.h.b16 %v118
  %v498 = vunpack.c.l.b16 %v119
  %v499 = vunpack.c.h.b16 %v119
  %v500 = vunpack.c.l.b16 %v120
  %v501 = vunpack.c.h.b16 %v120
  %v502 = vunpack.c.l.b16 %v121
  %v503 = vunpack.c.h.b16 %v121
  %v504 = vunpack.c.l.b16 %v122
  %v505 = vunpack.c.h.b16 %v122
  %v506 = vunpack.c.l.b16 %v123
  %v507 = vunpack.c.h.b16 %v123
  %v508 = vunpack.c.l.b16 %v124
  %v509 = vunpack.c.h.b16 %v124
  %v510 = vunpack.c.l.b16 %v125
  %v511 = vunpack.c.h.b16 %v125
  %v512 = vunpack.c.l.b16 %v126
  %v513 = vunpack.c.h.b16 %v126
  %v514 = vunpack.c.l.b16 %v127
  %v515 = vunpack.c.h.b16 %v127
  %v516 = vunpack.c.l.b16 %v128
  %v517 = vunpack.c.h.b16 %v128
  %v518 = vunpack.c.l.b16 %v129
  %v519 = vunpack.c.h.b16 %v129
  %v520 = vunpack.c.l.b16 %v130
  %v521 = vunpack.c.h.b16 %v130
  %v522 = vunpack.c.l.b16 %v131
  %v523 = vunpack.c.h.b16 %v131
  %v524 = vunpack.c.l.b16 %v132
  %v525 = vunpack.c.h.b16 %v132
  %v526 = vunpack.c.l.b16 %v133
  %v527 = vunpack.c.h.b16 %v133
  %v528 = vunpack.c.l.b16 %v134
  %v529 = vunpack.c.h.b16 %v134
  %v530 = vunpack.c.l.b16 %v135
  %v531 = vunpack.c.h.b16 %v135
  %v532 = vunpack.c.l.b16 %v136
  %v533 = vunpack.c.h.b16 %v136
  %v534 = vunpack.c.l.b16 %v137
  %v535 = vunpack.c.h.b16 %v137
  %v536 = vpack.c.b16 %v300, %v296
  %v537 = vpack.c.b16 %v301, %v297
  %v538 = vpack.c.b16 %v302, %v298
  %v539 = vpack.c.b16 %v303, %v299
  %v540 = vpack.c.b16 %v308, %v304
  %v541 = vpack.c.b16 %v309, %v305
  %v542 = vpack.c.b16 %v310, %v306
  %v543 = vpack.c.b16 %v311, %v307
  %v544 = vpack.c.b16 %v316, %v312
  %v545 = vpack.c.b16 %v317, %v313
  %v546 = vpack.c.b16 %v318, %v314
  %v547 = vpack.c.b16 %v319, %v315
  %v548 = vpack.c.b16 %v324, %v320
  %v549 = vpack.c.b16 %v325, %v321
  %v550 = vpack.c.b16 %v326, %v322
  %v551 = vpack.c.b16 %v327, %v323
  %v552 = vpack.c.b16 %v332, %v328
  %v553 = vpack.c.b16 %v333, %v329
  %v554 = vpack.c.b16 %v334, %v330
  %v555 = vpack.c.b16 %v335, %v331
  %v556 = vpack.c.b16 %v340, %v336
  %v557 = vpack.c.b16 %v341, %v337
  %v558 = vpack.c.b16 %v342, %v338
  %v559 = vpack.c.b16 %v343, %v339
  %v560 = vpack.c.b16 %v348, %v344
  %v561 = vpack.c.b16 %v349, %v345
  %v562 = vpack.c.b16 %v350, %v346
  %v563 = vpack.c.b16 %v351, %v347
  %v564 = vpack.c.b16 %v356, %v352
  %v565 = vpack.c.b16 %v357, %v353
  %v566 = vpack.c.b16 %v358, %v354
  %v567 = vpack.c.b16 %v359, %v355
  %v568 = vpack.c.b16 %v364, %v360
  %v569 = vpack.c.b16 %v365, %v361
  %v570 = vpack.c.b16 %v366, %v362
  %v571 = vpack.c.b16 %v367, %v363
  %v572 = vpack.c.b16 %v372, %v368
  %v573 = vpack.c.b16 %v373, %v369
  %v574 = vpack.c.b16 %v374, %v370
  %v575 = vpack.c.b16 %v375, %v371
  %v576 = vpack.c.b16 %v380, %v376
  %v577 = vpack.c.b16 %v381, %v377
  %v578 = vpack.c.b16 %v382, %v378
  %v579 = vpack.c.b16 %v383, %v379
  %v580 = vpack.c.b16 %v388, %v384
  %v581 = vpack.c.b16 %v389, %v385
  %v582 = vpack.c.b16 %v390, %v386
  %v583 = vpack.c.b16 %v391, %v387
  %v584 = vpack.c.b16 %v396, %v392
  %v585 = vpack.c.b16 %v397, %v393
  %v586 = vpack.c.b16 %v398, %v394
  %v587 = vpack.c.b16 %v399, %v395
  %v588 = vpack.c.b16 %v404, %v400
  %v589 = vpack.c.b16 %v405, %v401
  %v590 = vpack.c.b16 %v406, %v402
  %v591 = vpack.c.b16 %v407, %v403
  %v592 = vpack.c.b16 %v412, %v408
  %v593 = vpack.c.b16 %v413, %v409
  %v594 = vpack.c.b16 %v414, %v410
  %v595 = vpack.c.b16 %v415, %v411
  %v596 = vpack.c.b16 %v420, %v416
  %v597 = vpack.c.b16 %v421, %v417
  %v598 = vpack.c.b16 %v422, %v418
  %v599 = vpack.c.b16 %v423, %v419
  %v600 = vpack.c.b16 %v428, %v424
  %v601 = vpack.c.b16 %v429, %v425
  %v602 = vpack.c.b16 %v430, %v426
  %v603 = vpack.c.b16 %v431, %v427
  %v604 = vpack.c.b16 %v436, %v432
  %v605 = vpack.c.b16 %v437, %v433
  %v606 = vpack.c.b16 %v438, %v434
  %v607 = vpack.c.b16 %v439, %v435
  %v608 = vpack.c.b16 %v444, %v440
  %v609 = vpack.c.b16 %v445, %v441
  %v610 = vpack.c.b16 %v446, %v442
  %v611 = vpack.c.b16 %v447, %v443
  %v612 = vpack.c.b16 %v452, %v448
  %v613 = vpack.c.b16 %v453, %v449
  %v614 = vpack.c.b16 %v454, %v450
  %v615 = vpack.c.b16 %v455, %v451
  %v616 = vpack.c.b16 %v460, %v456
  %v617 = vpack.c.b16 %v461, %v457
  %v618 = vpack.c.b16 %v462, %v458
  %v619 = vpack.c.b16 %v463, %v459
  %v620 = vpack.c.b16 %v468, %v464
  %v621 = vpack.c.b16 %v469, %v465
  %v622 = vpack.c.b16 %v470, %v466
  %v623 = vpack.c.b16 %v471, %v467
  %v624 = vpack.c.b16 %v476, %v472
  %v625 = vpack.c.b16 %v477, %v473
  %v626 = vpack.c.b16 %v478, %v474
  %v627 = vpack.c.b16 %v479, %v475
  %v628 = vpack.c.b16 %v484, %v480
  %v629 = vpack.c.b16 %v485, %v481
  %v630 = vpack.c.b16 %v486, %v482
  %v631 = vpack.c.b16 %v487, %v483
  %v632 = vpack.c.b16 %v492, %v488
  %v633 = vpack.c.b16 %v493, %v489
  %v634 = vpack.c.b16 %v494, %v490
  %v635 = vpack.c.b16 %v495, %v491
  %v636 = vpack.c.b16 %v500, %v496
  %v637 = vpack.c.b16 %v501, %v497
  %v638 = vpack.c.b16 %v502, %v498
  %v639 = vpack.c.b16 %v503, %v499
  %v640 = vpack.c.b16 %v508, %v504
  %v641 = vpack.c.b16 %v509, %v505
  %v642 = vpack.c.b16 %v510, %v506
  %v643 = vpack.c.b16 %v511, %v507
  %v644 = vpack.c.b16 %v516, %v512
  %v645 = vpack.c.b16 %v517, %v513
  %v646 = vpack.c.b16 %v518, %v514
  %v647 = vpack.c.b16 %v519, %v515
  %v648 = vpack.c.b16 %v524, %v520
  %v649 = vpack.c.b16 %v525, %v521
  %v650 = vpack.c.b16 %v526, %v522
  %v651 = vpack.c.b16 %v527, %v523
  %v652 = vpack.c.b16 %v532, %v528
  %v653 = vpack.c.b16 %v533, %v529
  %v654 = vpack.c.b16 %v534, %v530
  %v655 = vpack.c.b16 %v535, %v531
  %vm772 = vcmask 744448
  %v774 = vsel %vm772, %v172, 0
  %vm776 = vcmask 1044480
  %vm777 = vcmask 1045504
  %v778 = vsel %vm776, 4294967295, 65535
  %v779 = vsel %vm777, %v778, 0
  %v781 = vand.u32 %v652, %v779
  %v784 = vand.u32 %v653, %v779
  %v787 = vand.u32 %v654, %v779
  %v790 = vand.u32 %v655, %v779
  %792 = vmatprep.subr.bf16.mxu0 %v537
  %793 = vmatpush1.bf16.msra.mxu0 %v536
  %794 = vmatprep.subr.bf16.mxu0 %v541
  %795 = vmatpush1.bf16.msra.mxu0 %v540
  %796 = vmatprep.subr.bf16.mxu0 %v545
  %797 = vmatpush1.bf16.msra.mxu0 %v544
  %798 = vmatprep.subr.bf16.mxu0 %v549
  %799 = vmatpush1.bf16.msra.mxu0 %v548
  %800 = vmatprep.subr.bf16.mxu0 %v553
  %801 = vmatpush1.bf16.msra.mxu0 %v552
  %802 = vmatprep.subr.bf16.mxu0 %v557
  %803 = vmatpush1.bf16.msra.mxu0 %v556
  %804 = vmatprep.subr.bf16.mxu0 %v561
  %805 = vmatpush1.bf16.msra.mxu0 %v560
  %806 = vmatprep.subr.bf16.mxu0 %v565
  %807 = vmatpush1.bf16.msra.mxu0 %v564
  %808 = vmatprep.subr.bf16.mxu0 %v569
  %809 = vmatpush1.bf16.msra.mxu0 %v568
  %810 = vmatprep.subr.bf16.mxu0 %v573
  %811 = vmatpush1.bf16.msra.mxu0 %v572
  %812 = vmatprep.subr.bf16.mxu0 %v577
  %813 = vmatpush1.bf16.msra.mxu0 %v576
  %814 = vmatprep.subr.bf16.mxu0 %v581
  %815 = vmatpush1.bf16.msra.mxu0 %v580
  %816 = vmatprep.subr.bf16.mxu0 %v585
  %817 = vmatpush1.bf16.msra.mxu0 %v584
  %818 = vmatprep.subr.bf16.mxu0 %v589
  %819 = vmatpush1.bf16.msra.mxu0 %v588
  %820 = vmatprep.subr.bf16.mxu0 %v593
  %821 = vmatpush1.bf16.msra.mxu0 %v592
  %822 = vmatprep.subr.bf16.mxu0 %v597
  %823 = vmatpush1.bf16.msra.mxu0 %v596
  %824 = vmatprep.mubr.bf16.mxu0 %v170
  %825 = vmatmul.mubr.bf16.gmra.mrb[0].mxu0 %v163
  %v826 = vpop.f32.mrb[0].mxu0
  %v827 = vadd.f32 %v147, %v826
  %v828 = vpop.f32.mrb[0].mxu0
  %v829 = vadd.f32 %v147, %v828
  %v830 = vpop.f32.mrb[0].mxu0
  %v831 = vpop.f32.mrb[0].mxu0
  %832 = vdwg.mxu0
  %833 = vmatprep.subr.bf16.mxu0 %v601
  %834 = vmatpush1.bf16.msra.mxu0 %v600
  %835 = vmatprep.subr.bf16.mxu0 %v605
  %836 = vmatpush1.bf16.msra.mxu0 %v604
  %837 = vmatprep.subr.bf16.mxu0 %v609
  %838 = vmatpush1.bf16.msra.mxu0 %v608
  %839 = vmatprep.subr.bf16.mxu0 %v613
  %840 = vmatpush1.bf16.msra.mxu0 %v612
  %841 = vmatprep.subr.bf16.mxu0 %v617
  %842 = vmatpush1.bf16.msra.mxu0 %v616
  %843 = vmatprep.subr.bf16.mxu0 %v621
  %844 = vmatpush1.bf16.msra.mxu0 %v620
  %845 = vmatprep.subr.bf16.mxu0 %v625
  %846 = vmatpush1.bf16.msra.mxu0 %v624
  %847 = vmatprep.subr.bf16.mxu0 %v629
  %848 = vmatpush1.bf16.msra.mxu0 %v628
  %849 = vmatprep.subr.bf16.mxu0 %v633
  %850 = vmatpush1.bf16.msra.mxu0 %v632
  %851 = vmatprep.subr.bf16.mxu0 %v637
  %852 = vmatpush1.bf16.msra.mxu0 %v636
  %853 = vmatprep.subr.bf16.mxu0 %v641
  %854 = vmatpush1.bf16.msra.mxu0 %v640
  %855 = vmatprep.subr.bf16.mxu0 %v645
  %856 = vmatpush1.bf16.msra.mxu0 %v644
  %857 = vmatprep.subr.bf16.mxu0 %v649
  %858 = vmatpush1.bf16.msra.mxu0 %v648
  %859 = vmatprep.subr.bf16.mxu0 %v784
  %860 = vmatpush1.bf16.msra.mxu0 %v781
  %861 = vmatprep.subr.bf16.mxu0 0
  %862 = vmatpush1.bf16.msra.mxu0 0
  %863 = vmatprep.subr.bf16.mxu0 0
  %864 = vmatpush1.bf16.msra.mxu0 0
  %865 = vmatprep.mubr.bf16.mxu0 %v774
  %866 = vmatmul.mubr.bf16.gmra.mrb[0].mxu0 %v171
  %v867 = vpop.f32.mrb[0].mxu0
  %v868 = vadd.f32 %v827, %v867
  %v869 = vpop.f32.mrb[0].mxu0
  %v870 = vadd.f32 %v829, %v869
  %v871 = vpop.f32.mrb[0].mxu0
  %v872 = vpop.f32.mrb[0].mxu0
  %873 = vdwg.mxu0
  %874 = vmatprep.subr.bf16.mxu0 %v539
  %875 = vmatpush1.bf16.msra.mxu0 %v538
  %876 = vmatprep.subr.bf16.mxu0 %v543
  %877 = vmatpush1.bf16.msra.mxu0 %v542
  %878 = vmatprep.subr.bf16.mxu0 %v547
  %879 = vmatpush1.bf16.msra.mxu0 %v546
  %880 = vmatprep.subr.bf16.mxu0 %v551
  %881 = vmatpush1.bf16.msra.mxu0 %v550
  %882 = vmatprep.subr.bf16.mxu0 %v555
  %883 = vmatpush1.bf16.msra.mxu0 %v554
  %884 = vmatprep.subr.bf16.mxu0 %v559
  %885 = vmatpush1.bf16.msra.mxu0 %v558
  %886 = vmatprep.subr.bf16.mxu0 %v563
  %887 = vmatpush1.bf16.msra.mxu0 %v562
  %888 = vmatprep.subr.bf16.mxu0 %v567
  %889 = vmatpush1.bf16.msra.mxu0 %v566
  %890 = vmatprep.subr.bf16.mxu0 %v571
  %891 = vmatpush1.bf16.msra.mxu0 %v570
  %892 = vmatprep.subr.bf16.mxu0 %v575
  %893 = vmatpush1.bf16.msra.mxu0 %v574
  %894 = vmatprep.subr.bf16.mxu0 %v579
  %895 = vmatpush1.bf16.msra.mxu0 %v578
  %896 = vmatprep.subr.bf16.mxu0 %v583
  %897 = vmatpush1.bf16.msra.mxu0 %v582
  %898 = vmatprep.subr.bf16.mxu0 %v587
  %899 = vmatpush1.bf16.msra.mxu0 %v586
  %900 = vmatprep.subr.bf16.mxu0 %v591
  %901 = vmatpush1.bf16.msra.mxu0 %v590
  %902 = vmatprep.subr.bf16.mxu0 %v595
  %903 = vmatpush1.bf16.msra.mxu0 %v594
  %904 = vmatprep.subr.bf16.mxu0 %v599
  %905 = vmatpush1.bf16.msra.mxu0 %v598
  %906 = vmatprep.mubr.bf16.mxu0 %v170
  %907 = vmatmul.mubr.bf16.gmra.mrb[0].mxu0 %v163
  %v908 = vpop.f32.mrb[0].mxu0
  %v909 = vadd.f32 %v147, %v908
  %v910 = vpop.f32.mrb[0].mxu0
  %v911 = vadd.f32 %v147, %v910
  %v912 = vpop.f32.mrb[0].mxu0
  %v913 = vpop.f32.mrb[0].mxu0
  %914 = vdwg.mxu0
  %915 = vmatprep.subr.bf16.mxu0 %v603
  %916 = vmatpush1.bf16.msra.mxu0 %v602
  %917 = vmatprep.subr.bf16.mxu0 %v607
  %918 = vmatpush1.bf16.msra.mxu0 %v606
  %919 = vmatprep.subr.bf16.mxu0 %v611
  %920 = vmatpush1.bf16.msra.mxu0 %v610
  %921 = vmatprep.subr.bf16.mxu0 %v615
  %922 = vmatpush1.bf16.msra.mxu0 %v614
  %923 = vmatprep.subr.bf16.mxu0 %v619
  %924 = vmatpush1.bf16.msra.mxu0 %v618
  %925 = vmatprep.subr.bf16.mxu0 %v623
  %926 = vmatpush1.bf16.msra.mxu0 %v622
  %927 = vmatprep.subr.bf16.mxu0 %v627
  %928 = vmatpush1.bf16.msra.mxu0 %v626
  %929 = vmatprep.subr.bf16.mxu0 %v631
  %930 = vmatpush1.bf16.msra.mxu0 %v630
  %931 = vmatprep.subr.bf16.mxu0 %v635
  %932 = vmatpush1.bf16.msra.mxu0 %v634
  %933 = vmatprep.subr.bf16.mxu0 %v639
  %934 = vmatpush1.bf16.msra.mxu0 %v638
  %935 = vmatprep.subr.bf16.mxu0 %v643
  %936 = vmatpush1.bf16.msra.mxu0 %v642
  %937 = vmatprep.subr.bf16.mxu0 %v647
  %938 = vmatpush1.bf16.msra.mxu0 %v646
  %939 = vmatprep.subr.bf16.mxu0 %v651
  %940 = vmatpush1.bf16.msra.mxu0 %v650
  %941 = vmatprep.subr.bf16.mxu0 %v790
  %942 = vmatpush1.bf16.msra.mxu0 %v787
  %943 = vmatprep.subr.bf16.mxu0 0
  %944 = vmatpush1.bf16.msra.mxu0 0
  %945 = vmatprep.subr.bf16.mxu0 0
  %946 = vmatpush1.bf16.msra.mxu0 0
  %947 = vmatprep.mubr.bf16.mxu0 %v774
  %948 = vmatmul.mubr.bf16.gmra.mrb[0].mxu0 %v171
  %v949 = vpop.f32.mrb[0].mxu0
  %v950 = vadd.f32 %v909, %v949
  %v951 = vpop.f32.mrb[0].mxu0
  %v952 = vadd.f32 %v911, %v951
  %v953 = vpop.f32.mrb[0].mxu0
  %v954 = vpop.f32.mrb[0].mxu0
  %955 = vdwg.mxu0
  %v956 = vsub.f32 0.0, %v868
  %v957 = vsub.f32 0.0, %v870
  %v958 = vsub.f32 0.0, %v950
  %v959 = vsub.f32 0.0, %v952
  %v960 = vmul.f32 %v956, 1.442695
  %v961 = vpow.pop %v960
  %v962 = vmul.f32 %v957, 1.442695
  %v963 = vpow.pop %v962
  %v964 = vmul.f32 %v958, 1.442695
  %v965 = vpow.pop %v964
  %v966 = vmul.f32 %v959, 1.442695
  %v967 = vpow.pop %v966
  %v968 = vadd.f32 %v961, 1.0
  %v969 = vadd.f32 %v963, 1.0
  %v970 = vadd.f32 %v965, 1.0
  %v971 = vadd.f32 %v967, 1.0
  %v972 = vrcp.pop %v968
  %v973 = vrcp.pop %v969
  %v974 = vrcp.pop %v970
  %v975 = vrcp.pop %v971
  %v976 = vmul.f32 %v972, 255.0
  %v977 = vmul.f32 %v973, 255.0
  %v978 = vmul.f32 %v974, 255.0
  %v979 = vmul.f32 %v975, 255.0
  %v984 = vcombine.low %v976, %v977
  %v985 = vcombine.low %v978, %v979
  %v987 = vunpack.c.l.s4 1966171168
  %v988 = vunpack.c.0.s8 %v987
  %v989 = vlaneseq
  %v990 = vshrl.u32 %v989, 7
  %v991 = vsub.s32 %v988, %v990
  %v992 = vrot.slane %v984, %v991
  %v994 = vunpack.c.l.s4 1966171168
  %v995 = vunpack.c.0.s8 %v994
  %v996 = vlaneseq
  %v997 = vshrl.u32 %v996, 7
  %v998 = vsub.s32 %v995, %v997
  %v999 = vrot.slane %v985, %v998
  %v1000 = vcombine.low %v992, %v999
  %v1002 = vunpack.c.l.s4 1966171168
  %v1003 = vunpack.c.0.s8 %v1002
  %v1004 = vlaneseq
  %v1005 = vshrl.u32 %v1004, 7
  %v1006 = vsub.s32 %v1003, %v1005
  %v1007 = vrot.slane %v1000, %v1006
  %v1009 = vlaneseq
  %vm1010 = vcmp.ge.s32.totalorder %v1009, 0
  %vm1011 = vcmp.lt.s32.totalorder %v1009, 512
  %vm1012 = vmand %vm1010, %vm1011
  %1013 = vst.msk [vmem:[%s3] sm:$0xf] %vm1012, %v1007
  // Predicated region
  $region14: #{network3_forward.11} parent=0 // pred_check
    _
  $region15: #{network3_forward.11} parent=0 // pred_check_branch
    %1015 = sbr.rel (0) target = $region17
  $region16: #{network3_forward.11} parent=0 // pred_region
    _
  $region17: #{network3_forward.11} parent=0 // pred_fallthru
    _
  // Predicated region
  $region18: #{network3_forward.11} parent=0 // pred_check
    _
  $region19: #{network3_forward.11} parent=0 // pred_check_branch
    %1017 = sbr.rel (0) target = $region21
  $region20: #{network3_forward.11} parent=0 // pred_region
    _
  $region21: #{network3_forward.11} parent=0 // pred_fallthru
    _

</llo_original>
